<compile_context>
chip_gen: v5e
topology: v5e:2x2
jax: 0.10.0
libtpu: 0.0.40
codegen_flags: <defaults>
</compile_context>

<pallas_src>
import jax
import jax.numpy as jnp
from jax import lax
from jax.experimental import pallas as pl
from jax.experimental.pallas import tpu as pltpu


def _make_kernel(H, W, C, G):
    HW = H * W
    Cg = C // G
    inv_n = 1.0 / float(Cg * HW)
    EPS = 1e-5

    def kernel(y_ref, x_ref, masks_ref,
               lm1w_ref, lm1b_ref, w1_ref, b1_ref, g1_ref, be1_ref,
               lm2w_ref, lm2b_ref, w2_ref, b2_ref, g2_ref, be2_ref,
               wd_ref, bd_ref, magg_ref, mbc_ref, pool_ref,
               o_ref):
        x0 = x_ref[0]                         # (C, HW)      f32
        ycol = y_ref[0]                       # (classes, 1) f32
        magg = magg_ref[...]                  # (G, C) one-hot group membership
        mbc = mbc_ref[...]                    # (C, G)

        def film(lw_ref, lb_ref):
            gb = jnp.dot(lw_ref[...], ycol,
                         preferred_element_type=jnp.float32) + lb_ref[...]
            return gb[:C, :], gb[C:, :]       # gain, bias   (C, 1) each

        def im2col(x):
            # (Cin, HW) f32 -> (9*Cin, HW) bf16 patches for a 3x3 / pad-1 conv.
            # Tap (dy, dx): output column i takes input column i + dy*W + dx,
            # realized as a circular lane roll; the precomputed mask zeroes
            # positions whose source pixel falls outside the image.
            cols = []
            for k in range(9):
                dy, dx = k // 3 - 1, k % 3 - 1
                d = dy * W + dx
                if d == 0:
                    r = x
                else:
                    r = pltpu.roll(x, shift=(-d) % HW, axis=1) * masks_ref[k:k + 1, :]
                cols.append(r.astype(jnp.bfloat16))
            return jnp.concatenate(cols, axis=0)

        def conv3x3(x, w_ref, b_ref):
            # single MXU matmul: (Cout, 9*Cin) @ (9*Cin, HW) -> (Cout, HW)
            return jnp.dot(w_ref[...], im2col(x),
                           preferred_element_type=jnp.float32) + b_ref[...]

        def gn_film_swish(h, gamma, beta, gain, bias):
            # GroupNorm (biased var, eps=1e-5) + affine + FiLM fused into one
            # per-channel scale/shift, then swish.
            s = jnp.sum(h, axis=1, keepdims=True)          # (C, 1)
            sq = jnp.sum(h * h, axis=1, keepdims=True)     # (C, 1)
            gmean = jnp.dot(magg, s, preferred_element_type=jnp.float32) * inv_n
            gmsq = jnp.dot(magg, sq, preferred_element_type=jnp.float32) * inv_n
            ginv = lax.rsqrt(gmsq - gmean * gmean + EPS)   # (G, 1)
            mean_c = jnp.dot(mbc, gmean, preferred_element_type=jnp.float32)
            inv_c = jnp.dot(mbc, ginv, preferred_element_type=jnp.float32)
            a = gain * gamma * inv_c                       # (C, 1)
            b = gain * (beta - mean_c * inv_c * gamma) + bias
            z = h * a + b
            return z * jax.nn.sigmoid(z)

        gain1, bias1 = film(lm1w_ref, lm1b_ref)
        gain2, bias2 = film(lm2w_ref, lm2b_ref)

        h = conv3x3(x0, w1_ref, b1_ref)
        h = gn_film_swish(h, g1_ref[...], be1_ref[...], gain1, bias1)
        h = conv3x3(h, w2_ref, b2_ref)
        h = gn_film_swish(h, g2_ref[...], be2_ref[...], gain2, bias2)

        xo = x0 + h                                        # residual
        d = conv3x3(xo, wd_ref, bd_ref)                    # (2C, HW)

        # AvgPool2d(3, stride=2, pad=1, count_include_pad=True) + stride-2
        # subsample as one matmul with a constant pooling matrix, then swish.
        pool = jnp.dot(d, pool_ref[...], preferred_element_type=jnp.float32)
        o_ref[0] = pool * jax.nn.sigmoid(pool)

    return kernel


def cond_res_block(x_nchw, y, params):
    """Forward of CondResBlock(filters=C, classes=classes, defaults otherwise)."""
    B, C, H, W = x_nchw.shape
    classes = y.shape[1]
    G = int(C / 128 * 32) if C <= 128 else 32     # GroupNorm group count
    assert C % G == 0
    HW = H * W
    H2 = (H - 1) // 2 + 1
    W2 = (W - 1) // 2 + 1
    HW2 = H2 * W2

    x = x_nchw.reshape(B, C, HW).astype(jnp.float32)      # (B, C, HW), no transpose
    ycol = y.astype(jnp.float32)[:, :, None]              # (B, classes, 1)

    # 9 tap-validity masks (zero padding of the 3x3 convs) on the flat HW axis.
    hh = jnp.arange(H)[:, None]
    ww = jnp.arange(W)[None, :]
    mask_list = []
    for dy in (-1, 0, 1):
        for dx in (-1, 0, 1):
            m = ((hh + dy >= 0) & (hh + dy < H) &
                 (ww + dx >= 0) & (ww + dx < W))
            mask_list.append(m.reshape(HW))
    masks = jnp.stack(mask_list).astype(jnp.float32)      # (9, HW)

    # AvgPool2d(3, stride=2, pad=1, count_include_pad=True) as one matmul.
    Ah = (jnp.abs(jnp.arange(H)[:, None] - 2 * jnp.arange(H2)[None, :]) <= 1)
    Aw = (jnp.abs(jnp.arange(W)[:, None] - 2 * jnp.arange(W2)[None, :]) <= 1)
    apool = (jnp.einsum("hi,wj->hwij", Ah.astype(jnp.float32),
                        Aw.astype(jnp.float32)).reshape(HW, HW2) / 9.0)

    # Group-membership matrices for the in-kernel GroupNorm.
    Cg = C // G
    magg = (jnp.arange(G)[:, None] ==
            (jnp.arange(C)[None, :] // Cg)).astype(jnp.float32)   # (G, C)
    mbc = magg.T                                                   # (C, G)

    def conv_flat(w):     # torch (Cout, Cin, 3, 3) -> im2col (Cout, 9*Cin) bf16
        co, ci = w.shape[0], w.shape[1]
        return jnp.transpose(w, (0, 2, 3, 1)).reshape(co, 9 * ci).astype(jnp.bfloat16)

    def col(v):
        return v.reshape(-1, 1).astype(jnp.float32)

    weight_args = (
        params["lm1_w"].astype(jnp.float32), col(params["lm1_b"]),
        conv_flat(params["w1"]), col(params["b1"]),
        col(params["gn1_g"]), col(params["gn1_b"]),
        params["lm2_w"].astype(jnp.float32), col(params["lm2_b"]),
        conv_flat(params["w2"]), col(params["b2"]),
        col(params["gn2_g"]), col(params["gn2_b"]),
        conv_flat(params["wd"]), col(params["bd"]),
        magg, mbc, apool,
    )

    def full_spec(a):
        nd = a.ndim
        return pl.BlockSpec(a.shape, lambda b, _nd=nd: (0,) * _nd)

    in_specs = [
        pl.BlockSpec((1, classes, 1), lambda b: (b, 0, 0)),        # y column
        pl.BlockSpec((1, C, HW), lambda b: (b, 0, 0)),             # x in (C, HW)
        full_spec(masks),
    ] + [full_spec(a) for a in weight_args]

    out_spec = pl.BlockSpec((1, 2 * C, HW2), lambda b: (b, 0, 0))

    kernel = _make_kernel(H, W, C, G)

    out = pl.pallas_call(
        kernel,
        out_shape=jax.ShapeDtypeStruct((B, 2 * C, HW2), jnp.float32),
        grid=(B,),
        in_specs=in_specs,
        out_specs=out_spec,
        compiler_params=pltpu.CompilerParams(
            dimension_semantics=("parallel",)),
    )(ycol, x, masks, *weight_args)

    return out.reshape(B, 2 * C, H2, W2)                  # back to NCHW, free


def init_params(key, C, classes):
    ks = jax.random.split(key, 12)

    def conv_w(k, cin, cout):                              # torch conv layout
        return jax.random.normal(k, (cout, cin, 3, 3), jnp.float32) / (3.0 * cin ** 0.5)

    p = {}
    p["w1"] = conv_w(ks[0], C, C)
    p["b1"] = 0.1 * jax.random.normal(ks[1], (C,), jnp.float32)
    p["w2"] = conv_w(ks[2], C, C)
    p["b2"] = 0.1 * jax.random.normal(ks[3], (C,), jnp.float32)
    p["wd"] = conv_w(ks[4], C, 2 * C)
    p["bd"] = 0.1 * jax.random.normal(ks[5], (2 * C,), jnp.float32)
    p["gn1_g"] = 1.0 + 0.1 * jax.random.normal(ks[6], (C,), jnp.float32)
    p["gn1_b"] = 0.1 * jax.random.normal(ks[7], (C,), jnp.float32)
    p["gn2_g"] = 1.0 + 0.1 * jax.random.normal(ks[8], (C,), jnp.float32)
    p["gn2_b"] = 0.1 * jax.random.normal(ks[9], (C,), jnp.float32)
    p["lm1_w"] = jax.random.normal(ks[10], (2 * C, classes), jnp.float32) / classes ** 0.5
    p["lm1_b"] = 0.1 * jnp.ones((2 * C,), jnp.float32)
    p["lm2_w"] = jax.random.normal(ks[11], (2 * C, classes), jnp.float32) / classes ** 0.5
    p["lm2_b"] = -0.1 * jnp.ones((2 * C,), jnp.float32)
    return p


if __name__ == "__main__":
    # small shapes consistent with the module: filters=32, classes=64, 16x16 images
    B, C, H, W, CLASSES = 2, 32, 16, 16, 64
    key = jax.random.PRNGKey(0)
    kx, ky, kp = jax.random.split(key, 3)
    x = jax.random.normal(kx, (B, C, H, W), jnp.float32)   # NCHW, like PyTorch
    y = jax.random.normal(ky, (B, CLASSES), jnp.float32)
    params = init_params(kp, C, CLASSES)

    out = cond_res_block(x, y, params)
    out = jax.block_until_ready(out)
    assert out.shape == (B, 2 * C, H // 2, W // 2), out.shape
    # TODO(synk): self.dropout / self.relu exist in __init__ but are unused in forward.
    print("KERNEL_OK")
</pallas_src>

<mosaic_0001>
module attributes {stable_mosaic.version = 11 : i64} {
  func.func @kernel(%arg0: i32, %arg1: memref<1x64x1xf32, #tpu.memory_space<vmem>>, %arg2: memref<1x32x256xf32, #tpu.memory_space<vmem>>, %arg3: memref<9x256xf32, #tpu.memory_space<vmem>>, %arg4: memref<64x64xf32, #tpu.memory_space<vmem>>, %arg5: memref<64x1xf32, #tpu.memory_space<vmem>>, %arg6: memref<32x288xbf16, #tpu.memory_space<vmem>>, %arg7: memref<32x1xf32, #tpu.memory_space<vmem>>, %arg8: memref<32x1xf32, #tpu.memory_space<vmem>>, %arg9: memref<32x1xf32, #tpu.memory_space<vmem>>, %arg10: memref<64x64xf32, #tpu.memory_space<vmem>>, %arg11: memref<64x1xf32, #tpu.memory_space<vmem>>, %arg12: memref<32x288xbf16, #tpu.memory_space<vmem>>, %arg13: memref<32x1xf32, #tpu.memory_space<vmem>>, %arg14: memref<32x1xf32, #tpu.memory_space<vmem>>, %arg15: memref<32x1xf32, #tpu.memory_space<vmem>>, %arg16: memref<64x288xbf16, #tpu.memory_space<vmem>>, %arg17: memref<64x1xf32, #tpu.memory_space<vmem>>, %arg18: memref<8x32xf32, #tpu.memory_space<vmem>>, %arg19: memref<32x8xf32, #tpu.memory_space<vmem>>, %arg20: memref<256x64xf32, #tpu.memory_space<vmem>>, %arg21: memref<1x64x64xf32, #tpu.memory_space<vmem>>) attributes {dimension_semantics = [#tpu.dimension_semantics<parallel>], iteration_bounds = array<i64: 2>, scalar_prefetch = 0 : i64, scratch_operands = 0 : i64, tpu.core_type = #tpu.core_type<tc>, window_params = [{transform_indices = @transform_0, window_bounds = array<i64: 1, 64, 1>}, {transform_indices = @transform_1, window_bounds = array<i64: 1, 32, 256>}, {pipeline_mode = #tpu.pipeline_mode<synchronous>, transform_indices = @transform_2, window_bounds = array<i64: 9, 256>}, {pipeline_mode = #tpu.pipeline_mode<synchronous>, transform_indices = @transform_3, window_bounds = array<i64: 64, 64>}, {pipeline_mode = #tpu.pipeline_mode<synchronous>, transform_indices = @transform_4, window_bounds = array<i64: 64, 1>}, {pipeline_mode = #tpu.pipeline_mode<synchronous>, transform_indices = @transform_5, window_bounds = array<i64: 32, 288>}, {pipeline_mode = #tpu.pipeline_mode<synchronous>, transform_indices = @transform_6, window_bounds = array<i64: 32, 1>}, {pipeline_mode = #tpu.pipeline_mode<synchronous>, transform_indices = @transform_7, window_bounds = array<i64: 32, 1>}, {pipeline_mode = #tpu.pipeline_mode<synchronous>, transform_indices = @transform_8, window_bounds = array<i64: 32, 1>}, {pipeline_mode = #tpu.pipeline_mode<synchronous>, transform_indices = @transform_9, window_bounds = array<i64: 64, 64>}, {pipeline_mode = #tpu.pipeline_mode<synchronous>, transform_indices = @transform_10, window_bounds = array<i64: 64, 1>}, {pipeline_mode = #tpu.pipeline_mode<synchronous>, transform_indices = @transform_11, window_bounds = array<i64: 32, 288>}, {pipeline_mode = #tpu.pipeline_mode<synchronous>, transform_indices = @transform_12, window_bounds = array<i64: 32, 1>}, {pipeline_mode = #tpu.pipeline_mode<synchronous>, transform_indices = @transform_13, window_bounds = array<i64: 32, 1>}, {pipeline_mode = #tpu.pipeline_mode<synchronous>, transform_indices = @transform_14, window_bounds = array<i64: 32, 1>}, {pipeline_mode = #tpu.pipeline_mode<synchronous>, transform_indices = @transform_15, window_bounds = array<i64: 64, 288>}, {pipeline_mode = #tpu.pipeline_mode<synchronous>, transform_indices = @transform_16, window_bounds = array<i64: 64, 1>}, {pipeline_mode = #tpu.pipeline_mode<synchronous>, transform_indices = @transform_17, window_bounds = array<i64: 8, 32>}, {pipeline_mode = #tpu.pipeline_mode<synchronous>, transform_indices = @transform_18, window_bounds = array<i64: 32, 8>}, {pipeline_mode = #tpu.pipeline_mode<synchronous>, transform_indices = @transform_19, window_bounds = array<i64: 256, 64>}, {transform_indices = @transform_20, window_bounds = array<i64: 1, 64, 64>}]} {
    %c0 = arith.constant 0 : index
    %c0_0 = arith.constant 0 : index
    %c0_1 = arith.constant 0 : index
    %0 = vector.load %arg2[%c0, %c0_0, %c0_1] : memref<1x32x256xf32, #tpu.memory_space<vmem>>, vector<1x32x256xf32>
    %1 = vector.shape_cast %0 : vector<1x32x256xf32> to vector<32x256xf32>
    %c0_2 = arith.constant 0 : index
    %c0_3 = arith.constant 0 : index
    %c0_4 = arith.constant 0 : index
    %2 = vector.load %arg1[%c0_2, %c0_3, %c0_4] : memref<1x64x1xf32, #tpu.memory_space<vmem>>, vector<1x64x1xf32>
    %3 = vector.shape_cast %2 : vector<1x64x1xf32> to vector<64x1xf32>
    %c0_5 = arith.constant 0 : index
    %c0_6 = arith.constant 0 : index
    %4 = vector.load %arg18[%c0_5, %c0_6] : memref<8x32xf32, #tpu.memory_space<vmem>>, vector<8x32xf32>
    %c0_7 = arith.constant 0 : index
    %c0_8 = arith.constant 0 : index
    %5 = vector.load %arg19[%c0_7, %c0_8] : memref<32x8xf32, #tpu.memory_space<vmem>>, vector<32x8xf32>
    %c0_9 = arith.constant 0 : index
    %c0_10 = arith.constant 0 : index
    %6 = vector.load %arg4[%c0_9, %c0_10] : memref<64x64xf32, #tpu.memory_space<vmem>>, vector<64x64xf32>
    %cst = arith.constant dense<0.000000e+00> : vector<64x1xf32>
    %7 = tpu.matmul %6, %3, %cst {dimension_numbers = #tpu.dot_dimension_numbers<[1], [0], [0], [1], [0, 0, 1, 1], [], []>} : vector<64x64xf32>, vector<64x1xf32>, vector<64x1xf32> -> vector<64x1xf32>
    %c0_11 = arith.constant 0 : index
    %c0_12 = arith.constant 0 : index
    %8 = vector.load %arg5[%c0_11, %c0_12] : memref<64x1xf32, #tpu.memory_space<vmem>>, vector<64x1xf32>
    %9 = arith.addf %7, %8 : vector<64x1xf32>
    %10 = vector.extract_strided_slice %9 {offsets = [0, 0], sizes = [32, 1], strides = [1, 1]} : vector<64x1xf32> to vector<32x1xf32>
    %11 = vector.extract_strided_slice %9 {offsets = [32, 0], sizes = [32, 1], strides = [1, 1]} : vector<64x1xf32> to vector<32x1xf32>
    %c0_13 = arith.constant 0 : index
    %c0_14 = arith.constant 0 : index
    %12 = vector.load %arg10[%c0_13, %c0_14] : memref<64x64xf32, #tpu.memory_space<vmem>>, vector<64x64xf32>
    %cst_15 = arith.constant dense<0.000000e+00> : vector<64x1xf32>
    %13 = tpu.matmul %12, %3, %cst_15 {dimension_numbers = #tpu.dot_dimension_numbers<[1], [0], [0], [1], [0, 0, 1, 1], [], []>} : vector<64x64xf32>, vector<64x1xf32>, vector<64x1xf32> -> vector<64x1xf32>
    %c0_16 = arith.constant 0 : index
    %c0_17 = arith.constant 0 : index
    %14 = vector.load %arg11[%c0_16, %c0_17] : memref<64x1xf32, #tpu.memory_space<vmem>>, vector<64x1xf32>
    %15 = arith.addf %13, %14 : vector<64x1xf32>
    %16 = vector.extract_strided_slice %15 {offsets = [0, 0], sizes = [32, 1], strides = [1, 1]} : vector<64x1xf32> to vector<32x1xf32>
    %17 = vector.extract_strided_slice %15 {offsets = [32, 0], sizes = [32, 1], strides = [1, 1]} : vector<64x1xf32> to vector<32x1xf32>
    %c0_18 = arith.constant 0 : index
    %c0_19 = arith.constant 0 : index
    %18 = vector.load %arg6[%c0_18, %c0_19] : memref<32x288xbf16, #tpu.memory_space<vmem>>, vector<32x288xbf16>
    %c17_i32 = arith.constant 17 : i32
    %19 = tpu.dynamic_rotate %1 by %c17_i32 dim 1 : vector<32x256xf32>, i32 -> vector<32x256xf32>
    %c0_20 = arith.constant 0 : index
    %c0_21 = arith.constant 0 : index
    %20 = vector.load %arg3[%c0_20, %c0_21] : memref<9x256xf32, #tpu.memory_space<vmem>>, vector<1x256xf32>
    %21 = vector.broadcast %20 : vector<1x256xf32> to vector<32x256xf32>
    %22 = arith.mulf %19, %21 : vector<32x256xf32>
    %23 = arith.truncf %22 : vector<32x256xf32> to vector<32x256xbf16>
    %c16_i32 = arith.constant 16 : i32
    %24 = tpu.dynamic_rotate %1 by %c16_i32 dim 1 : vector<32x256xf32>, i32 -> vector<32x256xf32>
    %c1 = arith.constant 1 : index
    %c0_22 = arith.constant 0 : index
    %25 = vector.load %arg3[%c1, %c0_22] : memref<9x256xf32, #tpu.memory_space<vmem>>, vector<1x256xf32>
    %26 = vector.broadcast %25 : vector<1x256xf32> to vector<32x256xf32>
    %27 = arith.mulf %24, %26 : vector<32x256xf32>
    %28 = arith.truncf %27 : vector<32x256xf32> to vector<32x256xbf16>
    %c15_i32 = arith.constant 15 : i32
    %29 = tpu.dynamic_rotate %1 by %c15_i32 dim 1 : vector<32x256xf32>, i32 -> vector<32x256xf32>
    %c2 = arith.constant 2 : index
    %c0_23 = arith.constant 0 : index
    %30 = vector.load %arg3[%c2, %c0_23] : memref<9x256xf32, #tpu.memory_space<vmem>>, vector<1x256xf32>
    %31 = vector.broadcast %30 : vector<1x256xf32> to vector<32x256xf32>
    %32 = arith.mulf %29, %31 : vector<32x256xf32>
    %33 = arith.truncf %32 : vector<32x256xf32> to vector<32x256xbf16>
    %c1_i32 = arith.constant 1 : i32
    %34 = tpu.dynamic_rotate %1 by %c1_i32 dim 1 : vector<32x256xf32>, i32 -> vector<32x256xf32>
    %c3 = arith.constant 3 : index
    %c0_24 = arith.constant 0 : index
    %35 = vector.load %arg3[%c3, %c0_24] : memref<9x256xf32, #tpu.memory_space<vmem>>, vector<1x256xf32>
    %36 = vector.broadcast %35 : vector<1x256xf32> to vector<32x256xf32>
    %37 = arith.mulf %34, %36 : vector<32x256xf32>
    %38 = arith.truncf %37 : vector<32x256xf32> to vector<32x256xbf16>
    %39 = arith.truncf %1 : vector<32x256xf32> to vector<32x256xbf16>
    %c255_i32 = arith.constant 255 : i32
    %40 = tpu.dynamic_rotate %1 by %c255_i32 dim 1 : vector<32x256xf32>, i32 -> vector<32x256xf32>
    %c5 = arith.constant 5 : index
    %c0_25 = arith.constant 0 : index
    %41 = vector.load %arg3[%c5, %c0_25] : memref<9x256xf32, #tpu.memory_space<vmem>>, vector<1x256xf32>
    %42 = vector.broadcast %41 : vector<1x256xf32> to vector<32x256xf32>
    %43 = arith.mulf %40, %42 : vector<32x256xf32>
    %44 = arith.truncf %43 : vector<32x256xf32> to vector<32x256xbf16>
    %c241_i32 = arith.constant 241 : i32
    %45 = tpu.dynamic_rotate %1 by %c241_i32 dim 1 : vector<32x256xf32>, i32 -> vector<32x256xf32>
    %c6 = arith.constant 6 : index
    %c0_26 = arith.constant 0 : index
    %46 = vector.load %arg3[%c6, %c0_26] : memref<9x256xf32, #tpu.memory_space<vmem>>, vector<1x256xf32>
    %47 = vector.broadcast %46 : vector<1x256xf32> to vector<32x256xf32>
    %48 = arith.mulf %45, %47 : vector<32x256xf32>
    %49 = arith.truncf %48 : vector<32x256xf32> to vector<32x256xbf16>
    %c240_i32 = arith.constant 240 : i32
    %50 = tpu.dynamic_rotate %1 by %c240_i32 dim 1 : vector<32x256xf32>, i32 -> vector<32x256xf32>
    %c7 = arith.constant 7 : index
    %c0_27 = arith.constant 0 : index
    %51 = vector.load %arg3[%c7, %c0_27] : memref<9x256xf32, #tpu.memory_space<vmem>>, vector<1x256xf32>
    %52 = vector.broadcast %51 : vector<1x256xf32> to vector<32x256xf32>
    %53 = arith.mulf %50, %52 : vector<32x256xf32>
    %54 = arith.truncf %53 : vector<32x256xf32> to vector<32x256xbf16>
    %c239_i32 = arith.constant 239 : i32
    %55 = tpu.dynamic_rotate %1 by %c239_i32 dim 1 : vector<32x256xf32>, i32 -> vector<32x256xf32>
    %c8 = arith.constant 8 : index
    %c0_28 = arith.constant 0 : index
    %56 = vector.load %arg3[%c8, %c0_28] : memref<9x256xf32, #tpu.memory_space<vmem>>, vector<1x256xf32>
    %57 = vector.broadcast %56 : vector<1x256xf32> to vector<32x256xf32>
    %58 = arith.mulf %55, %57 : vector<32x256xf32>
    %59 = arith.truncf %58 : vector<32x256xf32> to vector<32x256xbf16>
    %60 = tpu.concatenate %23, %28, %33, %38, %39, %44, %49, %54, %59 in 0 : vector<32x256xbf16>, vector<32x256xbf16>, vector<32x256xbf16>, vector<32x256xbf16>, vector<32x256xbf16>, vector<32x256xbf16>, vector<32x256xbf16>, vector<32x256xbf16>, vector<32x256xbf16> -> vector<288x256xbf16>
    %cst_29 = arith.constant dense<0.000000e+00> : vector<32x256xf32>
    %61 = tpu.matmul %18, %60, %cst_29 {dimension_numbers = #tpu.dot_dimension_numbers<[1], [0], [0], [1], [0, 0, 1, 1], [], []>} : vector<32x288xbf16>, vector<288x256xbf16>, vector<32x256xf32> -> vector<32x256xf32>
    %c0_30 = arith.constant 0 : index
    %c0_31 = arith.constant 0 : index
    %62 = vector.load %arg7[%c0_30, %c0_31] : memref<32x1xf32, #tpu.memory_space<vmem>>, vector<32x1xf32>
    %63 = vector.broadcast %62 : vector<32x1xf32> to vector<32x256xf32>
    %64 = arith.addf %61, %63 : vector<32x256xf32>
    %c0_32 = arith.constant 0 : index
    %c0_33 = arith.constant 0 : index
    %65 = vector.load %arg8[%c0_32, %c0_33] : memref<32x1xf32, #tpu.memory_space<vmem>>, vector<32x1xf32>
    %c0_34 = arith.constant 0 : index
    %c0_35 = arith.constant 0 : index
    %66 = vector.load %arg9[%c0_34, %c0_35] : memref<32x1xf32, #tpu.memory_space<vmem>>, vector<32x1xf32>
    %cst_36 = arith.constant dense<0.000000e+00> : vector<32xf32>
    %67 = vector.multi_reduction <add>, %64, %cst_36 [1] : vector<32x256xf32> to vector<32xf32>
    %68 = vector.shape_cast %67 : vector<32xf32> to vector<32x1xf32>
    %69 = arith.mulf %64, %64 : vector<32x256xf32>
    %cst_37 = arith.constant dense<0.000000e+00> : vector<32xf32>
    %70 = vector.multi_reduction <add>, %69, %cst_37 [1] : vector<32x256xf32> to vector<32xf32>
    %71 = vector.shape_cast %70 : vector<32xf32> to vector<32x1xf32>
    %cst_38 = arith.constant dense<0.000000e+00> : vector<8x1xf32>
    %72 = tpu.matmul %4, %68, %cst_38 {dimension_numbers = #tpu.dot_dimension_numbers<[1], [0], [0], [1], [0, 0, 1, 1], [], []>} : vector<8x32xf32>, vector<32x1xf32>, vector<8x1xf32> -> vector<8x1xf32>
    %cst_39 = arith.constant 9.765625E-4 : f32
    %73 = vector.broadcast %cst_39 : f32 to vector<8x1xf32>
    %74 = arith.mulf %72, %73 : vector<8x1xf32>
    %cst_40 = arith.constant dense<0.000000e+00> : vector<8x1xf32>
    %75 = tpu.matmul %4, %71, %cst_40 {dimension_numbers = #tpu.dot_dimension_numbers<[1], [0], [0], [1], [0, 0, 1, 1], [], []>} : vector<8x32xf32>, vector<32x1xf32>, vector<8x1xf32> -> vector<8x1xf32>
    %cst_41 = arith.constant 9.765625E-4 : f32
    %76 = vector.broadcast %cst_41 : f32 to vector<8x1xf32>
    %77 = arith.mulf %75, %76 : vector<8x1xf32>
    %78 = arith.mulf %74, %74 : vector<8x1xf32>
    %79 = arith.subf %77, %78 : vector<8x1xf32>
    %cst_42 = arith.constant 9.99999974E-6 : f32
    %80 = vector.broadcast %cst_42 : f32 to vector<8x1xf32>
    %81 = arith.addf %79, %80 : vector<8x1xf32>
    %82 = math.rsqrt %81 : vector<8x1xf32>
    %cst_43 = arith.constant dense<0.000000e+00> : vector<32x1xf32>
    %83 = tpu.matmul %5, %74, %cst_43 {dimension_numbers = #tpu.dot_dimension_numbers<[1], [0], [0], [1], [0, 0, 1, 1], [], []>} : vector<32x8xf32>, vector<8x1xf32>, vector<32x1xf32> -> vector<32x1xf32>
    %cst_44 = arith.constant dense<0.000000e+00> : vector<32x1xf32>
    %84 = tpu.matmul %5, %82, %cst_44 {dimension_numbers = #tpu.dot_dimension_numbers<[1], [0], [0], [1], [0, 0, 1, 1], [], []>} : vector<32x8xf32>, vector<8x1xf32>, vector<32x1xf32> -> vector<32x1xf32>
    %85 = arith.mulf %10, %65 : vector<32x1xf32>
    %86 = arith.mulf %85, %84 : vector<32x1xf32>
    %87 = arith.mulf %83, %84 : vector<32x1xf32>
    %88 = arith.mulf %87, %65 : vector<32x1xf32>
    %89 = arith.subf %66, %88 : vector<32x1xf32>
    %90 = arith.mulf %10, %89 : vector<32x1xf32>
    %91 = arith.addf %90, %11 : vector<32x1xf32>
    %92 = vector.broadcast %86 : vector<32x1xf32> to vector<32x256xf32>
    %93 = arith.mulf %64, %92 : vector<32x256xf32>
    %94 = vector.broadcast %91 : vector<32x1xf32> to vector<32x256xf32>
    %95 = arith.addf %93, %94 : vector<32x256xf32>
    %96 = arith.negf %95 : vector<32x256xf32>
    %97 = math.exp %96 : vector<32x256xf32>
    %cst_45 = arith.constant 1.000000e+00 : f32
    %98 = vector.broadcast %cst_45 : f32 to vector<32x256xf32>
    %99 = arith.addf %98, %97 : vector<32x256xf32>
    %100 = arith.divf %98, %99 : vector<32x256xf32>
    %101 = arith.mulf %95, %100 : vector<32x256xf32>
    %c0_46 = arith.constant 0 : index
    %c0_47 = arith.constant 0 : index
    %102 = vector.load %arg12[%c0_46, %c0_47] : memref<32x288xbf16, #tpu.memory_space<vmem>>, vector<32x288xbf16>
    %c17_i32_48 = arith.constant 17 : i32
    %103 = tpu.dynamic_rotate %101 by %c17_i32_48 dim 1 : vector<32x256xf32>, i32 -> vector<32x256xf32>
    %c0_49 = arith.constant 0 : index
    %c0_50 = arith.constant 0 : index
    %104 = vector.load %arg3[%c0_49, %c0_50] : memref<9x256xf32, #tpu.memory_space<vmem>>, vector<1x256xf32>
    %105 = vector.broadcast %104 : vector<1x256xf32> to vector<32x256xf32>
    %106 = arith.mulf %103, %105 : vector<32x256xf32>
    %107 = arith.truncf %106 : vector<32x256xf32> to vector<32x256xbf16>
    %c16_i32_51 = arith.constant 16 : i32
    %108 = tpu.dynamic_rotate %101 by %c16_i32_51 dim 1 : vector<32x256xf32>, i32 -> vector<32x256xf32>
    %c1_52 = arith.constant 1 : index
    %c0_53 = arith.constant 0 : index
    %109 = vector.load %arg3[%c1_52, %c0_53] : memref<9x256xf32, #tpu.memory_space<vmem>>, vector<1x256xf32>
    %110 = vector.broadcast %109 : vector<1x256xf32> to vector<32x256xf32>
    %111 = arith.mulf %108, %110 : vector<32x256xf32>
    %112 = arith.truncf %111 : vector<32x256xf32> to vector<32x256xbf16>
    %c15_i32_54 = arith.constant 15 : i32
    %113 = tpu.dynamic_rotate %101 by %c15_i32_54 dim 1 : vector<32x256xf32>, i32 -> vector<32x256xf32>
    %c2_55 = arith.constant 2 : index
    %c0_56 = arith.constant 0 : index
    %114 = vector.load %arg3[%c2_55, %c0_56] : memref<9x256xf32, #tpu.memory_space<vmem>>, vector<1x256xf32>
    %115 = vector.broadcast %114 : vector<1x256xf32> to vector<32x256xf32>
    %116 = arith.mulf %113, %115 : vector<32x256xf32>
    %117 = arith.truncf %116 : vector<32x256xf32> to vector<32x256xbf16>
    %c1_i32_57 = arith.constant 1 : i32
    %118 = tpu.dynamic_rotate %101 by %c1_i32_57 dim 1 : vector<32x256xf32>, i32 -> vector<32x256xf32>
    %c3_58 = arith.constant 3 : index
    %c0_59 = arith.constant 0 : index
    %119 = vector.load %arg3[%c3_58, %c0_59] : memref<9x256xf32, #tpu.memory_space<vmem>>, vector<1x256xf32>
    %120 = vector.broadcast %119 : vector<1x256xf32> to vector<32x256xf32>
    %121 = arith.mulf %118, %120 : vector<32x256xf32>
    %122 = arith.truncf %121 : vector<32x256xf32> to vector<32x256xbf16>
    %123 = arith.truncf %101 : vector<32x256xf32> to vector<32x256xbf16>
    %c255_i32_60 = arith.constant 255 : i32
    %124 = tpu.dynamic_rotate %101 by %c255_i32_60 dim 1 : vector<32x256xf32>, i32 -> vector<32x256xf32>
    %c5_61 = arith.constant 5 : index
    %c0_62 = arith.constant 0 : index
    %125 = vector.load %arg3[%c5_61, %c0_62] : memref<9x256xf32, #tpu.memory_space<vmem>>, vector<1x256xf32>
    %126 = vector.broadcast %125 : vector<1x256xf32> to vector<32x256xf32>
    %127 = arith.mulf %124, %126 : vector<32x256xf32>
    %128 = arith.truncf %127 : vector<32x256xf32> to vector<32x256xbf16>
    %c241_i32_63 = arith.constant 241 : i32
    %129 = tpu.dynamic_rotate %101 by %c241_i32_63 dim 1 : vector<32x256xf32>, i32 -> vector<32x256xf32>
    %c6_64 = arith.constant 6 : index
    %c0_65 = arith.constant 0 : index
    %130 = vector.load %arg3[%c6_64, %c0_65] : memref<9x256xf32, #tpu.memory_space<vmem>>, vector<1x256xf32>
    %131 = vector.broadcast %130 : vector<1x256xf32> to vector<32x256xf32>
    %132 = arith.mulf %129, %131 : vector<32x256xf32>
    %133 = arith.truncf %132 : vector<32x256xf32> to vector<32x256xbf16>
    %c240_i32_66 = arith.constant 240 : i32
    %134 = tpu.dynamic_rotate %101 by %c240_i32_66 dim 1 : vector<32x256xf32>, i32 -> vector<32x256xf32>
    %c7_67 = arith.constant 7 : index
    %c0_68 = arith.constant 0 : index
    %135 = vector.load %arg3[%c7_67, %c0_68] : memref<9x256xf32, #tpu.memory_space<vmem>>, vector<1x256xf32>
    %136 = vector.broadcast %135 : vector<1x256xf32> to vector<32x256xf32>
    %137 = arith.mulf %134, %136 : vector<32x256xf32>
    %138 = arith.truncf %137 : vector<32x256xf32> to vector<32x256xbf16>
    %c239_i32_69 = arith.constant 239 : i32
    %139 = tpu.dynamic_rotate %101 by %c239_i32_69 dim 1 : vector<32x256xf32>, i32 -> vector<32x256xf32>
    %c8_70 = arith.constant 8 : index
    %c0_71 = arith.constant 0 : index
    %140 = vector.load %arg3[%c8_70, %c0_71] : memref<9x256xf32, #tpu.memory_space<vmem>>, vector<1x256xf32>
    %141 = vector.broadcast %140 : vector<1x256xf32> to vector<32x256xf32>
    %142 = arith.mulf %139, %141 : vector<32x256xf32>
    %143 = arith.truncf %142 : vector<32x256xf32> to vector<32x256xbf16>
    %144 = tpu.concatenate %107, %112, %117, %122, %123, %128, %133, %138, %143 in 0 : vector<32x256xbf16>, vector<32x256xbf16>, vector<32x256xbf16>, vector<32x256xbf16>, vector<32x256xbf16>, vector<32x256xbf16>, vector<32x256xbf16>, vector<32x256xbf16>, vector<32x256xbf16> -> vector<288x256xbf16>
    %cst_72 = arith.constant dense<0.000000e+00> : vector<32x256xf32>
    %145 = tpu.matmul %102, %144, %cst_72 {dimension_numbers = #tpu.dot_dimension_numbers<[1], [0], [0], [1], [0, 0, 1, 1], [], []>} : vector<32x288xbf16>, vector<288x256xbf16>, vector<32x256xf32> -> vector<32x256xf32>
    %c0_73 = arith.constant 0 : index
    %c0_74 = arith.constant 0 : index
    %146 = vector.load %arg13[%c0_73, %c0_74] : memref<32x1xf32, #tpu.memory_space<vmem>>, vector<32x1xf32>
    %147 = vector.broadcast %146 : vector<32x1xf32> to vector<32x256xf32>
    %148 = arith.addf %145, %147 : vector<32x256xf32>
    %c0_75 = arith.constant 0 : index
    %c0_76 = arith.constant 0 : index
    %149 = vector.load %arg14[%c0_75, %c0_76] : memref<32x1xf32, #tpu.memory_space<vmem>>, vector<32x1xf32>
    %c0_77 = arith.constant 0 : index
    %c0_78 = arith.constant 0 : index
    %150 = vector.load %arg15[%c0_77, %c0_78] : memref<32x1xf32, #tpu.memory_space<vmem>>, vector<32x1xf32>
    %cst_79 = arith.constant dense<0.000000e+00> : vector<32xf32>
    %151 = vector.multi_reduction <add>, %148, %cst_79 [1] : vector<32x256xf32> to vector<32xf32>
    %152 = vector.shape_cast %151 : vector<32xf32> to vector<32x1xf32>
    %153 = arith.mulf %148, %148 : vector<32x256xf32>
    %cst_80 = arith.constant dense<0.000000e+00> : vector<32xf32>
    %154 = vector.multi_reduction <add>, %153, %cst_80 [1] : vector<32x256xf32> to vector<32xf32>
    %155 = vector.shape_cast %154 : vector<32xf32> to vector<32x1xf32>
    %cst_81 = arith.constant dense<0.000000e+00> : vector<8x1xf32>
    %156 = tpu.matmul %4, %152, %cst_81 {dimension_numbers = #tpu.dot_dimension_numbers<[1], [0], [0], [1], [0, 0, 1, 1], [], []>} : vector<8x32xf32>, vector<32x1xf32>, vector<8x1xf32> -> vector<8x1xf32>
    %cst_82 = arith.constant 9.765625E-4 : f32
    %157 = vector.broadcast %cst_82 : f32 to vector<8x1xf32>
    %158 = arith.mulf %156, %157 : vector<8x1xf32>
    %cst_83 = arith.constant dense<0.000000e+00> : vector<8x1xf32>
    %159 = tpu.matmul %4, %155, %cst_83 {dimension_numbers = #tpu.dot_dimension_numbers<[1], [0], [0], [1], [0, 0, 1, 1], [], []>} : vector<8x32xf32>, vector<32x1xf32>, vector<8x1xf32> -> vector<8x1xf32>
    %cst_84 = arith.constant 9.765625E-4 : f32
    %160 = vector.broadcast %cst_84 : f32 to vector<8x1xf32>
    %161 = arith.mulf %159, %160 : vector<8x1xf32>
    %162 = arith.mulf %158, %158 : vector<8x1xf32>
    %163 = arith.subf %161, %162 : vector<8x1xf32>
    %cst_85 = arith.constant 9.99999974E-6 : f32
    %164 = vector.broadcast %cst_85 : f32 to vector<8x1xf32>
    %165 = arith.addf %163, %164 : vector<8x1xf32>
    %166 = math.rsqrt %165 : vector<8x1xf32>
    %cst_86 = arith.constant dense<0.000000e+00> : vector<32x1xf32>
    %167 = tpu.matmul %5, %158, %cst_86 {dimension_numbers = #tpu.dot_dimension_numbers<[1], [0], [0], [1], [0, 0, 1, 1], [], []>} : vector<32x8xf32>, vector<8x1xf32>, vector<32x1xf32> -> vector<32x1xf32>
    %cst_87 = arith.constant dense<0.000000e+00> : vector<32x1xf32>
    %168 = tpu.matmul %5, %166, %cst_87 {dimension_numbers = #tpu.dot_dimension_numbers<[1], [0], [0], [1], [0, 0, 1, 1], [], []>} : vector<32x8xf32>, vector<8x1xf32>, vector<32x1xf32> -> vector<32x1xf32>
    %169 = arith.mulf %16, %149 : vector<32x1xf32>
    %170 = arith.mulf %169, %168 : vector<32x1xf32>
    %171 = arith.mulf %167, %168 : vector<32x1xf32>
    %172 = arith.mulf %171, %149 : vector<32x1xf32>
    %173 = arith.subf %150, %172 : vector<32x1xf32>
    %174 = arith.mulf %16, %173 : vector<32x1xf32>
    %175 = arith.addf %174, %17 : vector<32x1xf32>
    %176 = vector.broadcast %170 : vector<32x1xf32> to vector<32x256xf32>
    %177 = arith.mulf %148, %176 : vector<32x256xf32>
    %178 = vector.broadcast %175 : vector<32x1xf32> to vector<32x256xf32>
    %179 = arith.addf %177, %178 : vector<32x256xf32>
    %180 = arith.negf %179 : vector<32x256xf32>
    %181 = math.exp %180 : vector<32x256xf32>
    %cst_88 = arith.constant 1.000000e+00 : f32
    %182 = vector.broadcast %cst_88 : f32 to vector<32x256xf32>
    %183 = arith.addf %182, %181 : vector<32x256xf32>
    %184 = arith.divf %182, %183 : vector<32x256xf32>
    %185 = arith.mulf %179, %184 : vector<32x256xf32>
    %186 = arith.addf %1, %185 : vector<32x256xf32>
    %c0_89 = arith.constant 0 : index
    %c0_90 = arith.constant 0 : index
    %187 = vector.load %arg16[%c0_89, %c0_90] : memref<64x288xbf16, #tpu.memory_space<vmem>>, vector<64x288xbf16>
    %c17_i32_91 = arith.constant 17 : i32
    %188 = tpu.dynamic_rotate %186 by %c17_i32_91 dim 1 : vector<32x256xf32>, i32 -> vector<32x256xf32>
    %c0_92 = arith.constant 0 : index
    %c0_93 = arith.constant 0 : index
    %189 = vector.load %arg3[%c0_92, %c0_93] : memref<9x256xf32, #tpu.memory_space<vmem>>, vector<1x256xf32>
    %190 = vector.broadcast %189 : vector<1x256xf32> to vector<32x256xf32>
    %191 = arith.mulf %188, %190 : vector<32x256xf32>
    %192 = arith.truncf %191 : vector<32x256xf32> to vector<32x256xbf16>
    %c16_i32_94 = arith.constant 16 : i32
    %193 = tpu.dynamic_rotate %186 by %c16_i32_94 dim 1 : vector<32x256xf32>, i32 -> vector<32x256xf32>
    %c1_95 = arith.constant 1 : index
    %c0_96 = arith.constant 0 : index
    %194 = vector.load %arg3[%c1_95, %c0_96] : memref<9x256xf32, #tpu.memory_space<vmem>>, vector<1x256xf32>
    %195 = vector.broadcast %194 : vector<1x256xf32> to vector<32x256xf32>
    %196 = arith.mulf %193, %195 : vector<32x256xf32>
    %197 = arith.truncf %196 : vector<32x256xf32> to vector<32x256xbf16>
    %c15_i32_97 = arith.constant 15 : i32
    %198 = tpu.dynamic_rotate %186 by %c15_i32_97 dim 1 : vector<32x256xf32>, i32 -> vector<32x256xf32>
    %c2_98 = arith.constant 2 : index
    %c0_99 = arith.constant 0 : index
    %199 = vector.load %arg3[%c2_98, %c0_99] : memref<9x256xf32, #tpu.memory_space<vmem>>, vector<1x256xf32>
    %200 = vector.broadcast %199 : vector<1x256xf32> to vector<32x256xf32>
    %201 = arith.mulf %198, %200 : vector<32x256xf32>
    %202 = arith.truncf %201 : vector<32x256xf32> to vector<32x256xbf16>
    %c1_i32_100 = arith.constant 1 : i32
    %203 = tpu.dynamic_rotate %186 by %c1_i32_100 dim 1 : vector<32x256xf32>, i32 -> vector<32x256xf32>
    %c3_101 = arith.constant 3 : index
    %c0_102 = arith.constant 0 : index
    %204 = vector.load %arg3[%c3_101, %c0_102] : memref<9x256xf32, #tpu.memory_space<vmem>>, vector<1x256xf32>
    %205 = vector.broadcast %204 : vector<1x256xf32> to vector<32x256xf32>
    %206 = arith.mulf %203, %205 : vector<32x256xf32>
    %207 = arith.truncf %206 : vector<32x256xf32> to vector<32x256xbf16>
    %208 = arith.truncf %186 : vector<32x256xf32> to vector<32x256xbf16>
    %c255_i32_103 = arith.constant 255 : i32
    %209 = tpu.dynamic_rotate %186 by %c255_i32_103 dim 1 : vector<32x256xf32>, i32 -> vector<32x256xf32>
    %c5_104 = arith.constant 5 : index
    %c0_105 = arith.constant 0 : index
    %210 = vector.load %arg3[%c5_104, %c0_105] : memref<9x256xf32, #tpu.memory_space<vmem>>, vector<1x256xf32>
    %211 = vector.broadcast %210 : vector<1x256xf32> to vector<32x256xf32>
    %212 = arith.mulf %209, %211 : vector<32x256xf32>
    %213 = arith.truncf %212 : vector<32x256xf32> to vector<32x256xbf16>
    %c241_i32_106 = arith.constant 241 : i32
    %214 = tpu.dynamic_rotate %186 by %c241_i32_106 dim 1 : vector<32x256xf32>, i32 -> vector<32x256xf32>
    %c6_107 = arith.constant 6 : index
    %c0_108 = arith.constant 0 : index
    %215 = vector.load %arg3[%c6_107, %c0_108] : memref<9x256xf32, #tpu.memory_space<vmem>>, vector<1x256xf32>
    %216 = vector.broadcast %215 : vector<1x256xf32> to vector<32x256xf32>
    %217 = arith.mulf %214, %216 : vector<32x256xf32>
    %218 = arith.truncf %217 : vector<32x256xf32> to vector<32x256xbf16>
    %c240_i32_109 = arith.constant 240 : i32
    %219 = tpu.dynamic_rotate %186 by %c240_i32_109 dim 1 : vector<32x256xf32>, i32 -> vector<32x256xf32>
    %c7_110 = arith.constant 7 : index
    %c0_111 = arith.constant 0 : index
    %220 = vector.load %arg3[%c7_110, %c0_111] : memref<9x256xf32, #tpu.memory_space<vmem>>, vector<1x256xf32>
    %221 = vector.broadcast %220 : vector<1x256xf32> to vector<32x256xf32>
    %222 = arith.mulf %219, %221 : vector<32x256xf32>
    %223 = arith.truncf %222 : vector<32x256xf32> to vector<32x256xbf16>
    %c239_i32_112 = arith.constant 239 : i32
    %224 = tpu.dynamic_rotate %186 by %c239_i32_112 dim 1 : vector<32x256xf32>, i32 -> vector<32x256xf32>
    %c8_113 = arith.constant 8 : index
    %c0_114 = arith.constant 0 : index
    %225 = vector.load %arg3[%c8_113, %c0_114] : memref<9x256xf32, #tpu.memory_space<vmem>>, vector<1x256xf32>
    %226 = vector.broadcast %225 : vector<1x256xf32> to vector<32x256xf32>
    %227 = arith.mulf %224, %226 : vector<32x256xf32>
    %228 = arith.truncf %227 : vector<32x256xf32> to vector<32x256xbf16>
    %229 = tpu.concatenate %192, %197, %202, %207, %208, %213, %218, %223, %228 in 0 : vector<32x256xbf16>, vector<32x256xbf16>, vector<32x256xbf16>, vector<32x256xbf16>, vector<32x256xbf16>, vector<32x256xbf16>, vector<32x256xbf16>, vector<32x256xbf16>, vector<32x256xbf16> -> vector<288x256xbf16>
    %cst_115 = arith.constant dense<0.000000e+00> : vector<64x256xf32>
    %230 = tpu.matmul %187, %229, %cst_115 {dimension_numbers = #tpu.dot_dimension_numbers<[1], [0], [0], [1], [0, 0, 1, 1], [], []>} : vector<64x288xbf16>, vector<288x256xbf16>, vector<64x256xf32> -> vector<64x256xf32>
    %c0_116 = arith.constant 0 : index
    %c0_117 = arith.constant 0 : index
    %231 = vector.load %arg17[%c0_116, %c0_117] : memref<64x1xf32, #tpu.memory_space<vmem>>, vector<64x1xf32>
    %232 = vector.broadcast %231 : vector<64x1xf32> to vector<64x256xf32>
    %233 = arith.addf %230, %232 : vector<64x256xf32>
    %c0_118 = arith.constant 0 : index
    %c0_119 = arith.constant 0 : index
    %234 = vector.load %arg20[%c0_118, %c0_119] : memref<256x64xf32, #tpu.memory_space<vmem>>, vector<256x64xf32>
    %cst_120 = arith.constant dense<0.000000e+00> : vector<64x64xf32>
    %235 = tpu.matmul %233, %234, %cst_120 {dimension_numbers = #tpu.dot_dimension_numbers<[1], [0], [0], [1], [0, 0, 1, 1], [], []>} : vector<64x256xf32>, vector<256x64xf32>, vector<64x64xf32> -> vector<64x64xf32>
    %236 = arith.negf %235 : vector<64x64xf32>
    %237 = math.exp %236 : vector<64x64xf32>
    %cst_121 = arith.constant 1.000000e+00 : f32
    %238 = vector.broadcast %cst_121 : f32 to vector<64x64xf32>
    %239 = arith.addf %238, %237 : vector<64x64xf32>
    %240 = arith.divf %238, %239 : vector<64x64xf32>
    %241 = arith.mulf %235, %240 : vector<64x64xf32>
    %c0_122 = arith.constant 0 : index
    %c0_123 = arith.constant 0 : index
    %c0_124 = arith.constant 0 : index
    %242 = vector.load %arg21[%c0_122, %c0_123, %c0_124] : memref<1x64x64xf32, #tpu.memory_space<vmem>>, vector<1x64x64xf32>
    %243 = vector.shape_cast %242 : vector<1x64x64xf32> to vector<64x64xf32>
    %244 = vector.shape_cast %241 : vector<64x64xf32> to vector<1x64x64xf32>
    tpu.vector_store %arg21[%c0_122, %c0_123, %c0_124], %244 {strides = array<i32>} : memref<1x64x64xf32, #tpu.memory_space<vmem>>, vector<1x64x64xf32>,
    return
  }
  func.func @transform_0(%arg0: i32) -> (i32, i32, i32) {
    %c0_i32 = arith.constant 0 : i32
    %c0_i32_0 = arith.constant 0 : i32
    %c0_i32_1 = arith.constant 0 : i32
    return %arg0, %c0_i32, %c0_i32_0 : i32, i32, i32
  }
  func.func @transform_1(%arg0: i32) -> (i32, i32, i32) {
    %c0_i32 = arith.constant 0 : i32
    %c0_i32_0 = arith.constant 0 : i32
    %c0_i32_1 = arith.constant 0 : i32
    return %arg0, %c0_i32, %c0_i32_0 : i32, i32, i32
  }
  func.func @transform_2(%arg0: i32) -> (i32, i32) {
    %c0_i32 = arith.constant 0 : i32
    %c0_i32_0 = arith.constant 0 : i32
    %c0_i32_1 = arith.constant 0 : i32
    return %c0_i32, %c0_i32_0 : i32, i32
  }
  func.func @transform_3(%arg0: i32) -> (i32, i32) {
    %c0_i32 = arith.constant 0 : i32
    %c0_i32_0 = arith.constant 0 : i32
    %c0_i32_1 = arith.constant 0 : i32
    return %c0_i32, %c0_i32_0 : i32, i32
  }
  func.func @transform_4(%arg0: i32) -> (i32, i32) {
    %c0_i32 = arith.constant 0 : i32
    %c0_i32_0 = arith.constant 0 : i32
    %c0_i32_1 = arith.constant 0 : i32
    return %c0_i32, %c0_i32_0 : i32, i32
  }
  func.func @transform_5(%arg0: i32) -> (i32, i32) {
    %c0_i32 = arith.constant 0 : i32
    %c0_i32_0 = arith.constant 0 : i32
    %c0_i32_1 = arith.constant 0 : i32
    return %c0_i32, %c0_i32_0 : i32, i32
  }
  func.func @transform_6(%arg0: i32) -> (i32, i32) {
    %c0_i32 = arith.constant 0 : i32
    %c0_i32_0 = arith.constant 0 : i32
    %c0_i32_1 = arith.constant 0 : i32
    return %c0_i32, %c0_i32_0 : i32, i32
  }
  func.func @transform_7(%arg0: i32) -> (i32, i32) {
    %c0_i32 = arith.constant 0 : i32
    %c0_i32_0 = arith.constant 0 : i32
    %c0_i32_1 = arith.constant 0 : i32
    return %c0_i32, %c0_i32_0 : i32, i32
  }
  func.func @transform_8(%arg0: i32) -> (i32, i32) {
    %c0_i32 = arith.constant 0 : i32
    %c0_i32_0 = arith.constant 0 : i32
    %c0_i32_1 = arith.constant 0 : i32
    return %c0_i32, %c0_i32_0 : i32, i32
  }
  func.func @transform_9(%arg0: i32) -> (i32, i32) {
    %c0_i32 = arith.constant 0 : i32
    %c0_i32_0 = arith.constant 0 : i32
    %c0_i32_1 = arith.constant 0 : i32
    return %c0_i32, %c0_i32_0 : i32, i32
  }
  func.func @transform_10(%arg0: i32) -> (i32, i32) {
    %c0_i32 = arith.constant 0 : i32
    %c0_i32_0 = arith.constant 0 : i32
    %c0_i32_1 = arith.constant 0 : i32
    return %c0_i32, %c0_i32_0 : i32, i32
  }
  func.func @transform_11(%arg0: i32) -> (i32, i32) {
    %c0_i32 = arith.constant 0 : i32
    %c0_i32_0 = arith.constant 0 : i32
    %c0_i32_1 = arith.constant 0 : i32
    return %c0_i32, %c0_i32_0 : i32, i32
  }
  func.func @transform_12(%arg0: i32) -> (i32, i32) {
    %c0_i32 = arith.constant 0 : i32
    %c0_i32_0 = arith.constant 0 : i32
    %c0_i32_1 = arith.constant 0 : i32
    return %c0_i32, %c0_i32_0 : i32, i32
  }
  func.func @transform_13(%arg0: i32) -> (i32, i32) {
    %c0_i32 = arith.constant 0 : i32
    %c0_i32_0 = arith.constant 0 : i32
    %c0_i32_1 = arith.constant 0 : i32
    return %c0_i32, %c0_i32_0 : i32, i32
  }
  func.func @transform_14(%arg0: i32) -> (i32, i32) {
    %c0_i32 = arith.constant 0 : i32
    %c0_i32_0 = arith.constant 0 : i32
    %c0_i32_1 = arith.constant 0 : i32
    return %c0_i32, %c0_i32_0 : i32, i32
  }
  func.func @transform_15(%arg0: i32) -> (i32, i32) {
    %c0_i32 = arith.constant 0 : i32
    %c0_i32_0 = arith.constant 0 : i32
    %c0_i32_1 = arith.constant 0 : i32
    return %c0_i32, %c0_i32_0 : i32, i32
  }
  func.func @transform_16(%arg0: i32) -> (i32, i32) {
    %c0_i32 = arith.constant 0 : i32
    %c0_i32_0 = arith.constant 0 : i32
    %c0_i32_1 = arith.constant 0 : i32
    return %c0_i32, %c0_i32_0 : i32, i32
  }
  func.func @transform_17(%arg0: i32) -> (i32, i32) {
    %c0_i32 = arith.constant 0 : i32
    %c0_i32_0 = arith.constant 0 : i32
    %c0_i32_1 = arith.constant 0 : i32
    return %c0_i32, %c0_i32_0 : i32, i32
  }
  func.func @transform_18(%arg0: i32) -> (i32, i32) {
    %c0_i32 = arith.constant 0 : i32
    %c0_i32_0 = arith.constant 0 : i32
    %c0_i32_1 = arith.constant 0 : i32
    return %c0_i32, %c0_i32_0 : i32, i32
  }
  func.func @transform_19(%arg0: i32) -> (i32, i32) {
    %c0_i32 = arith.constant 0 : i32
    %c0_i32_0 = arith.constant 0 : i32
    %c0_i32_1 = arith.constant 0 : i32
    return %c0_i32, %c0_i32_0 : i32, i32
  }
  func.func @transform_20(%arg0: i32) -> (i32, i32, i32) {
    %c0_i32 = arith.constant 0 : i32
    %c0_i32_0 = arith.constant 0 : i32
    %c0_i32_1 = arith.constant 0 : i32
    return %arg0, %c0_i32, %c0_i32_0 : i32, i32, i32
  }
}

</mosaic_0001>

<llo_original>
// kernel: tpu_custom_call.1
$region0: #{tpu_custom_call.1}
  #allocation0 [shape = 'u32[]', space=smem, size = 0x4, offset = 0x4, fixed_abs, tag = 'smem constant byte address 0x4 - core index']
  #allocation1 [shape = 'u32[72,128]{1,0:T(1,128)}', space=vmem, size = 0x9000, scoped, tag = 'internal scratch']
  %s0 = inlined_call_operand.vmem [shape: f32[2,64,1], index: 0, kind: input, shape index: {}]
  %s1 = inlined_call_operand.vmem [shape: f32[2,32,256], index: 1, kind: input, shape index: {}]
  %s2 = inlined_call_operand.vmem [shape: f32[9,256], index: 2, kind: input, shape index: {}]
  %s3 = inlined_call_operand.vmem [shape: f32[64,64], index: 3, kind: input, shape index: {}]
  %s4 = inlined_call_operand.vmem [shape: f32[64,1], index: 4, kind: input, shape index: {}]
  %s5 = inlined_call_operand.vmem [shape: bf16[32,288], index: 5, kind: input, shape index: {}]
  %s6 = inlined_call_operand.vmem [shape: f32[32,1], index: 6, kind: input, shape index: {}]
  %s7 = inlined_call_operand.vmem [shape: f32[32,1], index: 7, kind: input, shape index: {}]
  %s8 = inlined_call_operand.vmem [shape: f32[32,1], index: 8, kind: input, shape index: {}]
  %s9 = inlined_call_operand.vmem [shape: f32[64,64], index: 9, kind: input, shape index: {}]
  %s10 = inlined_call_operand.vmem [shape: f32[64,1], index: 10, kind: input, shape index: {}]
  %s11 = inlined_call_operand.vmem [shape: bf16[32,288], index: 11, kind: input, shape index: {}]
  %s12 = inlined_call_operand.vmem [shape: f32[32,1], index: 12, kind: input, shape index: {}]
  %s13 = inlined_call_operand.vmem [shape: f32[32,1], index: 13, kind: input, shape index: {}]
  %s14 = inlined_call_operand.vmem [shape: f32[32,1], index: 14, kind: input, shape index: {}]
  %s15 = inlined_call_operand.vmem [shape: bf16[64,288], index: 15, kind: input, shape index: {}]
  %s16 = inlined_call_operand.vmem [shape: f32[64,1], index: 16, kind: input, shape index: {}]
  %s17 = inlined_call_operand.vmem [shape: f32[8,32], index: 17, kind: input, shape index: {}]
  %s18 = inlined_call_operand.vmem [shape: f32[32,8], index: 18, kind: input, shape index: {}]
  %s19 = inlined_call_operand.vmem [shape: f32[256,64], index: 19, kind: input, shape index: {}]
  %s20 = inlined_call_operand.hbm [shape: f32[2,64,64], index: 20, kind: output, shape index: {}]
  %s21 = sld [smem:[#allocation0]]
  $region113: #{tpu_custom_call.1} parent=0
    _
  %s23 = ssub.s32 1, %s21
  %s24 = scalar_select 0, %s23, %s21
  $region1: #{tpu_custom_call.1} parent=0
    #allocation2 [shape = 'u8[65536]{0}', space=vmem, size = 0x10000, scoped, tag = 'output window, operand 0']
    #allocation3 [shape = 's32[2]{0}', space=sflag, size = 0x8, scoped, tag = 'scoped memory for tpu_custom_call.1']
    %25 = vsyncpa [#allocation3], 0
    %s26 = scalar_lea.sflag [#allocation3], 1
    %27 = vsyncpa %s26, 0
    loop: start=0, step=1, limit=4
    $region2: #{tpu_custom_call.1} parent=1 // loop_pre_header
      _
    $region3: #{tpu_custom_call.1} parent=1 // loop_header
      %s29 = sphi 0, %s33
      %p30 = scmp.ge.s32.totalorder %s29, 4
      %s39 = sphi 0, %s41
      %s42 = sphi 0, %s39
      %s43 = sphi 0, %s42
      %s59 = sphi 0, %s43
      %s65 = sphi 0, %s67
      %s68 = sphi 0, %s65
      %s69 = sphi 0, %s68
      %s85 = sphi 0, %s69
      %s89 = sphi 0, %s89
      %s91 = sphi 0, %s89
      %s92 = sphi 0, %s91
      %s106 = sphi 0, %s92
      %s110 = sphi 0, %s110
      %s112 = sphi 0, %s110
      %s113 = sphi 0, %s112
      %s127 = sphi 0, %s113
      %s131 = sphi 0, %s131
      %s133 = sphi 0, %s131
      %s134 = sphi 0, %s133
      %s148 = sphi 0, %s134
      %s152 = sphi 0, %s152
      %s154 = sphi 0, %s152
      %s155 = sphi 0, %s154
      %s169 = sphi 0, %s155
      %s173 = sphi 0, %s173
      %s175 = sphi 0, %s173
      %s176 = sphi 0, %s175
      %s190 = sphi 0, %s176
      %s194 = sphi 0, %s194
      %s196 = sphi 0, %s194
      %s197 = sphi 0, %s196
      %s211 = sphi 0, %s197
      %s215 = sphi 0, %s215
      %s217 = sphi 0, %s215
      %s218 = sphi 0, %s217
      %s232 = sphi 0, %s218
      %s236 = sphi 0, %s236
      %s238 = sphi 0, %s236
      %s239 = sphi 0, %s238
      %s253 = sphi 0, %s239
      %s257 = sphi 0, %s257
      %s259 = sphi 0, %s257
      %s260 = sphi 0, %s259
      %s274 = sphi 0, %s260
      %s278 = sphi 0, %s278
      %s280 = sphi 0, %s278
      %s281 = sphi 0, %s280
      %s295 = sphi 0, %s281
      %s299 = sphi 0, %s299
      %s301 = sphi 0, %s299
      %s302 = sphi 0, %s301
      %s316 = sphi 0, %s302
      %s320 = sphi 0, %s320
      %s322 = sphi 0, %s320
      %s323 = sphi 0, %s322
      %s337 = sphi 0, %s323
      %s341 = sphi 0, %s341
      %s343 = sphi 0, %s341
      %s344 = sphi 0, %s343
      %s358 = sphi 0, %s344
      %s362 = sphi 0, %s362
      %s364 = sphi 0, %s362
      %s365 = sphi 0, %s364
      %s379 = sphi 0, %s365
      %s383 = sphi 0, %s383
      %s385 = sphi 0, %s383
      %s386 = sphi 0, %s385
      %s400 = sphi 0, %s386
      %s404 = sphi 0, %s404
      %s406 = sphi 0, %s404
      %s407 = sphi 0, %s406
      %s421 = sphi 0, %s407
      %s425 = sphi 0, %s425
      %s427 = sphi 0, %s425
      %s428 = sphi 0, %s427
      %s442 = sphi 0, %s428
      %s446 = sphi 0, %s446
      %s448 = sphi 0, %s446
      %s449 = sphi 0, %s448
      %s463 = sphi 0, %s449
      %s469 = sphi 0, %s471
      %s472 = sphi 0, %s469
      %s473 = sphi 0, %s472
      %s489 = sphi 0, %s473
    $region4: #{tpu_custom_call.1} parent=1 // loop_header_branch
      %32 = sbr.rel (%p30) target = $region8
    $region5: #{tpu_custom_call.1} parent=1 // loop_body
      %s34 = ssub.s32 %s29, 1
      %s35 = ssub.s32 %s29, 2
      %s36 = sadd.s32 %s29, 1
      %s37 = ssub.s32 %s29, %s36
      %p38 = scmp.eq.s32.totalorder %s37, 0
      %s40 = sadd.s32 %s39, 1
      %s41 = scalar_select %p38, %s39, %s40
      %p44 = pneg %p38
      %p45 = scmp.eq.s32.totalorder %s29, 1
      %p46 = por %p44, %p45
      %p47 = scmp.ne.s32.totalorder %s39, %s42
      %p48 = scmp.eq.s32.totalorder %s29, 0
      %p49 = por %p47, %p48
      %p50 = scmp.ne.s32.totalorder %s39, %s42
      %p51 = scmp.eq.s32.totalorder %s34, 1
      %p52 = por %p50, %p51
      %p53 = scmp.ne.s32.totalorder %s42, %s43
      %p54 = scmp.eq.s32.totalorder %s34, 0
      %p55 = por %p53, %p54
      %p56 = scmp.ne.s32.totalorder %s42, %s43
      %p57 = scmp.eq.s32.totalorder %s35, 1
      %p58 = por %p56, %p57
      %p60 = scmp.ne.s32.totalorder %s43, %s59
      %p61 = scmp.eq.s32.totalorder %s35, 0
      %p62 = por %p60, %p61
      %s63 = ssub.s32 %s29, %s36
      %p64 = scmp.eq.s32.totalorder %s63, 0
      %s66 = sadd.s32 %s65, 1
      %s67 = scalar_select %p64, %s65, %s66
      %p70 = pneg %p64
      %p71 = scmp.eq.s32.totalorder %s29, 1
      %p72 = por %p70, %p71
      %p73 = scmp.ne.s32.totalorder %s65, %s68
      %p74 = scmp.eq.s32.totalorder %s29, 0
      %p75 = por %p73, %p74
      %p76 = scmp.ne.s32.totalorder %s65, %s68
      %p77 = scmp.eq.s32.totalorder %s34, 1
      %p78 = por %p76, %p77
      %p79 = scmp.ne.s32.totalorder %s68, %s69
      %p80 = scmp.eq.s32.totalorder %s34, 0
      %p81 = por %p79, %p80
      %p82 = scmp.ne.s32.totalorder %s68, %s69
      %p83 = scmp.eq.s32.totalorder %s35, 1
      %p84 = por %p82, %p83
      %p86 = scmp.ne.s32.totalorder %s69, %s85
      %p87 = scmp.eq.s32.totalorder %s35, 0
      %p88 = por %p86, %p87
      %s90 = sadd.s32 %s89, 1
      %p93 = scmp.eq.s32.totalorder %s29, 1
      %p94 = scmp.ne.s32.totalorder %s89, %s91
      %p95 = scmp.eq.s32.totalorder %s29, 0
      %p96 = por %p94, %p95
      %p97 = scmp.ne.s32.totalorder %s89, %s91
      %p98 = scmp.eq.s32.totalorder %s34, 1
      %p99 = por %p97, %p98
      %p100 = scmp.ne.s32.totalorder %s91, %s92
      %p101 = scmp.eq.s32.totalorder %s34, 0
      %p102 = por %p100, %p101
      %p103 = scmp.ne.s32.totalorder %s91, %s92
      %p104 = scmp.eq.s32.totalorder %s35, 1
      %p105 = por %p103, %p104
      %p107 = scmp.ne.s32.totalorder %s92, %s106
      %p108 = scmp.eq.s32.totalorder %s35, 0
      %p109 = por %p107, %p108
      %s111 = sadd.s32 %s110, 1
      %p114 = scmp.eq.s32.totalorder %s29, 1
      %p115 = scmp.ne.s32.totalorder %s110, %s112
      %p116 = scmp.eq.s32.totalorder %s29, 0
      %p117 = por %p115, %p116
      %p118 = scmp.ne.s32.totalorder %s110, %s112
      %p119 = scmp.eq.s32.totalorder %s34, 1
      %p120 = por %p118, %p119
      %p121 = scmp.ne.s32.totalorder %s112, %s113
      %p122 = scmp.eq.s32.totalorder %s34, 0
      %p123 = por %p121, %p122
      %p124 = scmp.ne.s32.totalorder %s112, %s113
      %p125 = scmp.eq.s32.totalorder %s35, 1
      %p126 = por %p124, %p125
      %p128 = scmp.ne.s32.totalorder %s113, %s127
      %p129 = scmp.eq.s32.totalorder %s35, 0
      %p130 = por %p128, %p129
      %s132 = sadd.s32 %s131, 1
      %p135 = scmp.eq.s32.totalorder %s29, 1
      %p136 = scmp.ne.s32.totalorder %s131, %s133
      %p137 = scmp.eq.s32.totalorder %s29, 0
      %p138 = por %p136, %p137
      %p139 = scmp.ne.s32.totalorder %s131, %s133
      %p140 = scmp.eq.s32.totalorder %s34, 1
      %p141 = por %p139, %p140
      %p142 = scmp.ne.s32.totalorder %s133, %s134
      %p143 = scmp.eq.s32.totalorder %s34, 0
      %p144 = por %p142, %p143
      %p145 = scmp.ne.s32.totalorder %s133, %s134
      %p146 = scmp.eq.s32.totalorder %s35, 1
      %p147 = por %p145, %p146
      %p149 = scmp.ne.s32.totalorder %s134, %s148
      %p150 = scmp.eq.s32.totalorder %s35, 0
      %p151 = por %p149, %p150
      %s153 = sadd.s32 %s152, 1
      %p156 = scmp.eq.s32.totalorder %s29, 1
      %p157 = scmp.ne.s32.totalorder %s152, %s154
      %p158 = scmp.eq.s32.totalorder %s29, 0
      %p159 = por %p157, %p158
      %p160 = scmp.ne.s32.totalorder %s152, %s154
      %p161 = scmp.eq.s32.totalorder %s34, 1
      %p162 = por %p160, %p161
      %p163 = scmp.ne.s32.totalorder %s154, %s155
      %p164 = scmp.eq.s32.totalorder %s34, 0
      %p165 = por %p163, %p164
      %p166 = scmp.ne.s32.totalorder %s154, %s155
      %p167 = scmp.eq.s32.totalorder %s35, 1
      %p168 = por %p166, %p167
      %p170 = scmp.ne.s32.totalorder %s155, %s169
      %p171 = scmp.eq.s32.totalorder %s35, 0
      %p172 = por %p170, %p171
      %s174 = sadd.s32 %s173, 1
      %p177 = scmp.eq.s32.totalorder %s29, 1
      %p178 = scmp.ne.s32.totalorder %s173, %s175
      %p179 = scmp.eq.s32.totalorder %s29, 0
      %p180 = por %p178, %p179
      %p181 = scmp.ne.s32.totalorder %s173, %s175
      %p182 = scmp.eq.s32.totalorder %s34, 1
      %p183 = por %p181, %p182
      %p184 = scmp.ne.s32.totalorder %s175, %s176
      %p185 = scmp.eq.s32.totalorder %s34, 0
      %p186 = por %p184, %p185
      %p187 = scmp.ne.s32.totalorder %s175, %s176
      %p188 = scmp.eq.s32.totalorder %s35, 1
      %p189 = por %p187, %p188
      %p191 = scmp.ne.s32.totalorder %s176, %s190
      %p192 = scmp.eq.s32.totalorder %s35, 0
      %p193 = por %p191, %p192
      %s195 = sadd.s32 %s194, 1
      %p198 = scmp.eq.s32.totalorder %s29, 1
      %p199 = scmp.ne.s32.totalorder %s194, %s196
      %p200 = scmp.eq.s32.totalorder %s29, 0
      %p201 = por %p199, %p200
      %p202 = scmp.ne.s32.totalorder %s194, %s196
      %p203 = scmp.eq.s32.totalorder %s34, 1
      %p204 = por %p202, %p203
      %p205 = scmp.ne.s32.totalorder %s196, %s197
      %p206 = scmp.eq.s32.totalorder %s34, 0
      %p207 = por %p205, %p206
      %p208 = scmp.ne.s32.totalorder %s196, %s197
      %p209 = scmp.eq.s32.totalorder %s35, 1
      %p210 = por %p208, %p209
      %p212 = scmp.ne.s32.totalorder %s197, %s211
      %p213 = scmp.eq.s32.totalorder %s35, 0
      %p214 = por %p212, %p213
      %s216 = sadd.s32 %s215, 1
      %p219 = scmp.eq.s32.totalorder %s29, 1
      %p220 = scmp.ne.s32.totalorder %s215, %s217
      %p221 = scmp.eq.s32.totalorder %s29, 0
      %p222 = por %p220, %p221
      %p223 = scmp.ne.s32.totalorder %s215, %s217
      %p224 = scmp.eq.s32.totalorder %s34, 1
      %p225 = por %p223, %p224
      %p226 = scmp.ne.s32.totalorder %s217, %s218
      %p227 = scmp.eq.s32.totalorder %s34, 0
      %p228 = por %p226, %p227
      %p229 = scmp.ne.s32.totalorder %s217, %s218
      %p230 = scmp.eq.s32.totalorder %s35, 1
      %p231 = por %p229, %p230
      %p233 = scmp.ne.s32.totalorder %s218, %s232
      %p234 = scmp.eq.s32.totalorder %s35, 0
      %p235 = por %p233, %p234
      %s237 = sadd.s32 %s236, 1
      %p240 = scmp.eq.s32.totalorder %s29, 1
      %p241 = scmp.ne.s32.totalorder %s236, %s238
      %p242 = scmp.eq.s32.totalorder %s29, 0
      %p243 = por %p241, %p242
      %p244 = scmp.ne.s32.totalorder %s236, %s238
      %p245 = scmp.eq.s32.totalorder %s34, 1
      %p246 = por %p244, %p245
      %p247 = scmp.ne.s32.totalorder %s238, %s239
      %p248 = scmp.eq.s32.totalorder %s34, 0
      %p249 = por %p247, %p248
      %p250 = scmp.ne.s32.totalorder %s238, %s239
      %p251 = scmp.eq.s32.totalorder %s35, 1
      %p252 = por %p250, %p251
      %p254 = scmp.ne.s32.totalorder %s239, %s253
      %p255 = scmp.eq.s32.totalorder %s35, 0
      %p256 = por %p254, %p255
      %s258 = sadd.s32 %s257, 1
      %p261 = scmp.eq.s32.totalorder %s29, 1
      %p262 = scmp.ne.s32.totalorder %s257, %s259
      %p263 = scmp.eq.s32.totalorder %s29, 0
      %p264 = por %p262, %p263
      %p265 = scmp.ne.s32.totalorder %s257, %s259
      %p266 = scmp.eq.s32.totalorder %s34, 1
      %p267 = por %p265, %p266
      %p268 = scmp.ne.s32.totalorder %s259, %s260
      %p269 = scmp.eq.s32.totalorder %s34, 0
      %p270 = por %p268, %p269
      %p271 = scmp.ne.s32.totalorder %s259, %s260
      %p272 = scmp.eq.s32.totalorder %s35, 1
      %p273 = por %p271, %p272
      %p275 = scmp.ne.s32.totalorder %s260, %s274
      %p276 = scmp.eq.s32.totalorder %s35, 0
      %p277 = por %p275, %p276
      %s279 = sadd.s32 %s278, 1
      %p282 = scmp.eq.s32.totalorder %s29, 1
      %p283 = scmp.ne.s32.totalorder %s278, %s280
      %p284 = scmp.eq.s32.totalorder %s29, 0
      %p285 = por %p283, %p284
      %p286 = scmp.ne.s32.totalorder %s278, %s280
      %p287 = scmp.eq.s32.totalorder %s34, 1
      %p288 = por %p286, %p287
      %p289 = scmp.ne.s32.totalorder %s280, %s281
      %p290 = scmp.eq.s32.totalorder %s34, 0
      %p291 = por %p289, %p290
      %p292 = scmp.ne.s32.totalorder %s280, %s281
      %p293 = scmp.eq.s32.totalorder %s35, 1
      %p294 = por %p292, %p293
      %p296 = scmp.ne.s32.totalorder %s281, %s295
      %p297 = scmp.eq.s32.totalorder %s35, 0
      %p298 = por %p296, %p297
      %s300 = sadd.s32 %s299, 1
      %p303 = scmp.eq.s32.totalorder %s29, 1
      %p304 = scmp.ne.s32.totalorder %s299, %s301
      %p305 = scmp.eq.s32.totalorder %s29, 0
      %p306 = por %p304, %p305
      %p307 = scmp.ne.s32.totalorder %s299, %s301
      %p308 = scmp.eq.s32.totalorder %s34, 1
      %p309 = por %p307, %p308
      %p310 = scmp.ne.s32.totalorder %s301, %s302
      %p311 = scmp.eq.s32.totalorder %s34, 0
      %p312 = por %p310, %p311
      %p313 = scmp.ne.s32.totalorder %s301, %s302
      %p314 = scmp.eq.s32.totalorder %s35, 1
      %p315 = por %p313, %p314
      %p317 = scmp.ne.s32.totalorder %s302, %s316
      %p318 = scmp.eq.s32.totalorder %s35, 0
      %p319 = por %p317, %p318
      %s321 = sadd.s32 %s320, 1
      %p324 = scmp.eq.s32.totalorder %s29, 1
      %p325 = scmp.ne.s32.totalorder %s320, %s322
      %p326 = scmp.eq.s32.totalorder %s29, 0
      %p327 = por %p325, %p326
      %p328 = scmp.ne.s32.totalorder %s320, %s322
      %p329 = scmp.eq.s32.totalorder %s34, 1
      %p330 = por %p328, %p329
      %p331 = scmp.ne.s32.totalorder %s322, %s323
      %p332 = scmp.eq.s32.totalorder %s34, 0
      %p333 = por %p331, %p332
      %p334 = scmp.ne.s32.totalorder %s322, %s323
      %p335 = scmp.eq.s32.totalorder %s35, 1
      %p336 = por %p334, %p335
      %p338 = scmp.ne.s32.totalorder %s323, %s337
      %p339 = scmp.eq.s32.totalorder %s35, 0
      %p340 = por %p338, %p339
      %s342 = sadd.s32 %s341, 1
      %p345 = scmp.eq.s32.totalorder %s29, 1
      %p346 = scmp.ne.s32.totalorder %s341, %s343
      %p347 = scmp.eq.s32.totalorder %s29, 0
      %p348 = por %p346, %p347
      %p349 = scmp.ne.s32.totalorder %s341, %s343
      %p350 = scmp.eq.s32.totalorder %s34, 1
      %p351 = por %p349, %p350
      %p352 = scmp.ne.s32.totalorder %s343, %s344
      %p353 = scmp.eq.s32.totalorder %s34, 0
      %p354 = por %p352, %p353
      %p355 = scmp.ne.s32.totalorder %s343, %s344
      %p356 = scmp.eq.s32.totalorder %s35, 1
      %p357 = por %p355, %p356
      %p359 = scmp.ne.s32.totalorder %s344, %s358
      %p360 = scmp.eq.s32.totalorder %s35, 0
      %p361 = por %p359, %p360
      %s363 = sadd.s32 %s362, 1
      %p366 = scmp.eq.s32.totalorder %s29, 1
      %p367 = scmp.ne.s32.totalorder %s362, %s364
      %p368 = scmp.eq.s32.totalorder %s29, 0
      %p369 = por %p367, %p368
      %p370 = scmp.ne.s32.totalorder %s362, %s364
      %p371 = scmp.eq.s32.totalorder %s34, 1
      %p372 = por %p370, %p371
      %p373 = scmp.ne.s32.totalorder %s364, %s365
      %p374 = scmp.eq.s32.totalorder %s34, 0
      %p375 = por %p373, %p374
      %p376 = scmp.ne.s32.totalorder %s364, %s365
      %p377 = scmp.eq.s32.totalorder %s35, 1
      %p378 = por %p376, %p377
      %p380 = scmp.ne.s32.totalorder %s365, %s379
      %p381 = scmp.eq.s32.totalorder %s35, 0
      %p382 = por %p380, %p381
      %s384 = sadd.s32 %s383, 1
      %p387 = scmp.eq.s32.totalorder %s29, 1
      %p388 = scmp.ne.s32.totalorder %s383, %s385
      %p389 = scmp.eq.s32.totalorder %s29, 0
      %p390 = por %p388, %p389
      %p391 = scmp.ne.s32.totalorder %s383, %s385
      %p392 = scmp.eq.s32.totalorder %s34, 1
      %p393 = por %p391, %p392
      %p394 = scmp.ne.s32.totalorder %s385, %s386
      %p395 = scmp.eq.s32.totalorder %s34, 0
      %p396 = por %p394, %p395
      %p397 = scmp.ne.s32.totalorder %s385, %s386
      %p398 = scmp.eq.s32.totalorder %s35, 1
      %p399 = por %p397, %p398
      %p401 = scmp.ne.s32.totalorder %s386, %s400
      %p402 = scmp.eq.s32.totalorder %s35, 0
      %p403 = por %p401, %p402
      %s405 = sadd.s32 %s404, 1
      %p408 = scmp.eq.s32.totalorder %s29, 1
      %p409 = scmp.ne.s32.totalorder %s404, %s406
      %p410 = scmp.eq.s32.totalorder %s29, 0
      %p411 = por %p409, %p410
      %p412 = scmp.ne.s32.totalorder %s404, %s406
      %p413 = scmp.eq.s32.totalorder %s34, 1
      %p414 = por %p412, %p413
      %p415 = scmp.ne.s32.totalorder %s406, %s407
      %p416 = scmp.eq.s32.totalorder %s34, 0
      %p417 = por %p415, %p416
      %p418 = scmp.ne.s32.totalorder %s406, %s407
      %p419 = scmp.eq.s32.totalorder %s35, 1
      %p420 = por %p418, %p419
      %p422 = scmp.ne.s32.totalorder %s407, %s421
      %p423 = scmp.eq.s32.totalorder %s35, 0
      %p424 = por %p422, %p423
      %s426 = sadd.s32 %s425, 1
      %p429 = scmp.eq.s32.totalorder %s29, 1
      %p430 = scmp.ne.s32.totalorder %s425, %s427
      %p431 = scmp.eq.s32.totalorder %s29, 0
      %p432 = por %p430, %p431
      %p433 = scmp.ne.s32.totalorder %s425, %s427
      %p434 = scmp.eq.s32.totalorder %s34, 1
      %p435 = por %p433, %p434
      %p436 = scmp.ne.s32.totalorder %s427, %s428
      %p437 = scmp.eq.s32.totalorder %s34, 0
      %p438 = por %p436, %p437
      %p439 = scmp.ne.s32.totalorder %s427, %s428
      %p440 = scmp.eq.s32.totalorder %s35, 1
      %p441 = por %p439, %p440
      %p443 = scmp.ne.s32.totalorder %s428, %s442
      %p444 = scmp.eq.s32.totalorder %s35, 0
      %p445 = por %p443, %p444
      %s447 = sadd.s32 %s446, 1
      %p450 = scmp.eq.s32.totalorder %s29, 1
      %p451 = scmp.ne.s32.totalorder %s446, %s448
      %p452 = scmp.eq.s32.totalorder %s29, 0
      %p453 = por %p451, %p452
      %p454 = scmp.ne.s32.totalorder %s446, %s448
      %p455 = scmp.eq.s32.totalorder %s34, 1
      %p456 = por %p454, %p455
      %p457 = scmp.ne.s32.totalorder %s448, %s449
      %p458 = scmp.eq.s32.totalorder %s34, 0
      %p459 = por %p457, %p458
      %p460 = scmp.ne.s32.totalorder %s448, %s449
      %p461 = scmp.eq.s32.totalorder %s35, 1
      %p462 = por %p460, %p461
      %p464 = scmp.ne.s32.totalorder %s449, %s463
      %p465 = scmp.eq.s32.totalorder %s35, 0
      %p466 = por %p464, %p465
      %s467 = ssub.s32 %s29, %s36
      %p468 = scmp.eq.s32.totalorder %s467, 0
      %s470 = sadd.s32 %s469, 1
      %s471 = scalar_select %p468, %s469, %s470
      %p474 = pneg %p468
      %p475 = scmp.eq.s32.totalorder %s29, 1
      %p476 = por %p474, %p475
      %p477 = scmp.ne.s32.totalorder %s469, %s472
      %p478 = scmp.eq.s32.totalorder %s29, 0
      %p479 = por %p477, %p478
      %p480 = scmp.ne.s32.totalorder %s469, %s472
      %p481 = scmp.eq.s32.totalorder %s34, 1
      %p482 = por %p480, %p481
      %p483 = scmp.ne.s32.totalorder %s472, %s473
      %p484 = scmp.eq.s32.totalorder %s34, 0
      %p485 = por %p483, %p484
      %p486 = scmp.ne.s32.totalorder %s472, %s473
      %p487 = scmp.eq.s32.totalorder %s35, 1
      %p488 = por %p486, %p487
      %p490 = scmp.ne.s32.totalorder %s473, %s489
      %p491 = scmp.eq.s32.totalorder %s35, 0
      %p492 = por %p490, %p491
      %p493 = scmp.le.s32.totalorder 1, %s29
      %p494 = scmp.lt.s32.totalorder %s29, 3
      %p495 = pnand %p493, %p494
      %p496 = pneg %p495
      // Predicated region
      $region9: #{tpu_custom_call.1} parent=5 // pred_check
        _
      $region10: #{tpu_custom_call.1} parent=5 // pred_check_branch
        %498 = sbr.rel (%p495) target = $region12
      $region11: #{tpu_custom_call.1} parent=5 // pred_region
        %s499 = ssub.s32 %s29, 1
        // Predicated region
        $region13: #{tpu_custom_call.1} parent=11 // pred_check
          %p500 = pneg %p102
        $region14: #{tpu_custom_call.1} parent=11 // pred_check_branch
          %502 = sbr.rel (%p500) target = $region16
        $region15: #{tpu_custom_call.1} parent=11 // pred_region
          _
        $region16: #{tpu_custom_call.1} parent=11 // pred_fallthru
          _
        // Predicated region
        $region17: #{tpu_custom_call.1} parent=11 // pred_check
          %p503 = pneg %p123
        $region18: #{tpu_custom_call.1} parent=11 // pred_check_branch
          %505 = sbr.rel (%p503) target = $region20
        $region19: #{tpu_custom_call.1} parent=11 // pred_region
          _
        $region20: #{tpu_custom_call.1} parent=11 // pred_fallthru
          _
        // Predicated region
        $region21: #{tpu_custom_call.1} parent=11 // pred_check
          %p506 = pneg %p144
        $region22: #{tpu_custom_call.1} parent=11 // pred_check_branch
          %508 = sbr.rel (%p506) target = $region24
        $region23: #{tpu_custom_call.1} parent=11 // pred_region
          _
        $region24: #{tpu_custom_call.1} parent=11 // pred_fallthru
          _
        // Predicated region
        $region25: #{tpu_custom_call.1} parent=11 // pred_check
          %p509 = pneg %p165
        $region26: #{tpu_custom_call.1} parent=11 // pred_check_branch
          %511 = sbr.rel (%p509) target = $region28
        $region27: #{tpu_custom_call.1} parent=11 // pred_region
          _
        $region28: #{tpu_custom_call.1} parent=11 // pred_fallthru
          _
        // Predicated region
        $region29: #{tpu_custom_call.1} parent=11 // pred_check
          %p512 = pneg %p186
        $region30: #{tpu_custom_call.1} parent=11 // pred_check_branch
          %514 = sbr.rel (%p512) target = $region32
        $region31: #{tpu_custom_call.1} parent=11 // pred_region
          _
        $region32: #{tpu_custom_call.1} parent=11 // pred_fallthru
          _
        // Predicated region
        $region33: #{tpu_custom_call.1} parent=11 // pred_check
          %p515 = pneg %p207
        $region34: #{tpu_custom_call.1} parent=11 // pred_check_branch
          %517 = sbr.rel (%p515) target = $region36
        $region35: #{tpu_custom_call.1} parent=11 // pred_region
          _
        $region36: #{tpu_custom_call.1} parent=11 // pred_fallthru
          _
        // Predicated region
        $region37: #{tpu_custom_call.1} parent=11 // pred_check
          %p518 = pneg %p228
        $region38: #{tpu_custom_call.1} parent=11 // pred_check_branch
          %520 = sbr.rel (%p518) target = $region40
        $region39: #{tpu_custom_call.1} parent=11 // pred_region
          _
        $region40: #{tpu_custom_call.1} parent=11 // pred_fallthru
          _
        // Predicated region
        $region41: #{tpu_custom_call.1} parent=11 // pred_check
          %p521 = pneg %p249
        $region42: #{tpu_custom_call.1} parent=11 // pred_check_branch
          %523 = sbr.rel (%p521) target = $region44
        $region43: #{tpu_custom_call.1} parent=11 // pred_region
          _
        $region44: #{tpu_custom_call.1} parent=11 // pred_fallthru
          _
        // Predicated region
        $region45: #{tpu_custom_call.1} parent=11 // pred_check
          %p524 = pneg %p270
        $region46: #{tpu_custom_call.1} parent=11 // pred_check_branch
          %526 = sbr.rel (%p524) target = $region48
        $region47: #{tpu_custom_call.1} parent=11 // pred_region
          _
        $region48: #{tpu_custom_call.1} parent=11 // pred_fallthru
          _
        // Predicated region
        $region49: #{tpu_custom_call.1} parent=11 // pred_check
          %p527 = pneg %p291
        $region50: #{tpu_custom_call.1} parent=11 // pred_check_branch
          %529 = sbr.rel (%p527) target = $region52
        $region51: #{tpu_custom_call.1} parent=11 // pred_region
          _
        $region52: #{tpu_custom_call.1} parent=11 // pred_fallthru
          _
        // Predicated region
        $region53: #{tpu_custom_call.1} parent=11 // pred_check
          %p530 = pneg %p312
        $region54: #{tpu_custom_call.1} parent=11 // pred_check_branch
          %532 = sbr.rel (%p530) target = $region56
        $region55: #{tpu_custom_call.1} parent=11 // pred_region
          _
        $region56: #{tpu_custom_call.1} parent=11 // pred_fallthru
          _
        // Predicated region
        $region57: #{tpu_custom_call.1} parent=11 // pred_check
          %p533 = pneg %p333
        $region58: #{tpu_custom_call.1} parent=11 // pred_check_branch
          %535 = sbr.rel (%p533) target = $region60
        $region59: #{tpu_custom_call.1} parent=11 // pred_region
          _
        $region60: #{tpu_custom_call.1} parent=11 // pred_fallthru
          _
        // Predicated region
        $region61: #{tpu_custom_call.1} parent=11 // pred_check
          %p536 = pneg %p354
        $region62: #{tpu_custom_call.1} parent=11 // pred_check_branch
          %538 = sbr.rel (%p536) target = $region64
        $region63: #{tpu_custom_call.1} parent=11 // pred_region
          _
        $region64: #{tpu_custom_call.1} parent=11 // pred_fallthru
          _
        // Predicated region
        $region65: #{tpu_custom_call.1} parent=11 // pred_check
          %p539 = pneg %p375
        $region66: #{tpu_custom_call.1} parent=11 // pred_check_branch
          %541 = sbr.rel (%p539) target = $region68
        $region67: #{tpu_custom_call.1} parent=11 // pred_region
          _
        $region68: #{tpu_custom_call.1} parent=11 // pred_fallthru
          _
        // Predicated region
        $region69: #{tpu_custom_call.1} parent=11 // pred_check
          %p542 = pneg %p396
        $region70: #{tpu_custom_call.1} parent=11 // pred_check_branch
          %544 = sbr.rel (%p542) target = $region72
        $region71: #{tpu_custom_call.1} parent=11 // pred_region
          _
        $region72: #{tpu_custom_call.1} parent=11 // pred_fallthru
          _
        // Predicated region
        $region73: #{tpu_custom_call.1} parent=11 // pred_check
          %p545 = pneg %p417
        $region74: #{tpu_custom_call.1} parent=11 // pred_check_branch
          %547 = sbr.rel (%p545) target = $region76
        $region75: #{tpu_custom_call.1} parent=11 // pred_region
          _
        $region76: #{tpu_custom_call.1} parent=11 // pred_fallthru
          _
        // Predicated region
        $region77: #{tpu_custom_call.1} parent=11 // pred_check
          %p548 = pneg %p438
        $region78: #{tpu_custom_call.1} parent=11 // pred_check_branch
          %550 = sbr.rel (%p548) target = $region80
        $region79: #{tpu_custom_call.1} parent=11 // pred_region
          _
        $region80: #{tpu_custom_call.1} parent=11 // pred_fallthru
          _
        // Predicated region
        $region81: #{tpu_custom_call.1} parent=11 // pred_check
          %p551 = pneg %p459
        $region82: #{tpu_custom_call.1} parent=11 // pred_check_branch
          %553 = sbr.rel (%p551) target = $region84
        $region83: #{tpu_custom_call.1} parent=11 // pred_region
          _
        $region84: #{tpu_custom_call.1} parent=11 // pred_fallthru
          _
      $region12: #{tpu_custom_call.1} parent=5 // pred_fallthru
        _
      %p554 = scmp.lt.s32.totalorder %s29, 2
      // Predicated region
      $region85: #{tpu_custom_call.1} parent=5 // pred_check
        %p555 = pneg %p554
      $region86: #{tpu_custom_call.1} parent=5 // pred_check_branch
        %557 = sbr.rel (%p555) target = $region88
      $region87: #{tpu_custom_call.1} parent=5 // pred_region
        // Predicated region
        $region89: #{tpu_custom_call.1} parent=87 // pred_check
          %p558 = pneg %p49
        $region90: #{tpu_custom_call.1} parent=87 // pred_check_branch
          %560 = sbr.rel (%p558) target = $region92
        $region91: #{tpu_custom_call.1} parent=87 // pred_region
          %p561 = scmp.lt.s32.totalorder %s29, 1
          %s562 = scalar_select %p561, %s29, 1
          %s563 = smul.addr %s562, 8
          %s564 = smul.addr %s563, 8
          %s565 = scalar_lea.vmem %s0, %s564
        $region92: #{tpu_custom_call.1} parent=87 // pred_fallthru
          _
        // Predicated region
        $region93: #{tpu_custom_call.1} parent=87 // pred_check
          %p566 = pneg %p75
        $region94: #{tpu_custom_call.1} parent=87 // pred_check_branch
          %568 = sbr.rel (%p566) target = $region96
        $region95: #{tpu_custom_call.1} parent=87 // pred_region
          %p569 = scmp.lt.s32.totalorder %s29, 1
          %s570 = scalar_select %p569, %s29, 1
          %s571 = smul.addr %s570, 8
          %s572 = smul.addr %s571, 8
          %s573 = scalar_lea.vmem %s1, %s572
        $region96: #{tpu_custom_call.1} parent=87 // pred_fallthru
          _
      $region88: #{tpu_custom_call.1} parent=5 // pred_fallthru
        _
      %p574 = scmp.le.s32.totalorder 1, %s29
      %p575 = scmp.lt.s32.totalorder %s29, 3
      %p576 = pnand %p574, %p575
      %p577 = pneg %p576
      // Predicated region
      $region97: #{tpu_custom_call.1} parent=5 // pred_check
        _
      $region98: #{tpu_custom_call.1} parent=5 // pred_check_branch
        %579 = sbr.rel (%p576) target = $region100
      $region99: #{tpu_custom_call.1} parent=5 // pred_region
        %s580 = ssub.s32 %s29, 1
        %p581 = scmp.lt.s32.totalorder %s34, 1
        %s582 = scalar_select %p581, %s34, 1
        %s583 = smul.addr %s582, 8
        %s584 = smul.addr %s583, 8
        %s585 = scalar_lea.vmem %s0, %s584
        %p586 = pneg %p55
        %p587 = pneg %p52
        %p588 = scmp.lt.s32.totalorder %s34, 1
        %s589 = scalar_select %p588, %s34, 1
        %s590 = smul.addr %s589, 8
        %s591 = smul.addr %s590, 8
        %s592 = scalar_lea.vmem %s1, %s591
        %p593 = pneg %p81
        %p594 = pneg %p78
        %p595 = pneg %p102
        %p596 = pneg %p99
        %p597 = pneg %p123
        %p598 = pneg %p120
        %p599 = pneg %p144
        %p600 = pneg %p141
        %p601 = pneg %p165
        %p602 = pneg %p162
        %p603 = pneg %p186
        %p604 = pneg %p183
        %p605 = pneg %p207
        %p606 = pneg %p204
        %p607 = pneg %p228
        %p608 = pneg %p225
        %p609 = pneg %p249
        %p610 = pneg %p246
        %p611 = pneg %p270
        %p612 = pneg %p267
        %p613 = pneg %p291
        %p614 = pneg %p288
        %p615 = pneg %p312
        %p616 = pneg %p309
        %p617 = pneg %p333
        %p618 = pneg %p330
        %p619 = pneg %p354
        %p620 = pneg %p351
        %p621 = pneg %p375
        %p622 = pneg %p372
        %p623 = pneg %p396
        %p624 = pneg %p393
        %p625 = pneg %p417
        %p626 = pneg %p414
        %p627 = pneg %p438
        %p628 = pneg %p435
        %p629 = pneg %p459
        %p630 = pneg %p456
        %p631 = pneg %p485
        %p632 = pneg %p482
        %s633 = sand.u32 %s472, 1
        %s634 = scalar_lea.sflag [#allocation3], %s633
        %s635 = sand.u32 %s472, 1
        %s636 = smul.addr %s635, 64
        %s637 = scalar_lea.vmem [#allocation2], %s636
        %p638 = scmp.lt.s32.totalorder %s34, 1
        %s639 = scalar_select %p638, %s34, 1
        %s640 = smul.addr %s639, 8
        %s641 = smul.addr %s640, 8
        %s642 = scalar_lea.vmem %s0, %s641
        %p643 = scmp.lt.s32.totalorder %s34, 1
        %s644 = scalar_select %p643, %s34, 1
        %s645 = smul.addr %s644, 8
        %s646 = smul.addr %s645, 8
        %s647 = scalar_lea.vmem %s1, %s646
        %v649 = vld [vmem:[%s647] sm:$0xff]
        %v650 = vld [vmem:[%s647 + $0x8] sm:$0xff]
        %v651 = vld [vmem:[%s647 + $0x10] sm:$0xff]
        %v652 = vld [vmem:[%s647 + $0x18] sm:$0xff]
        %v653 = vld [vmem:[%s647 + $0x20] sm:$0xff]
        %v654 = vld [vmem:[%s647 + $0x28] sm:$0xff]
        %v655 = vld [vmem:[%s647 + $0x30] sm:$0xff]
        %v656 = vld [vmem:[%s647 + $0x38] sm:$0xff]
        %v657 = vld [vmem:[%s642] sm:$0xff]
        %v658 = vld [vmem:[%s642 + $0x8] sm:$0xff]
        %v659 = vld [vmem:[%s642 + $0x10] sm:$0xff]
        %v660 = vld [vmem:[%s642 + $0x18] sm:$0xff]
        %v661 = vld [vmem:[%s642 + $0x20] sm:$0xff]
        %v662 = vld [vmem:[%s642 + $0x28] sm:$0xff]
        %v663 = vld [vmem:[%s642 + $0x30] sm:$0xff]
        %v664 = vld [vmem:[%s642 + $0x38] sm:$0xff]
        %v665 = vld [vmem:[%s17] sm:$0xff]
        %v666 = vld [vmem:[%s18] sm:$0xff]
        %v667 = vld [vmem:[%s18 + $0x8] sm:$0xff]
        %v668 = vld [vmem:[%s18 + $0x10] sm:$0xff]
        %v669 = vld [vmem:[%s18 + $0x18] sm:$0xff]
        %v670 = vld [vmem:[%s3] sm:$0xff]
        %v671 = vld [vmem:[%s3 + $0x8] sm:$0xff]
        %v672 = vld [vmem:[%s3 + $0x10] sm:$0xff]
        %v673 = vld [vmem:[%s3 + $0x18] sm:$0xff]
        %v674 = vld [vmem:[%s3 + $0x20] sm:$0xff]
        %v675 = vld [vmem:[%s3 + $0x28] sm:$0xff]
        %v676 = vld [vmem:[%s3 + $0x30] sm:$0xff]
        %v677 = vld [vmem:[%s3 + $0x38] sm:$0xff]
        %v678 = vld [vmem:[%s4] sm:$0xff]
        %v679 = vld [vmem:[%s4 + $0x8] sm:$0xff]
        %v680 = vld [vmem:[%s4 + $0x10] sm:$0xff]
        %v681 = vld [vmem:[%s4 + $0x18] sm:$0xff]
        %v682 = vld [vmem:[%s4 + $0x20] sm:$0xff]
        %v683 = vld [vmem:[%s4 + $0x28] sm:$0xff]
        %v684 = vld [vmem:[%s4 + $0x30] sm:$0xff]
        %v685 = vld [vmem:[%s4 + $0x38] sm:$0xff]
        %vm686 = vcmask 523264
        %v688 = vsel %vm686, %v670, 0
        %v691 = vsel %vm686, %v671, 0
        %v694 = vsel %vm686, %v672, 0
        %v697 = vsel %vm686, %v673, 0
        %v700 = vsel %vm686, %v674, 0
        %v703 = vsel %vm686, %v675, 0
        %v706 = vsel %vm686, %v676, 0
        %v709 = vsel %vm686, %v677, 0
        %711 = vmatpush.msra.mxu0 0.0
        %712 = vmatpush.msra.mxu0 0.0
        %713 = vmatpush.msra.mxu0 0.0
        %714 = vmatpush.msra.mxu0 0.0
        %715 = vmatpush.msra.mxu0 0.0
        %716 = vmatpush.msra.mxu0 0.0
        %717 = vmatpush.msra.mxu0 0.0
        %718 = vmatpush.msra.mxu0 0.0
        %719 = vmatpush.msra.mxu0 %v664
        %720 = vmatpush.msra.mxu0 %v663
        %721 = vmatpush.msra.mxu0 %v662
        %722 = vmatpush.msra.mxu0 %v661
        %723 = vmatpush.msra.mxu0 %v660
        %724 = vmatpush.msra.mxu0 %v659
        %725 = vmatpush.msra.mxu0 %v658
        %726 = vmatpush.msra.mxu0 %v657
        %727 = vmatmul.f32.gmra.mxu0 %v688
        %v728 = vpop.f32.mrf.mxu0
        %v729 = vadd.f32 %v678, %v728
        %730 = vmatmul.f32.gmra.mxu0 %v691
        %v731 = vpop.f32.mrf.mxu0
        %v732 = vadd.f32 %v679, %v731
        %733 = vmatmul.f32.gmra.mxu0 %v694
        %v734 = vpop.f32.mrf.mxu0
        %v735 = vadd.f32 %v680, %v734
        %736 = vmatmul.f32.gmra.mxu0 %v697
        %v737 = vpop.f32.mrf.mxu0
        %v738 = vadd.f32 %v681, %v737
        %739 = vmatmul.f32.gmra.mxu0 %v700
        %v740 = vpop.f32.mrf.mxu0
        %v741 = vadd.f32 %v682, %v740
        %742 = vmatmul.f32.gmra.mxu0 %v703
        %v743 = vpop.f32.mrf.mxu0
        %v744 = vadd.f32 %v683, %v743
        %745 = vmatmul.f32.gmra.mxu0 %v706
        %v746 = vpop.f32.mrf.mxu0
        %v747 = vadd.f32 %v684, %v746
        %748 = vmatmul.f32.gmra.mxu0 %v709
        %v749 = vpop.f32.mrf.mxu0
        %v750 = vadd.f32 %v685, %v749
        %751 = vdwg.mxu0
        %v752 = vld [vmem:[%s9] sm:$0xff]
        %v753 = vld [vmem:[%s9 + $0x8] sm:$0xff]
        %v754 = vld [vmem:[%s9 + $0x10] sm:$0xff]
        %v755 = vld [vmem:[%s9 + $0x18] sm:$0xff]
        %v756 = vld [vmem:[%s9 + $0x20] sm:$0xff]
        %v757 = vld [vmem:[%s9 + $0x28] sm:$0xff]
        %v758 = vld [vmem:[%s9 + $0x30] sm:$0xff]
        %v759 = vld [vmem:[%s9 + $0x38] sm:$0xff]
        %v760 = vld [vmem:[%s10] sm:$0xff]
        %v761 = vld [vmem:[%s10 + $0x8] sm:$0xff]
        %v762 = vld [vmem:[%s10 + $0x10] sm:$0xff]
        %v763 = vld [vmem:[%s10 + $0x18] sm:$0xff]
        %v764 = vld [vmem:[%s10 + $0x20] sm:$0xff]
        %v765 = vld [vmem:[%s10 + $0x28] sm:$0xff]
        %v766 = vld [vmem:[%s10 + $0x30] sm:$0xff]
        %v767 = vld [vmem:[%s10 + $0x38] sm:$0xff]
        %v769 = vsel %vm686, %v752, 0
        %v772 = vsel %vm686, %v753, 0
        %v775 = vsel %vm686, %v754, 0
        %v778 = vsel %vm686, %v755, 0
        %v781 = vsel %vm686, %v756, 0
        %v784 = vsel %vm686, %v757, 0
        %v787 = vsel %vm686, %v758, 0
        %v790 = vsel %vm686, %v759, 0
        %792 = vmatpush.msra.mxu0 0.0
        %793 = vmatpush.msra.mxu0 0.0
        %794 = vmatpush.msra.mxu0 0.0
        %795 = vmatpush.msra.mxu0 0.0
        %796 = vmatpush.msra.mxu0 0.0
        %797 = vmatpush.msra.mxu0 0.0
        %798 = vmatpush.msra.mxu0 0.0
        %799 = vmatpush.msra.mxu0 0.0
        %800 = vmatpush.msra.mxu0 %v664
        %801 = vmatpush.msra.mxu0 %v663
        %802 = vmatpush.msra.mxu0 %v662
        %803 = vmatpush.msra.mxu0 %v661
        %804 = vmatpush.msra.mxu0 %v660
        %805 = vmatpush.msra.mxu0 %v659
        %806 = vmatpush.msra.mxu0 %v658
        %807 = vmatpush.msra.mxu0 %v657
        %808 = vmatmul.f32.gmra.mxu0 %v769
        %v809 = vpop.f32.mrf.mxu0
        %v810 = vadd.f32 %v760, %v809
        %811 = vmatmul.f32.gmra.mxu0 %v772
        %v812 = vpop.f32.mrf.mxu0
        %v813 = vadd.f32 %v761, %v812
        %814 = vmatmul.f32.gmra.mxu0 %v775
        %v815 = vpop.f32.mrf.mxu0
        %v816 = vadd.f32 %v762, %v815
        %817 = vmatmul.f32.gmra.mxu0 %v778
        %v818 = vpop.f32.mrf.mxu0
        %v819 = vadd.f32 %v763, %v818
        %820 = vmatmul.f32.gmra.mxu0 %v781
        %v821 = vpop.f32.mrf.mxu0
        %v822 = vadd.f32 %v764, %v821
        %823 = vmatmul.f32.gmra.mxu0 %v784
        %v824 = vpop.f32.mrf.mxu0
        %v825 = vadd.f32 %v765, %v824
        %826 = vmatmul.f32.gmra.mxu0 %v787
        %v827 = vpop.f32.mrf.mxu0
        %v828 = vadd.f32 %v766, %v827
        %829 = vmatmul.f32.gmra.mxu0 %v790
        %v830 = vpop.f32.mrf.mxu0
        %v831 = vadd.f32 %v767, %v830
        %832 = vdwg.mxu0
        %v833 = vld [vmem:[%s5] sm:$0xff]
        %v834 = vld [vmem:[%s5 + $0x8] sm:$0xf]
        %v835 = vld [vmem:[%s5 + $0xc] sm:$0xff]
        %v836 = vld [vmem:[%s5 + $0x14] sm:$0xf]
        %v837 = vld [vmem:[%s5 + $0x18] sm:$0xff]
        %v838 = vld [vmem:[%s5 + $0x20] sm:$0xf]
        %v839 = vld [vmem:[%s5 + $0x24] sm:$0xff]
        %v840 = vld [vmem:[%s5 + $0x2c] sm:$0xf]
        %841 = vrot.lane.b32.xlu0 %v649, 17
        %v842 = vpop.permute.xlu0 %841
        %843 = vrot.lane.b32.xlu0 %v651, 17
        %v844 = vpop.permute.xlu0 %843
        %845 = vrot.lane.b32.xlu0 %v653, 17
        %v846 = vpop.permute.xlu0 %845
        %847 = vrot.lane.b32.xlu0 %v655, 17
        %v848 = vpop.permute.xlu0 %847
        %849 = vrot.lane.b32.xlu0 %v650, 17
        %v850 = vpop.permute.xlu0 %849
        %851 = vrot.lane.b32.xlu0 %v652, 17
        %v852 = vpop.permute.xlu0 %851
        %853 = vrot.lane.b32.xlu0 %v654, 17
        %v854 = vpop.permute.xlu0 %853
        %855 = vrot.lane.b32.xlu0 %v656, 17
        %v856 = vpop.permute.xlu0 %855
        %v857 = vlaneseq
        %v858 = vand.u32 %v857, 127
        %vm859 = vcmp.lt.s32.totalorder %v858, 17
        %v860 = vsel %vm859, %v842, %v850
        %v861 = vsel %vm859, %v844, %v852
        %v862 = vsel %vm859, %v846, %v854
        %v863 = vsel %vm859, %v848, %v856
        %v864 = vsel %vm859, %v850, %v842
        %v865 = vsel %vm859, %v852, %v844
        %v866 = vsel %vm859, %v854, %v846
        %v867 = vsel %vm859, %v856, %v848
        %v868 = vld [vmem:[%s2] ss:$8 sm:$0x3]
        %v870 = vperm.slane %v868, 0
        %v871 = vperm.slane %v868, 1
        %v874 = vmul.f32 %v864, %v870
        %v875 = vmul.f32 %v860, %v871
        %v876 = vmul.f32 %v865, %v870
        %v877 = vmul.f32 %v861, %v871
        %v878 = vmul.f32 %v866, %v870
        %v879 = vmul.f32 %v862, %v871
        %v880 = vmul.f32 %v867, %v870
        %v881 = vmul.f32 %v863, %v871
        %v882 = vpack.c.bf16 %v875, %v874
        %v883 = vpack.c.bf16 %v877, %v876
        %v884 = vpack.c.bf16 %v879, %v878
        %v885 = vpack.c.bf16 %v881, %v880
        %886 = vrot.lane.b32.xlu0 %v649, 16
        %v887 = vpop.permute.xlu0 %886
        %888 = vrot.lane.b32.xlu0 %v651, 16
        %v889 = vpop.permute.xlu0 %888
        %890 = vrot.lane.b32.xlu0 %v653, 16
        %v891 = vpop.permute.xlu0 %890
        %892 = vrot.lane.b32.xlu0 %v655, 16
        %v893 = vpop.permute.xlu0 %892
        %894 = vrot.lane.b32.xlu0 %v650, 16
        %v895 = vpop.permute.xlu0 %894
        %896 = vrot.lane.b32.xlu0 %v652, 16
        %v897 = vpop.permute.xlu0 %896
        %898 = vrot.lane.b32.xlu0 %v654, 16
        %v899 = vpop.permute.xlu0 %898
        %900 = vrot.lane.b32.xlu0 %v656, 16
        %v901 = vpop.permute.xlu0 %900
        %vm902 = vcmp.lt.s32.totalorder %v858, 16
        %v903 = vsel %vm902, %v887, %v895
        %v904 = vsel %vm902, %v889, %v897
        %v905 = vsel %vm902, %v891, %v899
        %v906 = vsel %vm902, %v893, %v901
        %v907 = vsel %vm902, %v895, %v887
        %v908 = vsel %vm902, %v897, %v889
        %v909 = vsel %vm902, %v899, %v891
        %v910 = vsel %vm902, %v901, %v893
        %s911 = scalar_lea.vmem %s2, 1
        %v912 = vld [vmem:[%s911] ss:$8 sm:$0x3]
        %v914 = vperm.slane %v912, 0
        %v915 = vperm.slane %v912, 1
        %v918 = vmul.f32 %v907, %v914
        %v919 = vmul.f32 %v903, %v915
        %v920 = vmul.f32 %v908, %v914
        %v921 = vmul.f32 %v904, %v915
        %v922 = vmul.f32 %v909, %v914
        %v923 = vmul.f32 %v905, %v915
        %v924 = vmul.f32 %v910, %v914
        %v925 = vmul.f32 %v906, %v915
        %v926 = vpack.c.bf16 %v919, %v918
        %v927 = vpack.c.bf16 %v921, %v920
        %v928 = vpack.c.bf16 %v923, %v922
        %v929 = vpack.c.bf16 %v925, %v924
        %930 = vrot.lane.b32.xlu0 %v649, 15
        %v931 = vpop.permute.xlu0 %930
        %932 = vrot.lane.b32.xlu0 %v651, 15
        %v933 = vpop.permute.xlu0 %932
        %934 = vrot.lane.b32.xlu0 %v653, 15
        %v935 = vpop.permute.xlu0 %934
        %936 = vrot.lane.b32.xlu0 %v655, 15
        %v937 = vpop.permute.xlu0 %936
        %938 = vrot.lane.b32.xlu0 %v650, 15
        %v939 = vpop.permute.xlu0 %938
        %940 = vrot.lane.b32.xlu0 %v652, 15
        %v941 = vpop.permute.xlu0 %940
        %942 = vrot.lane.b32.xlu0 %v654, 15
        %v943 = vpop.permute.xlu0 %942
        %944 = vrot.lane.b32.xlu0 %v656, 15
        %v945 = vpop.permute.xlu0 %944
        %vm946 = vcmp.lt.s32.totalorder %v858, 15
        %v947 = vsel %vm946, %v931, %v939
        %v948 = vsel %vm946, %v933, %v941
        %v949 = vsel %vm946, %v935, %v943
        %v950 = vsel %vm946, %v937, %v945
        %v951 = vsel %vm946, %v939, %v931
        %v952 = vsel %vm946, %v941, %v933
        %v953 = vsel %vm946, %v943, %v935
        %v954 = vsel %vm946, %v945, %v937
        %s955 = scalar_lea.vmem %s2, 2
        %v956 = vld [vmem:[%s955] ss:$8 sm:$0x3]
        %v958 = vperm.slane %v956, 0
        %v959 = vperm.slane %v956, 1
        %v962 = vmul.f32 %v951, %v958
        %v963 = vmul.f32 %v947, %v959
        %v964 = vmul.f32 %v952, %v958
        %v965 = vmul.f32 %v948, %v959
        %v966 = vmul.f32 %v953, %v958
        %v967 = vmul.f32 %v949, %v959
        %v968 = vmul.f32 %v954, %v958
        %v969 = vmul.f32 %v950, %v959
        %v970 = vpack.c.bf16 %v963, %v962
        %v971 = vpack.c.bf16 %v965, %v964
        %v972 = vpack.c.bf16 %v967, %v966
        %v973 = vpack.c.bf16 %v969, %v968
        %974 = vrot.lane.b32.xlu0 %v649, 1
        %v975 = vpop.permute.xlu0 %974
        %976 = vrot.lane.b32.xlu0 %v651, 1
        %v977 = vpop.permute.xlu0 %976
        %978 = vrot.lane.b32.xlu0 %v653, 1
        %v979 = vpop.permute.xlu0 %978
        %980 = vrot.lane.b32.xlu0 %v655, 1
        %v981 = vpop.permute.xlu0 %980
        %982 = vrot.lane.b32.xlu0 %v650, 1
        %v983 = vpop.permute.xlu0 %982
        %984 = vrot.lane.b32.xlu0 %v652, 1
        %v985 = vpop.permute.xlu0 %984
        %986 = vrot.lane.b32.xlu0 %v654, 1
        %v987 = vpop.permute.xlu0 %986
        %988 = vrot.lane.b32.xlu0 %v656, 1
        %v989 = vpop.permute.xlu0 %988
        %vm990 = vcmp.lt.s32.totalorder %v858, 1
        %v991 = vsel %vm990, %v975, %v983
        %v992 = vsel %vm990, %v977, %v985
        %v993 = vsel %vm990, %v979, %v987
        %v994 = vsel %vm990, %v981, %v989
        %v995 = vsel %vm990, %v983, %v975
        %v996 = vsel %vm990, %v985, %v977
        %v997 = vsel %vm990, %v987, %v979
        %v998 = vsel %vm990, %v989, %v981
        %s999 = scalar_lea.vmem %s2, 3
        %v1000 = vld [vmem:[%s999] ss:$8 sm:$0x3]
        %v1002 = vperm.slane %v1000, 0
        %v1003 = vperm.slane %v1000, 1
        %v1006 = vmul.f32 %v995, %v1002
        %v1007 = vmul.f32 %v991, %v1003
        %v1008 = vmul.f32 %v996, %v1002
        %v1009 = vmul.f32 %v992, %v1003
        %v1010 = vmul.f32 %v997, %v1002
        %v1011 = vmul.f32 %v993, %v1003
        %v1012 = vmul.f32 %v998, %v1002
        %v1013 = vmul.f32 %v994, %v1003
        %v1014 = vpack.c.bf16 %v1007, %v1006
        %v1015 = vpack.c.bf16 %v1009, %v1008
        %v1016 = vpack.c.bf16 %v1011, %v1010
        %v1017 = vpack.c.bf16 %v1013, %v1012
        %v1018 = vpack.c.bf16 %v650, %v649
        %v1019 = vpack.c.bf16 %v652, %v651
        %v1020 = vpack.c.bf16 %v654, %v653
        %v1021 = vpack.c.bf16 %v656, %v655
        %1022 = vrot.lane.b32.xlu0 %v649, 127
        %v1023 = vpop.permute.xlu0 %1022
        %1024 = vrot.lane.b32.xlu0 %v651, 127
        %v1025 = vpop.permute.xlu0 %1024
        %1026 = vrot.lane.b32.xlu0 %v653, 127
        %v1027 = vpop.permute.xlu0 %1026
        %1028 = vrot.lane.b32.xlu0 %v655, 127
        %v1029 = vpop.permute.xlu0 %1028
        %1030 = vrot.lane.b32.xlu0 %v650, 127
        %v1031 = vpop.permute.xlu0 %1030
        %1032 = vrot.lane.b32.xlu0 %v652, 127
        %v1033 = vpop.permute.xlu0 %1032
        %1034 = vrot.lane.b32.xlu0 %v654, 127
        %v1035 = vpop.permute.xlu0 %1034
        %1036 = vrot.lane.b32.xlu0 %v656, 127
        %v1037 = vpop.permute.xlu0 %1036
        %vm1038 = vcmp.lt.s32.totalorder %v858, 127
        %v1039 = vsel %vm1038, %v1023, %v1031
        %v1040 = vsel %vm1038, %v1025, %v1033
        %v1041 = vsel %vm1038, %v1027, %v1035
        %v1042 = vsel %vm1038, %v1029, %v1037
        %v1043 = vsel %vm1038, %v1031, %v1023
        %v1044 = vsel %vm1038, %v1033, %v1025
        %v1045 = vsel %vm1038, %v1035, %v1027
        %v1046 = vsel %vm1038, %v1037, %v1029
        %s1047 = scalar_lea.vmem %s2, 5
        %v1048 = vld [vmem:[%s1047] ss:$8 sm:$0x3]
        %v1050 = vperm.slane %v1048, 0
        %v1051 = vperm.slane %v1048, 1
        %v1054 = vmul.f32 %v1039, %v1050
        %v1055 = vmul.f32 %v1043, %v1051
        %v1056 = vmul.f32 %v1040, %v1050
        %v1057 = vmul.f32 %v1044, %v1051
        %v1058 = vmul.f32 %v1041, %v1050
        %v1059 = vmul.f32 %v1045, %v1051
        %v1060 = vmul.f32 %v1042, %v1050
        %v1061 = vmul.f32 %v1046, %v1051
        %v1062 = vpack.c.bf16 %v1055, %v1054
        %v1063 = vpack.c.bf16 %v1057, %v1056
        %v1064 = vpack.c.bf16 %v1059, %v1058
        %v1065 = vpack.c.bf16 %v1061, %v1060
        %1066 = vrot.lane.b32.xlu0 %v649, 113
        %v1067 = vpop.permute.xlu0 %1066
        %1068 = vrot.lane.b32.xlu0 %v651, 113
        %v1069 = vpop.permute.xlu0 %1068
        %1070 = vrot.lane.b32.xlu0 %v653, 113
        %v1071 = vpop.permute.xlu0 %1070
        %1072 = vrot.lane.b32.xlu0 %v655, 113
        %v1073 = vpop.permute.xlu0 %1072
        %1074 = vrot.lane.b32.xlu0 %v650, 113
        %v1075 = vpop.permute.xlu0 %1074
        %1076 = vrot.lane.b32.xlu0 %v652, 113
        %v1077 = vpop.permute.xlu0 %1076
        %1078 = vrot.lane.b32.xlu0 %v654, 113
        %v1079 = vpop.permute.xlu0 %1078
        %1080 = vrot.lane.b32.xlu0 %v656, 113
        %v1081 = vpop.permute.xlu0 %1080
        %vm1082 = vcmp.lt.s32.totalorder %v858, 113
        %v1083 = vsel %vm1082, %v1067, %v1075
        %v1084 = vsel %vm1082, %v1069, %v1077
        %v1085 = vsel %vm1082, %v1071, %v1079
        %v1086 = vsel %vm1082, %v1073, %v1081
        %v1087 = vsel %vm1082, %v1075, %v1067
        %v1088 = vsel %vm1082, %v1077, %v1069
        %v1089 = vsel %vm1082, %v1079, %v1071
        %v1090 = vsel %vm1082, %v1081, %v1073
        %s1091 = scalar_lea.vmem %s2, 6
        %v1092 = vld [vmem:[%s1091] ss:$8 sm:$0x3]
        %v1094 = vperm.slane %v1092, 0
        %v1095 = vperm.slane %v1092, 1
        %v1098 = vmul.f32 %v1083, %v1094
        %v1099 = vmul.f32 %v1087, %v1095
        %v1100 = vmul.f32 %v1084, %v1094
        %v1101 = vmul.f32 %v1088, %v1095
        %v1102 = vmul.f32 %v1085, %v1094
        %v1103 = vmul.f32 %v1089, %v1095
        %v1104 = vmul.f32 %v1086, %v1094
        %v1105 = vmul.f32 %v1090, %v1095
        %v1106 = vpack.c.bf16 %v1099, %v1098
        %v1107 = vpack.c.bf16 %v1101, %v1100
        %v1108 = vpack.c.bf16 %v1103, %v1102
        %v1109 = vpack.c.bf16 %v1105, %v1104
        %1110 = vrot.lane.b32.xlu0 %v649, 112
        %v1111 = vpop.permute.xlu0 %1110
        %1112 = vrot.lane.b32.xlu0 %v651, 112
        %v1113 = vpop.permute.xlu0 %1112
        %1114 = vrot.lane.b32.xlu0 %v653, 112
        %v1115 = vpop.permute.xlu0 %1114
        %1116 = vrot.lane.b32.xlu0 %v655, 112
        %v1117 = vpop.permute.xlu0 %1116
        %1118 = vrot.lane.b32.xlu0 %v650, 112
        %v1119 = vpop.permute.xlu0 %1118
        %1120 = vrot.lane.b32.xlu0 %v652, 112
        %v1121 = vpop.permute.xlu0 %1120
        %1122 = vrot.lane.b32.xlu0 %v654, 112
        %v1123 = vpop.permute.xlu0 %1122
        %1124 = vrot.lane.b32.xlu0 %v656, 112
        %v1125 = vpop.permute.xlu0 %1124
        %vm1126 = vcmp.lt.s32.totalorder %v858, 112
        %v1127 = vsel %vm1126, %v1111, %v1119
        %v1128 = vsel %vm1126, %v1113, %v1121
        %v1129 = vsel %vm1126, %v1115, %v1123
        %v1130 = vsel %vm1126, %v1117, %v1125
        %v1131 = vsel %vm1126, %v1119, %v1111
        %v1132 = vsel %vm1126, %v1121, %v1113
        %v1133 = vsel %vm1126, %v1123, %v1115
        %v1134 = vsel %vm1126, %v1125, %v1117
        %s1135 = scalar_lea.vmem %s2, 7
        %v1136 = vld [vmem:[%s1135] ss:$8 sm:$0x3]
        %v1138 = vperm.slane %v1136, 0
        %v1139 = vperm.slane %v1136, 1
        %v1142 = vmul.f32 %v1127, %v1138
        %v1143 = vmul.f32 %v1131, %v1139
        %v1144 = vmul.f32 %v1128, %v1138
        %v1145 = vmul.f32 %v1132, %v1139
        %v1146 = vmul.f32 %v1129, %v1138
        %v1147 = vmul.f32 %v1133, %v1139
        %v1148 = vmul.f32 %v1130, %v1138
        %v1149 = vmul.f32 %v1134, %v1139
        %v1150 = vpack.c.bf16 %v1143, %v1142
        %v1151 = vpack.c.bf16 %v1145, %v1144
        %v1152 = vpack.c.bf16 %v1147, %v1146
        %v1153 = vpack.c.bf16 %v1149, %v1148
        %1154 = vrot.lane.b32.xlu0 %v649, 111
        %v1155 = vpop.permute.xlu0 %1154
        %1156 = vrot.lane.b32.xlu0 %v651, 111
        %v1157 = vpop.permute.xlu0 %1156
        %1158 = vrot.lane.b32.xlu0 %v653, 111
        %v1159 = vpop.permute.xlu0 %1158
        %1160 = vrot.lane.b32.xlu0 %v655, 111
        %v1161 = vpop.permute.xlu0 %1160
        %1162 = vrot.lane.b32.xlu0 %v650, 111
        %v1163 = vpop.permute.xlu0 %1162
        %1164 = vrot.lane.b32.xlu0 %v652, 111
        %v1165 = vpop.permute.xlu0 %1164
        %1166 = vrot.lane.b32.xlu0 %v654, 111
        %v1167 = vpop.permute.xlu0 %1166
        %1168 = vrot.lane.b32.xlu0 %v656, 111
        %v1169 = vpop.permute.xlu0 %1168
        %vm1170 = vcmp.lt.s32.totalorder %v858, 111
        %v1171 = vsel %vm1170, %v1155, %v1163
        %v1172 = vsel %vm1170, %v1157, %v1165
        %v1173 = vsel %vm1170, %v1159, %v1167
        %v1174 = vsel %vm1170, %v1161, %v1169
        %v1175 = vsel %vm1170, %v1163, %v1155
        %v1176 = vsel %vm1170, %v1165, %v1157
        %v1177 = vsel %vm1170, %v1167, %v1159
        %v1178 = vsel %vm1170, %v1169, %v1161
        %s1179 = scalar_lea.vmem %s2, 16
        %v1180 = vld [vmem:[%s1179] ss:$8 sm:$0x3]
        %v1182 = vperm.slane %v1180, 0
        %v1183 = vperm.slane %v1180, 1
        %v1186 = vmul.f32 %v1171, %v1182
        %v1187 = vmul.f32 %v1175, %v1183
        %v1188 = vmul.f32 %v1172, %v1182
        %v1189 = vmul.f32 %v1176, %v1183
        %v1190 = vmul.f32 %v1173, %v1182
        %v1191 = vmul.f32 %v1177, %v1183
        %v1192 = vmul.f32 %v1174, %v1182
        %v1193 = vmul.f32 %v1178, %v1183
        %v1194 = vpack.c.bf16 %v1187, %v1186
        %v1195 = vpack.c.bf16 %v1189, %v1188
        %v1196 = vpack.c.bf16 %v1191, %v1190
        %v1197 = vpack.c.bf16 %v1193, %v1192
        %v1202 = vunpack.c.l.b16 %v882
        %v1203 = vunpack.c.h.b16 %v882
        %v1204 = vunpack.c.l.b16 %v883
        %v1205 = vunpack.c.h.b16 %v883
        %v1206 = vunpack.c.l.b16 %v884
        %v1207 = vunpack.c.h.b16 %v884
        %v1208 = vunpack.c.l.b16 %v885
        %v1209 = vunpack.c.h.b16 %v885
        %v1210 = vpack.c.b16 %v1204, %v1202
        %v1211 = vpack.c.b16 %v1205, %v1203
        %v1212 = vpack.c.b16 %v1208, %v1206
        %v1213 = vpack.c.b16 %v1209, %v1207
        %v1222 = vunpack.c.l.b16 %v926
        %v1223 = vunpack.c.h.b16 %v926
        %v1224 = vunpack.c.l.b16 %v927
        %v1225 = vunpack.c.h.b16 %v927
        %v1226 = vunpack.c.l.b16 %v928
        %v1227 = vunpack.c.h.b16 %v928
        %v1228 = vunpack.c.l.b16 %v929
        %v1229 = vunpack.c.h.b16 %v929
        %v1230 = vpack.c.b16 %v1224, %v1222
        %v1231 = vpack.c.b16 %v1225, %v1223
        %v1232 = vpack.c.b16 %v1228, %v1226
        %v1233 = vpack.c.b16 %v1229, %v1227
        %v1242 = vunpack.c.l.b16 %v970
        %v1243 = vunpack.c.h.b16 %v970
        %v1244 = vunpack.c.l.b16 %v971
        %v1245 = vunpack.c.h.b16 %v971
        %v1246 = vunpack.c.l.b16 %v972
        %v1247 = vunpack.c.h.b16 %v972
        %v1248 = vunpack.c.l.b16 %v973
        %v1249 = vunpack.c.h.b16 %v973
        %v1250 = vpack.c.b16 %v1244, %v1242
        %v1251 = vpack.c.b16 %v1245, %v1243
        %v1252 = vpack.c.b16 %v1248, %v1246
        %v1253 = vpack.c.b16 %v1249, %v1247
        %v1262 = vunpack.c.l.b16 %v1014
        %v1263 = vunpack.c.h.b16 %v1014
        %v1264 = vunpack.c.l.b16 %v1015
        %v1265 = vunpack.c.h.b16 %v1015
        %v1266 = vunpack.c.l.b16 %v1016
        %v1267 = vunpack.c.h.b16 %v1016
        %v1268 = vunpack.c.l.b16 %v1017
        %v1269 = vunpack.c.h.b16 %v1017
        %v1270 = vpack.c.b16 %v1264, %v1262
        %v1271 = vpack.c.b16 %v1265, %v1263
        %v1272 = vpack.c.b16 %v1268, %v1266
        %v1273 = vpack.c.b16 %v1269, %v1267
        %v1282 = vunpack.c.l.b16 %v1018
        %v1283 = vunpack.c.h.b16 %v1018
        %v1284 = vunpack.c.l.b16 %v1019
        %v1285 = vunpack.c.h.b16 %v1019
        %v1286 = vunpack.c.l.b16 %v1020
        %v1287 = vunpack.c.h.b16 %v1020
        %v1288 = vunpack.c.l.b16 %v1021
        %v1289 = vunpack.c.h.b16 %v1021
        %v1290 = vpack.c.b16 %v1284, %v1282
        %v1291 = vpack.c.b16 %v1285, %v1283
        %v1292 = vpack.c.b16 %v1288, %v1286
        %v1293 = vpack.c.b16 %v1289, %v1287
        %v1302 = vunpack.c.l.b16 %v1062
        %v1303 = vunpack.c.h.b16 %v1062
        %v1304 = vunpack.c.l.b16 %v1063
        %v1305 = vunpack.c.h.b16 %v1063
        %v1306 = vunpack.c.l.b16 %v1064
        %v1307 = vunpack.c.h.b16 %v1064
        %v1308 = vunpack.c.l.b16 %v1065
        %v1309 = vunpack.c.h.b16 %v1065
        %v1310 = vpack.c.b16 %v1304, %v1302
        %v1311 = vpack.c.b16 %v1305, %v1303
        %v1312 = vpack.c.b16 %v1308, %v1306
        %v1313 = vpack.c.b16 %v1309, %v1307
        %v1322 = vunpack.c.l.b16 %v1106
        %v1323 = vunpack.c.h.b16 %v1106
        %v1324 = vunpack.c.l.b16 %v1107
        %v1325 = vunpack.c.h.b16 %v1107
        %v1326 = vunpack.c.l.b16 %v1108
        %v1327 = vunpack.c.h.b16 %v1108
        %v1328 = vunpack.c.l.b16 %v1109
        %v1329 = vunpack.c.h.b16 %v1109
        %v1330 = vpack.c.b16 %v1324, %v1322
        %v1331 = vpack.c.b16 %v1325, %v1323
        %v1332 = vpack.c.b16 %v1328, %v1326
        %v1333 = vpack.c.b16 %v1329, %v1327
        %v1342 = vunpack.c.l.b16 %v1150
        %v1343 = vunpack.c.h.b16 %v1150
        %v1344 = vunpack.c.l.b16 %v1151
        %v1345 = vunpack.c.h.b16 %v1151
        %v1346 = vunpack.c.l.b16 %v1152
        %v1347 = vunpack.c.h.b16 %v1152
        %v1348 = vunpack.c.l.b16 %v1153
        %v1349 = vunpack.c.h.b16 %v1153
        %v1350 = vpack.c.b16 %v1344, %v1342
        %v1351 = vpack.c.b16 %v1345, %v1343
        %v1352 = vpack.c.b16 %v1348, %v1346
        %v1353 = vpack.c.b16 %v1349, %v1347
        %v1362 = vunpack.c.l.b16 %v1194
        %v1363 = vunpack.c.h.b16 %v1194
        %v1364 = vunpack.c.l.b16 %v1195
        %v1365 = vunpack.c.h.b16 %v1195
        %v1366 = vunpack.c.l.b16 %v1196
        %v1367 = vunpack.c.h.b16 %v1196
        %v1368 = vunpack.c.l.b16 %v1197
        %v1369 = vunpack.c.h.b16 %v1197
        %v1370 = vpack.c.b16 %v1364, %v1362
        %v1371 = vpack.c.b16 %v1365, %v1363
        %v1372 = vpack.c.b16 %v1368, %v1366
        %v1373 = vpack.c.b16 %v1369, %v1367
        %v1378 = vld [vmem:[%s6] sm:$0xff]
        %v1379 = vld [vmem:[%s6 + $0x8] sm:$0xff]
        %v1380 = vld [vmem:[%s6 + $0x10] sm:$0xff]
        %v1381 = vld [vmem:[%s6 + $0x18] sm:$0xff]
        %1383 = vset.pattern.permute.xlu0 0
        %1384 = vperm.xlu0 %1383, %v1378
        %v1385 = vpop.permute.xlu0 %1384
        %1388 = vset.pattern.permute.xlu0 0
        %1389 = vperm.xlu0 %1388, %v1379
        %v1390 = vpop.permute.xlu0 %1389
        %1393 = vset.pattern.permute.xlu0 0
        %1394 = vperm.xlu0 %1393, %v1380
        %v1395 = vpop.permute.xlu0 %1394
        %1398 = vset.pattern.permute.xlu0 0
        %1399 = vperm.xlu0 %1398, %v1381
        %v1400 = vpop.permute.xlu0 %1399
        %v1410 = vunpack.c.l.b16 %v833
        %v1411 = vunpack.c.h.b16 %v833
        %v1412 = vunpack.c.l.b16 %v834
        %v1413 = vunpack.c.l.b16 %v835
        %v1414 = vunpack.c.h.b16 %v835
        %v1415 = vunpack.c.l.b16 %v836
        %v1416 = vunpack.c.l.b16 %v837
        %v1417 = vunpack.c.h.b16 %v837
        %v1418 = vunpack.c.l.b16 %v838
        %v1419 = vunpack.c.l.b16 %v839
        %v1420 = vunpack.c.h.b16 %v839
        %v1421 = vunpack.c.l.b16 %v840
        %v1422 = vpack.c.b16 %v1413, %v1410
        %v1423 = vpack.c.b16 %v1414, %v1411
        %v1424 = vpack.c.b16 %v1415, %v1412
        %v1425 = vpack.c.b16 %v1419, %v1416
        %v1426 = vpack.c.b16 %v1420, %v1417
        %v1427 = vpack.c.b16 %v1421, %v1418
        %vm1432 = vcmask 261120
        %v1434 = vsel %vm1432, %v1424, 0
        %v1437 = vsel %vm1432, %v1427, 0
        %1439 = vmatpush.bf16.msra.mxu0 %v1272
        %1440 = vmatpush.bf16.msra.mxu0 %v1270
        %1441 = vmatpush.bf16.msra.mxu0 %v1252
        %1442 = vmatpush.bf16.msra.mxu0 %v1250
        %1443 = vmatpush.bf16.msra.mxu0 %v1232
        %1444 = vmatpush.bf16.msra.mxu0 %v1230
        %1445 = vmatpush.bf16.msra.mxu0 %v1212
        %1446 = vmatpush.bf16.msra.mxu0 %v1210
        %1447 = vmatmul.bf16.gmra.mxu0 %v1422
        %v1448 = vpop.f32.mrf.mxu0
        %v1449 = vadd.f32 %v1385, %v1448
        %v1450 = vpop.f32.mrf.mxu0
        %v1451 = vadd.f32 %v1390, %v1450
        %1452 = vmatmul.bf16.gmra.mxu0 %v1425
        %v1453 = vpop.f32.mrf.mxu0
        %v1454 = vadd.f32 %v1395, %v1453
        %v1455 = vpop.f32.mrf.mxu0
        %v1456 = vadd.f32 %v1400, %v1455
        %1457 = vdwg.mxu0
        %1458 = vmatpush.bf16.msra.mxu0 %v1352
        %1459 = vmatpush.bf16.msra.mxu0 %v1350
        %1460 = vmatpush.bf16.msra.mxu0 %v1332
        %1461 = vmatpush.bf16.msra.mxu0 %v1330
        %1462 = vmatpush.bf16.msra.mxu0 %v1312
        %1463 = vmatpush.bf16.msra.mxu0 %v1310
        %1464 = vmatpush.bf16.msra.mxu0 %v1292
        %1465 = vmatpush.bf16.msra.mxu0 %v1290
        %1466 = vmatmul.bf16.gmra.mxu0 %v1423
        %v1467 = vpop.f32.mrf.mxu0
        %v1468 = vadd.f32 %v1449, %v1467
        %v1469 = vpop.f32.mrf.mxu0
        %v1470 = vadd.f32 %v1451, %v1469
        %1471 = vmatmul.bf16.gmra.mxu0 %v1426
        %v1472 = vpop.f32.mrf.mxu0
        %v1473 = vadd.f32 %v1454, %v1472
        %v1474 = vpop.f32.mrf.mxu0
        %v1475 = vadd.f32 %v1456, %v1474
        %1476 = vdwg.mxu0
        %1477 = vmatpush.bf16.msra.mxu0 0
        %1478 = vmatpush.bf16.msra.mxu0 0
        %1479 = vmatpush.bf16.msra.mxu0 0
        %1480 = vmatpush.bf16.msra.mxu0 0
        %1481 = vmatpush.bf16.msra.mxu0 0
        %1482 = vmatpush.bf16.msra.mxu0 0
        %1483 = vmatpush.bf16.msra.mxu0 %v1372
        %1484 = vmatpush.bf16.msra.mxu0 %v1370
        %1485 = vmatmul.bf16.gmra.mxu0 %v1434
        %v1486 = vpop.f32.mrf.mxu0
        %v1487 = vadd.f32 %v1468, %v1486
        %v1488 = vpop.f32.mrf.mxu0
        %v1489 = vadd.f32 %v1470, %v1488
        %1490 = vmatmul.bf16.gmra.mxu0 %v1437
        %v1491 = vpop.f32.mrf.mxu0
        %v1492 = vadd.f32 %v1473, %v1491
        %v1493 = vpop.f32.mrf.mxu0
        %v1494 = vadd.f32 %v1475, %v1493
        %1495 = vdwg.mxu0
        %1496 = vmatpush.bf16.msra.mxu0 %v1273
        %1497 = vmatpush.bf16.msra.mxu0 %v1271
        %1498 = vmatpush.bf16.msra.mxu0 %v1253
        %1499 = vmatpush.bf16.msra.mxu0 %v1251
        %1500 = vmatpush.bf16.msra.mxu0 %v1233
        %1501 = vmatpush.bf16.msra.mxu0 %v1231
        %1502 = vmatpush.bf16.msra.mxu0 %v1213
        %1503 = vmatpush.bf16.msra.mxu0 %v1211
        %1504 = vmatmul.bf16.gmra.mxu0 %v1422
        %v1505 = vpop.f32.mrf.mxu0
        %v1506 = vadd.f32 %v1385, %v1505
        %v1507 = vpop.f32.mrf.mxu0
        %v1508 = vadd.f32 %v1390, %v1507
        %1509 = vmatmul.bf16.gmra.mxu0 %v1425
        %v1510 = vpop.f32.mrf.mxu0
        %v1511 = vadd.f32 %v1395, %v1510
        %v1512 = vpop.f32.mrf.mxu0
        %v1513 = vadd.f32 %v1400, %v1512
        %1514 = vdwg.mxu0
        %1515 = vmatpush.bf16.msra.mxu0 %v1353
        %1516 = vmatpush.bf16.msra.mxu0 %v1351
        %1517 = vmatpush.bf16.msra.mxu0 %v1333
        %1518 = vmatpush.bf16.msra.mxu0 %v1331
        %1519 = vmatpush.bf16.msra.mxu0 %v1313
        %1520 = vmatpush.bf16.msra.mxu0 %v1311
        %1521 = vmatpush.bf16.msra.mxu0 %v1293
        %1522 = vmatpush.bf16.msra.mxu0 %v1291
        %1523 = vmatmul.bf16.gmra.mxu0 %v1423
        %v1524 = vpop.f32.mrf.mxu0
        %v1525 = vadd.f32 %v1506, %v1524
        %v1526 = vpop.f32.mrf.mxu0
        %v1527 = vadd.f32 %v1508, %v1526
        %1528 = vmatmul.bf16.gmra.mxu0 %v1426
        %v1529 = vpop.f32.mrf.mxu0
        %v1530 = vadd.f32 %v1511, %v1529
        %v1531 = vpop.f32.mrf.mxu0
        %v1532 = vadd.f32 %v1513, %v1531
        %1533 = vdwg.mxu0
        %1534 = vmatpush.bf16.msra.mxu0 0
        %1535 = vmatpush.bf16.msra.mxu0 0
        %1536 = vmatpush.bf16.msra.mxu0 0
        %1537 = vmatpush.bf16.msra.mxu0 0
        %1538 = vmatpush.bf16.msra.mxu0 0
        %1539 = vmatpush.bf16.msra.mxu0 0
        %1540 = vmatpush.bf16.msra.mxu0 %v1373
        %1541 = vmatpush.bf16.msra.mxu0 %v1371
        %1542 = vmatmul.bf16.gmra.mxu0 %v1434
        %v1543 = vpop.f32.mrf.mxu0
        %v1544 = vadd.f32 %v1525, %v1543
        %v1545 = vpop.f32.mrf.mxu0
        %v1546 = vadd.f32 %v1527, %v1545
        %1547 = vmatmul.bf16.gmra.mxu0 %v1437
        %v1548 = vpop.f32.mrf.mxu0
        %v1549 = vadd.f32 %v1530, %v1548
        %v1550 = vpop.f32.mrf.mxu0
        %v1551 = vadd.f32 %v1532, %v1550
        %1552 = vdwg.mxu0
        %v1553 = vld [vmem:[%s7] sm:$0xff]
        %v1554 = vld [vmem:[%s7 + $0x8] sm:$0xff]
        %v1555 = vld [vmem:[%s7 + $0x10] sm:$0xff]
        %v1556 = vld [vmem:[%s7 + $0x18] sm:$0xff]
        %v1557 = vld [vmem:[%s8] sm:$0xff]
        %v1558 = vld [vmem:[%s8 + $0x8] sm:$0xff]
        %v1559 = vld [vmem:[%s8 + $0x10] sm:$0xff]
        %v1560 = vld [vmem:[%s8 + $0x18] sm:$0xff]
        %v1561 = vadd.f32 %v1487, %v1544
        %1562 = vadd.xlane.f32.xlu0 %v1561
        %v1563 = vpop.xlane.xlu0 %1562
        %v1564 = vadd.f32 %v1489, %v1546
        %1565 = vadd.xlane.f32.xlu0 %v1564
        %v1566 = vpop.xlane.xlu0 %1565
        %v1567 = vadd.f32 %v1492, %v1549
        %1568 = vadd.xlane.f32.xlu0 %v1567
        %v1569 = vpop.xlane.xlu0 %1568
        %v1570 = vadd.f32 %v1494, %v1551
        %1571 = vadd.xlane.f32.xlu0 %v1570
        %v1572 = vpop.xlane.xlu0 %1571
        %v1573 = vmul.f32 %v1487, %v1487
        %v1574 = vmul.f32 %v1544, %v1544
        %v1575 = vmul.f32 %v1489, %v1489
        %v1576 = vmul.f32 %v1546, %v1546
        %v1577 = vmul.f32 %v1492, %v1492
        %v1578 = vmul.f32 %v1549, %v1549
        %v1579 = vmul.f32 %v1494, %v1494
        %v1580 = vmul.f32 %v1551, %v1551
        %v1581 = vadd.f32 %v1573, %v1574
        %1582 = vadd.xlane.f32.xlu0 %v1581
        %v1583 = vpop.xlane.xlu0 %1582
        %v1584 = vadd.f32 %v1575, %v1576
        %1585 = vadd.xlane.f32.xlu0 %v1584
        %v1586 = vpop.xlane.xlu0 %1585
        %v1587 = vadd.f32 %v1577, %v1578
        %1588 = vadd.xlane.f32.xlu0 %v1587
        %v1589 = vpop.xlane.xlu0 %1588
        %v1590 = vadd.f32 %v1579, %v1580
        %1591 = vadd.xlane.f32.xlu0 %v1590
        %v1592 = vpop.xlane.xlu0 %1591
        %v1594 = vsel %vm1432, %v665, 0
        %1596 = vmatpush.msra.mxu0 0.0
        %1597 = vmatpush.msra.mxu0 0.0
        %1598 = vmatpush.msra.mxu0 0.0
        %1599 = vmatpush.msra.mxu0 0.0
        %1600 = vmatpush.msra.mxu0 0.0
        %1601 = vmatpush.msra.mxu0 0.0
        %1602 = vmatpush.msra.mxu0 0.0
        %1603 = vmatpush.msra.mxu0 0.0
        %1604 = vmatpush.msra.mxu0 0.0
        %1605 = vmatpush.msra.mxu0 0.0
        %1606 = vmatpush.msra.mxu0 0.0
        %1607 = vmatpush.msra.mxu0 0.0
        %1608 = vmatpush.msra.mxu0 %v1572
        %1609 = vmatpush.msra.mxu0 %v1569
        %1610 = vmatpush.msra.mxu0 %v1566
        %1611 = vmatpush.msra.mxu0 %v1563
        %1612 = vmatmul.f32.gmra.mxu0 %v1594
        %v1613 = vpop.f32.mrf.mxu0
        %v1614 = vadd.f32 0.0, %v1613
        %1615 = vdwg.mxu0
        %v1616 = vmul.f32 %v1614, 0.0009765625
        %1617 = vmatpush.msra.mxu0 0.0
        %1618 = vmatpush.msra.mxu0 0.0
        %1619 = vmatpush.msra.mxu0 0.0
        %1620 = vmatpush.msra.mxu0 0.0
        %1621 = vmatpush.msra.mxu0 0.0
        %1622 = vmatpush.msra.mxu0 0.0
        %1623 = vmatpush.msra.mxu0 0.0
        %1624 = vmatpush.msra.mxu0 0.0
        %1625 = vmatpush.msra.mxu0 0.0
        %1626 = vmatpush.msra.mxu0 0.0
        %1627 = vmatpush.msra.mxu0 0.0
        %1628 = vmatpush.msra.mxu0 0.0
        %1629 = vmatpush.msra.mxu0 %v1592
        %1630 = vmatpush.msra.mxu0 %v1589
        %1631 = vmatpush.msra.mxu0 %v1586
        %1632 = vmatpush.msra.mxu0 %v1583
        %1633 = vmatmul.f32.gmra.mxu0 %v1594
        %v1634 = vpop.f32.mrf.mxu0
        %v1635 = vadd.f32 0.0, %v1634
        %1636 = vdwg.mxu0
        %v1637 = vmul.f32 %v1635, 0.0009765625
        %v1638 = vmul.f32 %v1616, %v1616
        %v1639 = vsub.f32 %v1637, %v1638
        %v1640 = vadd.f32 %v1639, 1e-05
        %v1641 = vrsqrt.pop %v1640
        %v1642 = vmul.f32 %v1641, %v1640
        %v1643 = vmul.f32 %v1642, %v1641
        %v1644 = vmul.f32 0.5, %v1643
        %v1645 = vsub.f32 1.5, %v1644
        %v1646 = vmul.f32 %v1641, %v1645
        %vm1647 = vweird.f32 %v1640
        %vm1648 = vweird.f32 %v1641
        %vm1649 = vmor %vm1647, %vm1648
        %v1650 = vsel %vm1649, %v1641, %v1646
        %vm1651 = vcmask 64512
        %v1653 = vsel %vm1651, %v666, 0
        %v1656 = vsel %vm1651, %v667, 0
        %v1659 = vsel %vm1651, %v668, 0
        %v1662 = vsel %vm1651, %v669, 0
        %1664 = vmatpush.msra.mxu0 0.0
        %1665 = vmatpush.msra.mxu0 0.0
        %1666 = vmatpush.msra.mxu0 0.0
        %1667 = vmatpush.msra.mxu0 0.0
        %1668 = vmatpush.msra.mxu0 0.0
        %1669 = vmatpush.msra.mxu0 0.0
        %1670 = vmatpush.msra.mxu0 0.0
        %1671 = vmatpush.msra.mxu0 0.0
        %1672 = vmatpush.msra.mxu0 0.0
        %1673 = vmatpush.msra.mxu0 0.0
        %1674 = vmatpush.msra.mxu0 0.0
        %1675 = vmatpush.msra.mxu0 0.0
        %1676 = vmatpush.msra.mxu0 0.0
        %1677 = vmatpush.msra.mxu0 0.0
        %1678 = vmatpush.msra.mxu0 0.0
        %1679 = vmatpush.msra.mxu0 %v1616
        %1680 = vmatmul.f32.gmra.mxu0 %v1653
        %v1681 = vpop.f32.mrf.mxu0
        %v1682 = vadd.f32 0.0, %v1681
        %1683 = vmatmul.f32.gmra.mxu0 %v1656
        %v1684 = vpop.f32.mrf.mxu0
        %v1685 = vadd.f32 0.0, %v1684
        %1686 = vmatmul.f32.gmra.mxu0 %v1659
        %v1687 = vpop.f32.mrf.mxu0
        %v1688 = vadd.f32 0.0, %v1687
        %1689 = vmatmul.f32.gmra.mxu0 %v1662
        %v1690 = vpop.f32.mrf.mxu0
        %v1691 = vadd.f32 0.0, %v1690
        %1692 = vdwg.mxu0
        %1693 = vmatpush.msra.mxu0 0.0
        %1694 = vmatpush.msra.mxu0 0.0
        %1695 = vmatpush.msra.mxu0 0.0
        %1696 = vmatpush.msra.mxu0 0.0
        %1697 = vmatpush.msra.mxu0 0.0
        %1698 = vmatpush.msra.mxu0 0.0
        %1699 = vmatpush.msra.mxu0 0.0
        %1700 = vmatpush.msra.mxu0 0.0
        %1701 = vmatpush.msra.mxu0 0.0
        %1702 = vmatpush.msra.mxu0 0.0
        %1703 = vmatpush.msra.mxu0 0.0
        %1704 = vmatpush.msra.mxu0 0.0
        %1705 = vmatpush.msra.mxu0 0.0
        %1706 = vmatpush.msra.mxu0 0.0
        %1707 = vmatpush.msra.mxu0 0.0
        %1708 = vmatpush.msra.mxu0 %v1650
        %1709 = vmatmul.f32.gmra.mxu0 %v1653
        %v1710 = vpop.f32.mrf.mxu0
        %v1711 = vadd.f32 0.0, %v1710
        %1712 = vmatmul.f32.gmra.mxu0 %v1656
        %v1713 = vpop.f32.mrf.mxu0
        %v1714 = vadd.f32 0.0, %v1713
        %1715 = vmatmul.f32.gmra.mxu0 %v1659
        %v1716 = vpop.f32.mrf.mxu0
        %v1717 = vadd.f32 0.0, %v1716
        %1718 = vmatmul.f32.gmra.mxu0 %v1662
        %v1719 = vpop.f32.mrf.mxu0
        %v1720 = vadd.f32 0.0, %v1719
        %1721 = vdwg.mxu0
        %v1722 = vmul.f32 %v729, %v1553
        %v1723 = vmul.f32 %v732, %v1554
        %v1724 = vmul.f32 %v735, %v1555
        %v1725 = vmul.f32 %v738, %v1556
        %v1726 = vmul.f32 %v1722, %v1711
        %v1727 = vmul.f32 %v1723, %v1714
        %v1728 = vmul.f32 %v1724, %v1717
        %v1729 = vmul.f32 %v1725, %v1720
        %v1730 = vmul.f32 %v1682, %v1711
        %v1731 = vmul.f32 %v1685, %v1714
        %v1732 = vmul.f32 %v1688, %v1717
        %v1733 = vmul.f32 %v1691, %v1720
        %v1734 = vmul.f32 %v1730, %v1553
        %v1735 = vmul.f32 %v1731, %v1554
        %v1736 = vmul.f32 %v1732, %v1555
        %v1737 = vmul.f32 %v1733, %v1556
        %v1738 = vsub.f32 %v1557, %v1734
        %v1739 = vsub.f32 %v1558, %v1735
        %v1740 = vsub.f32 %v1559, %v1736
        %v1741 = vsub.f32 %v1560, %v1737
        %v1742 = vmul.f32 %v729, %v1738
        %v1743 = vmul.f32 %v732, %v1739
        %v1744 = vmul.f32 %v735, %v1740
        %v1745 = vmul.f32 %v738, %v1741
        %v1746 = vadd.f32 %v1742, %v741
        %v1747 = vadd.f32 %v1743, %v744
        %v1748 = vadd.f32 %v1744, %v747
        %v1749 = vadd.f32 %v1745, %v750
        %1751 = vset.pattern.permute.xlu0 0
        %1752 = vperm.xlu0 %1751, %v1726
        %v1753 = vpop.permute.xlu0 %1752
        %1756 = vset.pattern.permute.xlu0 0
        %1757 = vperm.xlu0 %1756, %v1727
        %v1758 = vpop.permute.xlu0 %1757
        %1761 = vset.pattern.permute.xlu0 0
        %1762 = vperm.xlu0 %1761, %v1728
        %v1763 = vpop.permute.xlu0 %1762
        %1766 = vset.pattern.permute.xlu0 0
        %1767 = vperm.xlu0 %1766, %v1729
        %v1768 = vpop.permute.xlu0 %1767
        %v1770 = vmul.f32 %v1487, %v1753
        %v1771 = vmul.f32 %v1544, %v1753
        %v1772 = vmul.f32 %v1489, %v1758
        %v1773 = vmul.f32 %v1546, %v1758
        %v1774 = vmul.f32 %v1492, %v1763
        %v1775 = vmul.f32 %v1549, %v1763
        %v1776 = vmul.f32 %v1494, %v1768
        %v1777 = vmul.f32 %v1551, %v1768
        %1779 = vset.pattern.permute.xlu0 0
        %1780 = vperm.xlu0 %1779, %v1746
        %v1781 = vpop.permute.xlu0 %1780
        %1784 = vset.pattern.permute.xlu0 0
        %1785 = vperm.xlu0 %1784, %v1747
        %v1786 = vpop.permute.xlu0 %1785
        %1789 = vset.pattern.permute.xlu0 0
        %1790 = vperm.xlu0 %1789, %v1748
        %v1791 = vpop.permute.xlu0 %1790
        %1794 = vset.pattern.permute.xlu0 0
        %1795 = vperm.xlu0 %1794, %v1749
        %v1796 = vpop.permute.xlu0 %1795
        %v1798 = vadd.f32 %v1770, %v1781
        %v1799 = vadd.f32 %v1771, %v1781
        %v1800 = vadd.f32 %v1772, %v1786
        %v1801 = vadd.f32 %v1773, %v1786
        %v1802 = vadd.f32 %v1774, %v1791
        %v1803 = vadd.f32 %v1775, %v1791
        %v1804 = vadd.f32 %v1776, %v1796
        %v1805 = vadd.f32 %v1777, %v1796
        %v1806 = vxor.u32 %v1798, 2147483648
        %v1807 = vxor.u32 %v1799, 2147483648
        %v1808 = vxor.u32 %v1800, 2147483648
        %v1809 = vxor.u32 %v1801, 2147483648
        %v1810 = vxor.u32 %v1802, 2147483648
        %v1811 = vxor.u32 %v1803, 2147483648
        %v1812 = vxor.u32 %v1804, 2147483648
        %v1813 = vxor.u32 %v1805, 2147483648
        %v1814 = vmul.f32 %v1806, 1.442695
        %v1815 = vpow.pop %v1814
        %v1816 = vmul.f32 %v1807, 1.442695
        %v1817 = vpow.pop %v1816
        %v1818 = vmul.f32 %v1808, 1.442695
        %v1819 = vpow.pop %v1818
        %v1820 = vmul.f32 %v1809, 1.442695
        %v1821 = vpow.pop %v1820
        %v1822 = vmul.f32 %v1810, 1.442695
        %v1823 = vpow.pop %v1822
        %v1824 = vmul.f32 %v1811, 1.442695
        %v1825 = vpow.pop %v1824
        %v1826 = vmul.f32 %v1812, 1.442695
        %v1827 = vpow.pop %v1826
        %v1828 = vmul.f32 %v1813, 1.442695
        %v1829 = vpow.pop %v1828
        %v1830 = vadd.f32 %v1815, 1.0
        %v1831 = vadd.f32 %v1817, 1.0
        %v1832 = vadd.f32 %v1819, 1.0
        %v1833 = vadd.f32 %v1821, 1.0
        %v1834 = vadd.f32 %v1823, 1.0
        %v1835 = vadd.f32 %v1825, 1.0
        %v1836 = vadd.f32 %v1827, 1.0
        %v1837 = vadd.f32 %v1829, 1.0
        %v1838 = vrcp.pop %v1830
        %v1839 = vmul.f32 %v1830, %v1838
        %v1840 = vsub.f32 1.0, %v1839
        %v1841 = vmul.f32 %v1838, %v1840
        %v1842 = vadd.f32 %v1838, %v1841
        %vm1843 = vweird.f32 %v1830
        %vm1844 = vweird.f32 %v1838
        %vm1845 = vmor %vm1843, %vm1844
        %v1846 = vsel %vm1845, %v1838, %v1842
        %v1847 = vand.u32 2147483647, %v1830
        %vm1848 = vcmp.eq.f32.partialorder %v1847, 8.507059e+37
        %v1849 = vand.u32 %v1830, 2147483648
        %v1850 = vor.u32 1.1754944e-38, %v1849
        %v1851 = vsel %vm1848, %v1850, %v1846
        %v1852 = vmul.f32 1.0, %v1851
        %v1853 = vrcp.pop %v1831
        %v1854 = vmul.f32 %v1831, %v1853
        %v1855 = vsub.f32 1.0, %v1854
        %v1856 = vmul.f32 %v1853, %v1855
        %v1857 = vadd.f32 %v1853, %v1856
        %vm1858 = vweird.f32 %v1831
        %vm1859 = vweird.f32 %v1853
        %vm1860 = vmor %vm1858, %vm1859
        %v1861 = vsel %vm1860, %v1853, %v1857
        %v1862 = vand.u32 2147483647, %v1831
        %vm1863 = vcmp.eq.f32.partialorder %v1862, 8.507059e+37
        %v1864 = vand.u32 %v1831, 2147483648
        %v1865 = vor.u32 1.1754944e-38, %v1864
        %v1866 = vsel %vm1863, %v1865, %v1861
        %v1867 = vmul.f32 1.0, %v1866
        %v1868 = vrcp.pop %v1832
        %v1869 = vmul.f32 %v1832, %v1868
        %v1870 = vsub.f32 1.0, %v1869
        %v1871 = vmul.f32 %v1868, %v1870
        %v1872 = vadd.f32 %v1868, %v1871
        %vm1873 = vweird.f32 %v1832
        %vm1874 = vweird.f32 %v1868
        %vm1875 = vmor %vm1873, %vm1874
        %v1876 = vsel %vm1875, %v1868, %v1872
        %v1877 = vand.u32 2147483647, %v1832
        %vm1878 = vcmp.eq.f32.partialorder %v1877, 8.507059e+37
        %v1879 = vand.u32 %v1832, 2147483648
        %v1880 = vor.u32 1.1754944e-38, %v1879
        %v1881 = vsel %vm1878, %v1880, %v1876
        %v1882 = vmul.f32 1.0, %v1881
        %v1883 = vrcp.pop %v1833
        %v1884 = vmul.f32 %v1833, %v1883
        %v1885 = vsub.f32 1.0, %v1884
        %v1886 = vmul.f32 %v1883, %v1885
        %v1887 = vadd.f32 %v1883, %v1886
        %vm1888 = vweird.f32 %v1833
        %vm1889 = vweird.f32 %v1883
        %vm1890 = vmor %vm1888, %vm1889
        %v1891 = vsel %vm1890, %v1883, %v1887
        %v1892 = vand.u32 2147483647, %v1833
        %vm1893 = vcmp.eq.f32.partialorder %v1892, 8.507059e+37
        %v1894 = vand.u32 %v1833, 2147483648
        %v1895 = vor.u32 1.1754944e-38, %v1894
        %v1896 = vsel %vm1893, %v1895, %v1891
        %v1897 = vmul.f32 1.0, %v1896
        %v1898 = vrcp.pop %v1834
        %v1899 = vmul.f32 %v1834, %v1898
        %v1900 = vsub.f32 1.0, %v1899
        %v1901 = vmul.f32 %v1898, %v1900
        %v1902 = vadd.f32 %v1898, %v1901
        %vm1903 = vweird.f32 %v1834
        %vm1904 = vweird.f32 %v1898
        %vm1905 = vmor %vm1903, %vm1904
        %v1906 = vsel %vm1905, %v1898, %v1902
        %v1907 = vand.u32 2147483647, %v1834
        %vm1908 = vcmp.eq.f32.partialorder %v1907, 8.507059e+37
        %v1909 = vand.u32 %v1834, 2147483648
        %v1910 = vor.u32 1.1754944e-38, %v1909
        %v1911 = vsel %vm1908, %v1910, %v1906
        %v1912 = vmul.f32 1.0, %v1911
        %v1913 = vrcp.pop %v1835
        %v1914 = vmul.f32 %v1835, %v1913
        %v1915 = vsub.f32 1.0, %v1914
        %v1916 = vmul.f32 %v1913, %v1915
        %v1917 = vadd.f32 %v1913, %v1916
        %vm1918 = vweird.f32 %v1835
        %vm1919 = vweird.f32 %v1913
        %vm1920 = vmor %vm1918, %vm1919
        %v1921 = vsel %vm1920, %v1913, %v1917
        %v1922 = vand.u32 2147483647, %v1835
        %vm1923 = vcmp.eq.f32.partialorder %v1922, 8.507059e+37
        %v1924 = vand.u32 %v1835, 2147483648
        %v1925 = vor.u32 1.1754944e-38, %v1924
        %v1926 = vsel %vm1923, %v1925, %v1921
        %v1927 = vmul.f32 1.0, %v1926
        %v1928 = vrcp.pop %v1836
        %v1929 = vmul.f32 %v1836, %v1928
        %v1930 = vsub.f32 1.0, %v1929
        %v1931 = vmul.f32 %v1928, %v1930
        %v1932 = vadd.f32 %v1928, %v1931
        %vm1933 = vweird.f32 %v1836
        %vm1934 = vweird.f32 %v1928
        %vm1935 = vmor %vm1933, %vm1934
        %v1936 = vsel %vm1935, %v1928, %v1932
        %v1937 = vand.u32 2147483647, %v1836
        %vm1938 = vcmp.eq.f32.partialorder %v1937, 8.507059e+37
        %v1939 = vand.u32 %v1836, 2147483648
        %v1940 = vor.u32 1.1754944e-38, %v1939
        %v1941 = vsel %vm1938, %v1940, %v1936
        %v1942 = vmul.f32 1.0, %v1941
        %v1943 = vrcp.pop %v1837
        %v1944 = vmul.f32 %v1837, %v1943
        %v1945 = vsub.f32 1.0, %v1944
        %v1946 = vmul.f32 %v1943, %v1945
        %v1947 = vadd.f32 %v1943, %v1946
        %vm1948 = vweird.f32 %v1837
        %vm1949 = vweird.f32 %v1943
        %vm1950 = vmor %vm1948, %vm1949
        %v1951 = vsel %vm1950, %v1943, %v1947
        %v1952 = vand.u32 2147483647, %v1837
        %vm1953 = vcmp.eq.f32.partialorder %v1952, 8.507059e+37
        %v1954 = vand.u32 %v1837, 2147483648
        %v1955 = vor.u32 1.1754944e-38, %v1954
        %v1956 = vsel %vm1953, %v1955, %v1951
        %v1957 = vmul.f32 1.0, %v1956
        %v1958 = vmul.f32 %v1798, %v1852
        %v1959 = vmul.f32 %v1799, %v1867
        %v1960 = vmul.f32 %v1800, %v1882
        %v1961 = vmul.f32 %v1801, %v1897
        %v1962 = vmul.f32 %v1802, %v1912
        %v1963 = vmul.f32 %v1803, %v1927
        %v1964 = vmul.f32 %v1804, %v1942
        %v1965 = vmul.f32 %v1805, %v1957
        %v1966 = vld [vmem:[%s11] sm:$0xff]
        %v1967 = vld [vmem:[%s11 + $0x8] sm:$0xf]
        %v1968 = vld [vmem:[%s11 + $0xc] sm:$0xff]
        %v1969 = vld [vmem:[%s11 + $0x14] sm:$0xf]
        %v1970 = vld [vmem:[%s11 + $0x18] sm:$0xff]
        %v1971 = vld [vmem:[%s11 + $0x20] sm:$0xf]
        %v1972 = vld [vmem:[%s11 + $0x24] sm:$0xff]
        %v1973 = vld [vmem:[%s11 + $0x2c] sm:$0xf]
        %1974 = vrot.lane.b32.xlu0 %v1958, 17
        %v1975 = vpop.permute.xlu0 %1974
        %1976 = vrot.lane.b32.xlu0 %v1960, 17
        %v1977 = vpop.permute.xlu0 %1976
        %1978 = vrot.lane.b32.xlu0 %v1962, 17
        %v1979 = vpop.permute.xlu0 %1978
        %1980 = vrot.lane.b32.xlu0 %v1964, 17
        %v1981 = vpop.permute.xlu0 %1980
        %1982 = vrot.lane.b32.xlu0 %v1959, 17
        %v1983 = vpop.permute.xlu0 %1982
        %1984 = vrot.lane.b32.xlu0 %v1961, 17
        %v1985 = vpop.permute.xlu0 %1984
        %1986 = vrot.lane.b32.xlu0 %v1963, 17
        %v1987 = vpop.permute.xlu0 %1986
        %1988 = vrot.lane.b32.xlu0 %v1965, 17
        %v1989 = vpop.permute.xlu0 %1988
        %v1990 = vsel %vm859, %v1975, %v1983
        %v1991 = vsel %vm859, %v1977, %v1985
        %v1992 = vsel %vm859, %v1979, %v1987
        %v1993 = vsel %vm859, %v1981, %v1989
        %v1994 = vsel %vm859, %v1983, %v1975
        %v1995 = vsel %vm859, %v1985, %v1977
        %v1996 = vsel %vm859, %v1987, %v1979
        %v1997 = vsel %vm859, %v1989, %v1981
        %v1998 = vmul.f32 %v1994, %v870
        %v1999 = vmul.f32 %v1990, %v871
        %v2000 = vmul.f32 %v1995, %v870
        %v2001 = vmul.f32 %v1991, %v871
        %v2002 = vmul.f32 %v1996, %v870
        %v2003 = vmul.f32 %v1992, %v871
        %v2004 = vmul.f32 %v1997, %v870
        %v2005 = vmul.f32 %v1993, %v871
        %v2006 = vpack.c.bf16 %v1999, %v1998
        %v2007 = vpack.c.bf16 %v2001, %v2000
        %v2008 = vpack.c.bf16 %v2003, %v2002
        %v2009 = vpack.c.bf16 %v2005, %v2004
        %2010 = vrot.lane.b32.xlu0 %v1958, 16
        %v2011 = vpop.permute.xlu0 %2010
        %2012 = vrot.lane.b32.xlu0 %v1960, 16
        %v2013 = vpop.permute.xlu0 %2012
        %2014 = vrot.lane.b32.xlu0 %v1962, 16
        %v2015 = vpop.permute.xlu0 %2014
        %2016 = vrot.lane.b32.xlu0 %v1964, 16
        %v2017 = vpop.permute.xlu0 %2016
        %2018 = vrot.lane.b32.xlu0 %v1959, 16
        %v2019 = vpop.permute.xlu0 %2018
        %2020 = vrot.lane.b32.xlu0 %v1961, 16
        %v2021 = vpop.permute.xlu0 %2020
        %2022 = vrot.lane.b32.xlu0 %v1963, 16
        %v2023 = vpop.permute.xlu0 %2022
        %2024 = vrot.lane.b32.xlu0 %v1965, 16
        %v2025 = vpop.permute.xlu0 %2024
        %v2026 = vsel %vm902, %v2011, %v2019
        %v2027 = vsel %vm902, %v2013, %v2021
        %v2028 = vsel %vm902, %v2015, %v2023
        %v2029 = vsel %vm902, %v2017, %v2025
        %v2030 = vsel %vm902, %v2019, %v2011
        %v2031 = vsel %vm902, %v2021, %v2013
        %v2032 = vsel %vm902, %v2023, %v2015
        %v2033 = vsel %vm902, %v2025, %v2017
        %v2034 = vmul.f32 %v2030, %v914
        %v2035 = vmul.f32 %v2026, %v915
        %v2036 = vmul.f32 %v2031, %v914
        %v2037 = vmul.f32 %v2027, %v915
        %v2038 = vmul.f32 %v2032, %v914
        %v2039 = vmul.f32 %v2028, %v915
        %v2040 = vmul.f32 %v2033, %v914
        %v2041 = vmul.f32 %v2029, %v915
        %v2042 = vpack.c.bf16 %v2035, %v2034
        %v2043 = vpack.c.bf16 %v2037, %v2036
        %v2044 = vpack.c.bf16 %v2039, %v2038
        %v2045 = vpack.c.bf16 %v2041, %v2040
        %2046 = vrot.lane.b32.xlu0 %v1958, 15
        %v2047 = vpop.permute.xlu0 %2046
        %2048 = vrot.lane.b32.xlu0 %v1960, 15
        %v2049 = vpop.permute.xlu0 %2048
        %2050 = vrot.lane.b32.xlu0 %v1962, 15
        %v2051 = vpop.permute.xlu0 %2050
        %2052 = vrot.lane.b32.xlu0 %v1964, 15
        %v2053 = vpop.permute.xlu0 %2052
        %2054 = vrot.lane.b32.xlu0 %v1959, 15
        %v2055 = vpop.permute.xlu0 %2054
        %2056 = vrot.lane.b32.xlu0 %v1961, 15
        %v2057 = vpop.permute.xlu0 %2056
        %2058 = vrot.lane.b32.xlu0 %v1963, 15
        %v2059 = vpop.permute.xlu0 %2058
        %2060 = vrot.lane.b32.xlu0 %v1965, 15
        %v2061 = vpop.permute.xlu0 %2060
        %v2062 = vsel %vm946, %v2047, %v2055
        %v2063 = vsel %vm946, %v2049, %v2057
        %v2064 = vsel %vm946, %v2051, %v2059
        %v2065 = vsel %vm946, %v2053, %v2061
        %v2066 = vsel %vm946, %v2055, %v2047
        %v2067 = vsel %vm946, %v2057, %v2049
        %v2068 = vsel %vm946, %v2059, %v2051
        %v2069 = vsel %vm946, %v2061, %v2053
        %v2070 = vmul.f32 %v2066, %v958
        %v2071 = vmul.f32 %v2062, %v959
        %v2072 = vmul.f32 %v2067, %v958
        %v2073 = vmul.f32 %v2063, %v959
        %v2074 = vmul.f32 %v2068, %v958
        %v2075 = vmul.f32 %v2064, %v959
        %v2076 = vmul.f32 %v2069, %v958
        %v2077 = vmul.f32 %v2065, %v959
        %v2078 = vpack.c.bf16 %v2071, %v2070
        %v2079 = vpack.c.bf16 %v2073, %v2072
        %v2080 = vpack.c.bf16 %v2075, %v2074
        %v2081 = vpack.c.bf16 %v2077, %v2076
        %2082 = vrot.lane.b32.xlu0 %v1958, 1
        %v2083 = vpop.permute.xlu0 %2082
        %2084 = vrot.lane.b32.xlu0 %v1960, 1
        %v2085 = vpop.permute.xlu0 %2084
        %2086 = vrot.lane.b32.xlu0 %v1962, 1
        %v2087 = vpop.permute.xlu0 %2086
        %2088 = vrot.lane.b32.xlu0 %v1964, 1
        %v2089 = vpop.permute.xlu0 %2088
        %2090 = vrot.lane.b32.xlu0 %v1959, 1
        %v2091 = vpop.permute.xlu0 %2090
        %2092 = vrot.lane.b32.xlu0 %v1961, 1
        %v2093 = vpop.permute.xlu0 %2092
        %2094 = vrot.lane.b32.xlu0 %v1963, 1
        %v2095 = vpop.permute.xlu0 %2094
        %2096 = vrot.lane.b32.xlu0 %v1965, 1
        %v2097 = vpop.permute.xlu0 %2096
        %v2098 = vsel %vm990, %v2083, %v2091
        %v2099 = vsel %vm990, %v2085, %v2093
        %v2100 = vsel %vm990, %v2087, %v2095
        %v2101 = vsel %vm990, %v2089, %v2097
        %v2102 = vsel %vm990, %v2091, %v2083
        %v2103 = vsel %vm990, %v2093, %v2085
        %v2104 = vsel %vm990, %v2095, %v2087
        %v2105 = vsel %vm990, %v2097, %v2089
        %v2106 = vmul.f32 %v2102, %v1002
        %v2107 = vmul.f32 %v2098, %v1003
        %v2108 = vmul.f32 %v2103, %v1002
        %v2109 = vmul.f32 %v2099, %v1003
        %v2110 = vmul.f32 %v2104, %v1002
        %v2111 = vmul.f32 %v2100, %v1003
        %v2112 = vmul.f32 %v2105, %v1002
        %v2113 = vmul.f32 %v2101, %v1003
        %v2114 = vpack.c.bf16 %v2107, %v2106
        %v2115 = vpack.c.bf16 %v2109, %v2108
        %v2116 = vpack.c.bf16 %v2111, %v2110
        %v2117 = vpack.c.bf16 %v2113, %v2112
        %v2118 = vpack.c.bf16 %v1959, %v1958
        %v2119 = vpack.c.bf16 %v1961, %v1960
        %v2120 = vpack.c.bf16 %v1963, %v1962
        %v2121 = vpack.c.bf16 %v1965, %v1964
        %2122 = vrot.lane.b32.xlu0 %v1958, 127
        %v2123 = vpop.permute.xlu0 %2122
        %2124 = vrot.lane.b32.xlu0 %v1960, 127
        %v2125 = vpop.permute.xlu0 %2124
        %2126 = vrot.lane.b32.xlu0 %v1962, 127
        %v2127 = vpop.permute.xlu0 %2126
        %2128 = vrot.lane.b32.xlu0 %v1964, 127
        %v2129 = vpop.permute.xlu0 %2128
        %2130 = vrot.lane.b32.xlu0 %v1959, 127
        %v2131 = vpop.permute.xlu0 %2130
        %2132 = vrot.lane.b32.xlu0 %v1961, 127
        %v2133 = vpop.permute.xlu0 %2132
        %2134 = vrot.lane.b32.xlu0 %v1963, 127
        %v2135 = vpop.permute.xlu0 %2134
        %2136 = vrot.lane.b32.xlu0 %v1965, 127
        %v2137 = vpop.permute.xlu0 %2136
        %v2138 = vsel %vm1038, %v2123, %v2131
        %v2139 = vsel %vm1038, %v2125, %v2133
        %v2140 = vsel %vm1038, %v2127, %v2135
        %v2141 = vsel %vm1038, %v2129, %v2137
        %v2142 = vsel %vm1038, %v2131, %v2123
        %v2143 = vsel %vm1038, %v2133, %v2125
        %v2144 = vsel %vm1038, %v2135, %v2127
        %v2145 = vsel %vm1038, %v2137, %v2129
        %v2146 = vmul.f32 %v2138, %v1050
        %v2147 = vmul.f32 %v2142, %v1051
        %v2148 = vmul.f32 %v2139, %v1050
        %v2149 = vmul.f32 %v2143, %v1051
        %v2150 = vmul.f32 %v2140, %v1050
        %v2151 = vmul.f32 %v2144, %v1051
        %v2152 = vmul.f32 %v2141, %v1050
        %v2153 = vmul.f32 %v2145, %v1051
        %v2154 = vpack.c.bf16 %v2147, %v2146
        %v2155 = vpack.c.bf16 %v2149, %v2148
        %v2156 = vpack.c.bf16 %v2151, %v2150
        %v2157 = vpack.c.bf16 %v2153, %v2152
        %2158 = vrot.lane.b32.xlu0 %v1958, 113
        %v2159 = vpop.permute.xlu0 %2158
        %2160 = vrot.lane.b32.xlu0 %v1960, 113
        %v2161 = vpop.permute.xlu0 %2160
        %2162 = vrot.lane.b32.xlu0 %v1962, 113
        %v2163 = vpop.permute.xlu0 %2162
        %2164 = vrot.lane.b32.xlu0 %v1964, 113
        %v2165 = vpop.permute.xlu0 %2164
        %2166 = vrot.lane.b32.xlu0 %v1959, 113
        %v2167 = vpop.permute.xlu0 %2166
        %2168 = vrot.lane.b32.xlu0 %v1961, 113
        %v2169 = vpop.permute.xlu0 %2168
        %2170 = vrot.lane.b32.xlu0 %v1963, 113
        %v2171 = vpop.permute.xlu0 %2170
        %2172 = vrot.lane.b32.xlu0 %v1965, 113
        %v2173 = vpop.permute.xlu0 %2172
        %v2174 = vsel %vm1082, %v2159, %v2167
        %v2175 = vsel %vm1082, %v2161, %v2169
        %v2176 = vsel %vm1082, %v2163, %v2171
        %v2177 = vsel %vm1082, %v2165, %v2173
        %v2178 = vsel %vm1082, %v2167, %v2159
        %v2179 = vsel %vm1082, %v2169, %v2161
        %v2180 = vsel %vm1082, %v2171, %v2163
        %v2181 = vsel %vm1082, %v2173, %v2165
        %v2182 = vmul.f32 %v2174, %v1094
        %v2183 = vmul.f32 %v2178, %v1095
        %v2184 = vmul.f32 %v2175, %v1094
        %v2185 = vmul.f32 %v2179, %v1095
        %v2186 = vmul.f32 %v2176, %v1094
        %v2187 = vmul.f32 %v2180, %v1095
        %v2188 = vmul.f32 %v2177, %v1094
        %v2189 = vmul.f32 %v2181, %v1095
        %v2190 = vpack.c.bf16 %v2183, %v2182
        %v2191 = vpack.c.bf16 %v2185, %v2184
        %v2192 = vpack.c.bf16 %v2187, %v2186
        %v2193 = vpack.c.bf16 %v2189, %v2188
        %2194 = vrot.lane.b32.xlu0 %v1958, 112
        %v2195 = vpop.permute.xlu0 %2194
        %2196 = vrot.lane.b32.xlu0 %v1960, 112
        %v2197 = vpop.permute.xlu0 %2196
        %2198 = vrot.lane.b32.xlu0 %v1962, 112
        %v2199 = vpop.permute.xlu0 %2198
        %2200 = vrot.lane.b32.xlu0 %v1964, 112
        %v2201 = vpop.permute.xlu0 %2200
        %2202 = vrot.lane.b32.xlu0 %v1959, 112
        %v2203 = vpop.permute.xlu0 %2202
        %2204 = vrot.lane.b32.xlu0 %v1961, 112
        %v2205 = vpop.permute.xlu0 %2204
        %2206 = vrot.lane.b32.xlu0 %v1963, 112
        %v2207 = vpop.permute.xlu0 %2206
        %2208 = vrot.lane.b32.xlu0 %v1965, 112
        %v2209 = vpop.permute.xlu0 %2208
        %v2210 = vsel %vm1126, %v2195, %v2203
        %v2211 = vsel %vm1126, %v2197, %v2205
        %v2212 = vsel %vm1126, %v2199, %v2207
        %v2213 = vsel %vm1126, %v2201, %v2209
        %v2214 = vsel %vm1126, %v2203, %v2195
        %v2215 = vsel %vm1126, %v2205, %v2197
        %v2216 = vsel %vm1126, %v2207, %v2199
        %v2217 = vsel %vm1126, %v2209, %v2201
        %v2218 = vmul.f32 %v2210, %v1138
        %v2219 = vmul.f32 %v2214, %v1139
        %v2220 = vmul.f32 %v2211, %v1138
        %v2221 = vmul.f32 %v2215, %v1139
        %v2222 = vmul.f32 %v2212, %v1138
        %v2223 = vmul.f32 %v2216, %v1139
        %v2224 = vmul.f32 %v2213, %v1138
        %v2225 = vmul.f32 %v2217, %v1139
        %v2226 = vpack.c.bf16 %v2219, %v2218
        %v2227 = vpack.c.bf16 %v2221, %v2220
        %v2228 = vpack.c.bf16 %v2223, %v2222
        %v2229 = vpack.c.bf16 %v2225, %v2224
        %2230 = vrot.lane.b32.xlu0 %v1958, 111
        %v2231 = vpop.permute.xlu0 %2230
        %2232 = vrot.lane.b32.xlu0 %v1960, 111
        %v2233 = vpop.permute.xlu0 %2232
        %2234 = vrot.lane.b32.xlu0 %v1962, 111
        %v2235 = vpop.permute.xlu0 %2234
        %2236 = vrot.lane.b32.xlu0 %v1964, 111
        %v2237 = vpop.permute.xlu0 %2236
        %2238 = vrot.lane.b32.xlu0 %v1959, 111
        %v2239 = vpop.permute.xlu0 %2238
        %2240 = vrot.lane.b32.xlu0 %v1961, 111
        %v2241 = vpop.permute.xlu0 %2240
        %2242 = vrot.lane.b32.xlu0 %v1963, 111
        %v2243 = vpop.permute.xlu0 %2242
        %2244 = vrot.lane.b32.xlu0 %v1965, 111
        %v2245 = vpop.permute.xlu0 %2244
        %v2246 = vsel %vm1170, %v2231, %v2239
        %v2247 = vsel %vm1170, %v2233, %v2241
        %v2248 = vsel %vm1170, %v2235, %v2243
        %v2249 = vsel %vm1170, %v2237, %v2245
        %v2250 = vsel %vm1170, %v2239, %v2231
        %v2251 = vsel %vm1170, %v2241, %v2233
        %v2252 = vsel %vm1170, %v2243, %v2235
        %v2253 = vsel %vm1170, %v2245, %v2237
        %v2254 = vmul.f32 %v2246, %v1182
        %v2255 = vmul.f32 %v2250, %v1183
        %v2256 = vmul.f32 %v2247, %v1182
        %v2257 = vmul.f32 %v2251, %v1183
        %v2258 = vmul.f32 %v2248, %v1182
        %v2259 = vmul.f32 %v2252, %v1183
        %v2260 = vmul.f32 %v2249, %v1182
        %v2261 = vmul.f32 %v2253, %v1183
        %v2262 = vpack.c.bf16 %v2255, %v2254
        %v2263 = vpack.c.bf16 %v2257, %v2256
        %v2264 = vpack.c.bf16 %v2259, %v2258
        %v2265 = vpack.c.bf16 %v2261, %v2260
        %v2270 = vunpack.c.l.b16 %v2006
        %v2271 = vunpack.c.h.b16 %v2006
        %v2272 = vunpack.c.l.b16 %v2007
        %v2273 = vunpack.c.h.b16 %v2007
        %v2274 = vunpack.c.l.b16 %v2008
        %v2275 = vunpack.c.h.b16 %v2008
        %v2276 = vunpack.c.l.b16 %v2009
        %v2277 = vunpack.c.h.b16 %v2009
        %v2278 = vpack.c.b16 %v2272, %v2270
        %v2279 = vpack.c.b16 %v2273, %v2271
        %v2280 = vpack.c.b16 %v2276, %v2274
        %v2281 = vpack.c.b16 %v2277, %v2275
        %v2290 = vunpack.c.l.b16 %v2042
        %v2291 = vunpack.c.h.b16 %v2042
        %v2292 = vunpack.c.l.b16 %v2043
        %v2293 = vunpack.c.h.b16 %v2043
        %v2294 = vunpack.c.l.b16 %v2044
        %v2295 = vunpack.c.h.b16 %v2044
        %v2296 = vunpack.c.l.b16 %v2045
        %v2297 = vunpack.c.h.b16 %v2045
        %v2298 = vpack.c.b16 %v2292, %v2290
        %v2299 = vpack.c.b16 %v2293, %v2291
        %v2300 = vpack.c.b16 %v2296, %v2294
        %v2301 = vpack.c.b16 %v2297, %v2295
        %v2310 = vunpack.c.l.b16 %v2078
        %v2311 = vunpack.c.h.b16 %v2078
        %v2312 = vunpack.c.l.b16 %v2079
        %v2313 = vunpack.c.h.b16 %v2079
        %v2314 = vunpack.c.l.b16 %v2080
        %v2315 = vunpack.c.h.b16 %v2080
        %v2316 = vunpack.c.l.b16 %v2081
        %v2317 = vunpack.c.h.b16 %v2081
        %v2318 = vpack.c.b16 %v2312, %v2310
        %v2319 = vpack.c.b16 %v2313, %v2311
        %v2320 = vpack.c.b16 %v2316, %v2314
        %v2321 = vpack.c.b16 %v2317, %v2315
        %v2330 = vunpack.c.l.b16 %v2114
        %v2331 = vunpack.c.h.b16 %v2114
        %v2332 = vunpack.c.l.b16 %v2115
        %v2333 = vunpack.c.h.b16 %v2115
        %v2334 = vunpack.c.l.b16 %v2116
        %v2335 = vunpack.c.h.b16 %v2116
        %v2336 = vunpack.c.l.b16 %v2117
        %v2337 = vunpack.c.h.b16 %v2117
        %v2338 = vpack.c.b16 %v2332, %v2330
        %v2339 = vpack.c.b16 %v2333, %v2331
        %v2340 = vpack.c.b16 %v2336, %v2334
        %v2341 = vpack.c.b16 %v2337, %v2335
        %v2350 = vunpack.c.l.b16 %v2118
        %v2351 = vunpack.c.h.b16 %v2118
        %v2352 = vunpack.c.l.b16 %v2119
        %v2353 = vunpack.c.h.b16 %v2119
        %v2354 = vunpack.c.l.b16 %v2120
        %v2355 = vunpack.c.h.b16 %v2120
        %v2356 = vunpack.c.l.b16 %v2121
        %v2357 = vunpack.c.h.b16 %v2121
        %v2358 = vpack.c.b16 %v2352, %v2350
        %v2359 = vpack.c.b16 %v2353, %v2351
        %v2360 = vpack.c.b16 %v2356, %v2354
        %v2361 = vpack.c.b16 %v2357, %v2355
        %v2370 = vunpack.c.l.b16 %v2154
        %v2371 = vunpack.c.h.b16 %v2154
        %v2372 = vunpack.c.l.b16 %v2155
        %v2373 = vunpack.c.h.b16 %v2155
        %v2374 = vunpack.c.l.b16 %v2156
        %v2375 = vunpack.c.h.b16 %v2156
        %v2376 = vunpack.c.l.b16 %v2157
        %v2377 = vunpack.c.h.b16 %v2157
        %v2378 = vpack.c.b16 %v2372, %v2370
        %v2379 = vpack.c.b16 %v2373, %v2371
        %v2380 = vpack.c.b16 %v2376, %v2374
        %v2381 = vpack.c.b16 %v2377, %v2375
        %v2390 = vunpack.c.l.b16 %v2190
        %v2391 = vunpack.c.h.b16 %v2190
        %v2392 = vunpack.c.l.b16 %v2191
        %v2393 = vunpack.c.h.b16 %v2191
        %v2394 = vunpack.c.l.b16 %v2192
        %v2395 = vunpack.c.h.b16 %v2192
        %v2396 = vunpack.c.l.b16 %v2193
        %v2397 = vunpack.c.h.b16 %v2193
        %v2398 = vpack.c.b16 %v2392, %v2390
        %v2399 = vpack.c.b16 %v2393, %v2391
        %v2400 = vpack.c.b16 %v2396, %v2394
        %v2401 = vpack.c.b16 %v2397, %v2395
        %v2410 = vunpack.c.l.b16 %v2226
        %v2411 = vunpack.c.h.b16 %v2226
        %v2412 = vunpack.c.l.b16 %v2227
        %v2413 = vunpack.c.h.b16 %v2227
        %v2414 = vunpack.c.l.b16 %v2228
        %v2415 = vunpack.c.h.b16 %v2228
        %v2416 = vunpack.c.l.b16 %v2229
        %v2417 = vunpack.c.h.b16 %v2229
        %v2418 = vpack.c.b16 %v2412, %v2410
        %v2419 = vpack.c.b16 %v2413, %v2411
        %v2420 = vpack.c.b16 %v2416, %v2414
        %v2421 = vpack.c.b16 %v2417, %v2415
        %v2430 = vunpack.c.l.b16 %v2262
        %v2431 = vunpack.c.h.b16 %v2262
        %v2432 = vunpack.c.l.b16 %v2263
        %v2433 = vunpack.c.h.b16 %v2263
        %v2434 = vunpack.c.l.b16 %v2264
        %v2435 = vunpack.c.h.b16 %v2264
        %v2436 = vunpack.c.l.b16 %v2265
        %v2437 = vunpack.c.h.b16 %v2265
        %v2438 = vpack.c.b16 %v2432, %v2430
        %v2439 = vpack.c.b16 %v2433, %v2431
        %v2440 = vpack.c.b16 %v2436, %v2434
        %v2441 = vpack.c.b16 %v2437, %v2435
        %v2446 = vld [vmem:[%s12] sm:$0xff]
        %v2447 = vld [vmem:[%s12 + $0x8] sm:$0xff]
        %v2448 = vld [vmem:[%s12 + $0x10] sm:$0xff]
        %v2449 = vld [vmem:[%s12 + $0x18] sm:$0xff]
        %2451 = vset.pattern.permute.xlu0 0
        %2452 = vperm.xlu0 %2451, %v2446
        %v2453 = vpop.permute.xlu0 %2452
        %2456 = vset.pattern.permute.xlu0 0
        %2457 = vperm.xlu0 %2456, %v2447
        %v2458 = vpop.permute.xlu0 %2457
        %2461 = vset.pattern.permute.xlu0 0
        %2462 = vperm.xlu0 %2461, %v2448
        %v2463 = vpop.permute.xlu0 %2462
        %2466 = vset.pattern.permute.xlu0 0
        %2467 = vperm.xlu0 %2466, %v2449
        %v2468 = vpop.permute.xlu0 %2467
        %v2478 = vunpack.c.l.b16 %v1966
        %v2479 = vunpack.c.h.b16 %v1966
        %v2480 = vunpack.c.l.b16 %v1967
        %v2481 = vunpack.c.l.b16 %v1968
        %v2482 = vunpack.c.h.b16 %v1968
        %v2483 = vunpack.c.l.b16 %v1969
        %v2484 = vunpack.c.l.b16 %v1970
        %v2485 = vunpack.c.h.b16 %v1970
        %v2486 = vunpack.c.l.b16 %v1971
        %v2487 = vunpack.c.l.b16 %v1972
        %v2488 = vunpack.c.h.b16 %v1972
        %v2489 = vunpack.c.l.b16 %v1973
        %v2490 = vpack.c.b16 %v2481, %v2478
        %v2491 = vpack.c.b16 %v2482, %v2479
        %v2492 = vpack.c.b16 %v2483, %v2480
        %v2493 = vpack.c.b16 %v2487, %v2484
        %v2494 = vpack.c.b16 %v2488, %v2485
        %v2495 = vpack.c.b16 %v2489, %v2486
        %v2501 = vsel %vm1432, %v2492, 0
        %v2504 = vsel %vm1432, %v2495, 0
        %2506 = vmatpush.bf16.msra.mxu0 %v2340
        %2507 = vmatpush.bf16.msra.mxu0 %v2338
        %2508 = vmatpush.bf16.msra.mxu0 %v2320
        %2509 = vmatpush.bf16.msra.mxu0 %v2318
        %2510 = vmatpush.bf16.msra.mxu0 %v2300
        %2511 = vmatpush.bf16.msra.mxu0 %v2298
        %2512 = vmatpush.bf16.msra.mxu0 %v2280
        %2513 = vmatpush.bf16.msra.mxu0 %v2278
        %2514 = vmatmul.bf16.gmra.mxu0 %v2490
        %v2515 = vpop.f32.mrf.mxu0
        %v2516 = vadd.f32 %v2453, %v2515
        %v2517 = vpop.f32.mrf.mxu0
        %v2518 = vadd.f32 %v2458, %v2517
        %2519 = vmatmul.bf16.gmra.mxu0 %v2493
        %v2520 = vpop.f32.mrf.mxu0
        %v2521 = vadd.f32 %v2463, %v2520
        %v2522 = vpop.f32.mrf.mxu0
        %v2523 = vadd.f32 %v2468, %v2522
        %2524 = vdwg.mxu0
        %2525 = vmatpush.bf16.msra.mxu0 %v2420
        %2526 = vmatpush.bf16.msra.mxu0 %v2418
        %2527 = vmatpush.bf16.msra.mxu0 %v2400
        %2528 = vmatpush.bf16.msra.mxu0 %v2398
        %2529 = vmatpush.bf16.msra.mxu0 %v2380
        %2530 = vmatpush.bf16.msra.mxu0 %v2378
        %2531 = vmatpush.bf16.msra.mxu0 %v2360
        %2532 = vmatpush.bf16.msra.mxu0 %v2358
        %2533 = vmatmul.bf16.gmra.mxu0 %v2491
        %v2534 = vpop.f32.mrf.mxu0
        %v2535 = vadd.f32 %v2516, %v2534
        %v2536 = vpop.f32.mrf.mxu0
        %v2537 = vadd.f32 %v2518, %v2536
        %2538 = vmatmul.bf16.gmra.mxu0 %v2494
        %v2539 = vpop.f32.mrf.mxu0
        %v2540 = vadd.f32 %v2521, %v2539
        %v2541 = vpop.f32.mrf.mxu0
        %v2542 = vadd.f32 %v2523, %v2541
        %2543 = vdwg.mxu0
        %2544 = vmatpush.bf16.msra.mxu0 0
        %2545 = vmatpush.bf16.msra.mxu0 0
        %2546 = vmatpush.bf16.msra.mxu0 0
        %2547 = vmatpush.bf16.msra.mxu0 0
        %2548 = vmatpush.bf16.msra.mxu0 0
        %2549 = vmatpush.bf16.msra.mxu0 0
        %2550 = vmatpush.bf16.msra.mxu0 %v2440
        %2551 = vmatpush.bf16.msra.mxu0 %v2438
        %2552 = vmatmul.bf16.gmra.mxu0 %v2501
        %v2553 = vpop.f32.mrf.mxu0
        %v2554 = vadd.f32 %v2535, %v2553
        %v2555 = vpop.f32.mrf.mxu0
        %v2556 = vadd.f32 %v2537, %v2555
        %2557 = vmatmul.bf16.gmra.mxu0 %v2504
        %v2558 = vpop.f32.mrf.mxu0
        %v2559 = vadd.f32 %v2540, %v2558
        %v2560 = vpop.f32.mrf.mxu0
        %v2561 = vadd.f32 %v2542, %v2560
        %2562 = vdwg.mxu0
        %2563 = vmatpush.bf16.msra.mxu0 %v2341
        %2564 = vmatpush.bf16.msra.mxu0 %v2339
        %2565 = vmatpush.bf16.msra.mxu0 %v2321
        %2566 = vmatpush.bf16.msra.mxu0 %v2319
        %2567 = vmatpush.bf16.msra.mxu0 %v2301
        %2568 = vmatpush.bf16.msra.mxu0 %v2299
        %2569 = vmatpush.bf16.msra.mxu0 %v2281
        %2570 = vmatpush.bf16.msra.mxu0 %v2279
        %2571 = vmatmul.bf16.gmra.mxu0 %v2490
        %v2572 = vpop.f32.mrf.mxu0
        %v2573 = vadd.f32 %v2453, %v2572
        %v2574 = vpop.f32.mrf.mxu0
        %v2575 = vadd.f32 %v2458, %v2574
        %2576 = vmatmul.bf16.gmra.mxu0 %v2493
        %v2577 = vpop.f32.mrf.mxu0
        %v2578 = vadd.f32 %v2463, %v2577
        %v2579 = vpop.f32.mrf.mxu0
        %v2580 = vadd.f32 %v2468, %v2579
        %2581 = vdwg.mxu0
        %2582 = vmatpush.bf16.msra.mxu0 %v2421
        %2583 = vmatpush.bf16.msra.mxu0 %v2419
        %2584 = vmatpush.bf16.msra.mxu0 %v2401
        %2585 = vmatpush.bf16.msra.mxu0 %v2399
        %2586 = vmatpush.bf16.msra.mxu0 %v2381
        %2587 = vmatpush.bf16.msra.mxu0 %v2379
        %2588 = vmatpush.bf16.msra.mxu0 %v2361
        %2589 = vmatpush.bf16.msra.mxu0 %v2359
        %2590 = vmatmul.bf16.gmra.mxu0 %v2491
        %v2591 = vpop.f32.mrf.mxu0
        %v2592 = vadd.f32 %v2573, %v2591
        %v2593 = vpop.f32.mrf.mxu0
        %v2594 = vadd.f32 %v2575, %v2593
        %2595 = vmatmul.bf16.gmra.mxu0 %v2494
        %v2596 = vpop.f32.mrf.mxu0
        %v2597 = vadd.f32 %v2578, %v2596
        %v2598 = vpop.f32.mrf.mxu0
        %v2599 = vadd.f32 %v2580, %v2598
        %2600 = vdwg.mxu0
        %2601 = vmatpush.bf16.msra.mxu0 0
        %2602 = vmatpush.bf16.msra.mxu0 0
        %2603 = vmatpush.bf16.msra.mxu0 0
        %2604 = vmatpush.bf16.msra.mxu0 0
        %2605 = vmatpush.bf16.msra.mxu0 0
        %2606 = vmatpush.bf16.msra.mxu0 0
        %2607 = vmatpush.bf16.msra.mxu0 %v2441
        %2608 = vmatpush.bf16.msra.mxu0 %v2439
        %2609 = vmatmul.bf16.gmra.mxu0 %v2501
        %v2610 = vpop.f32.mrf.mxu0
        %v2611 = vadd.f32 %v2592, %v2610
        %v2612 = vpop.f32.mrf.mxu0
        %v2613 = vadd.f32 %v2594, %v2612
        %2614 = vmatmul.bf16.gmra.mxu0 %v2504
        %v2615 = vpop.f32.mrf.mxu0
        %v2616 = vadd.f32 %v2597, %v2615
        %v2617 = vpop.f32.mrf.mxu0
        %v2618 = vadd.f32 %v2599, %v2617
        %2619 = vdwg.mxu0
        %v2620 = vld [vmem:[%s13] sm:$0xff]
        %v2621 = vld [vmem:[%s13 + $0x8] sm:$0xff]
        %v2622 = vld [vmem:[%s13 + $0x10] sm:$0xff]
        %v2623 = vld [vmem:[%s13 + $0x18] sm:$0xff]
        %v2624 = vld [vmem:[%s14] sm:$0xff]
        %v2625 = vld [vmem:[%s14 + $0x8] sm:$0xff]
        %v2626 = vld [vmem:[%s14 + $0x10] sm:$0xff]
        %v2627 = vld [vmem:[%s14 + $0x18] sm:$0xff]
        %v2628 = vadd.f32 %v2554, %v2611
        %2629 = vadd.xlane.f32.xlu0 %v2628
        %v2630 = vpop.xlane.xlu0 %2629
        %v2631 = vadd.f32 %v2556, %v2613
        %2632 = vadd.xlane.f32.xlu0 %v2631
        %v2633 = vpop.xlane.xlu0 %2632
        %v2634 = vadd.f32 %v2559, %v2616
        %2635 = vadd.xlane.f32.xlu0 %v2634
        %v2636 = vpop.xlane.xlu0 %2635
        %v2637 = vadd.f32 %v2561, %v2618
        %2638 = vadd.xlane.f32.xlu0 %v2637
        %v2639 = vpop.xlane.xlu0 %2638
        %v2640 = vmul.f32 %v2554, %v2554
        %v2641 = vmul.f32 %v2611, %v2611
        %v2642 = vmul.f32 %v2556, %v2556
        %v2643 = vmul.f32 %v2613, %v2613
        %v2644 = vmul.f32 %v2559, %v2559
        %v2645 = vmul.f32 %v2616, %v2616
        %v2646 = vmul.f32 %v2561, %v2561
        %v2647 = vmul.f32 %v2618, %v2618
        %v2648 = vadd.f32 %v2640, %v2641
        %2649 = vadd.xlane.f32.xlu0 %v2648
        %v2650 = vpop.xlane.xlu0 %2649
        %v2651 = vadd.f32 %v2642, %v2643
        %2652 = vadd.xlane.f32.xlu0 %v2651
        %v2653 = vpop.xlane.xlu0 %2652
        %v2654 = vadd.f32 %v2644, %v2645
        %2655 = vadd.xlane.f32.xlu0 %v2654
        %v2656 = vpop.xlane.xlu0 %2655
        %v2657 = vadd.f32 %v2646, %v2647
        %2658 = vadd.xlane.f32.xlu0 %v2657
        %v2659 = vpop.xlane.xlu0 %2658
        %2660 = vmatpush.msra.mxu0 0.0
        %2661 = vmatpush.msra.mxu0 0.0
        %2662 = vmatpush.msra.mxu0 0.0
        %2663 = vmatpush.msra.mxu0 0.0
        %2664 = vmatpush.msra.mxu0 0.0
        %2665 = vmatpush.msra.mxu0 0.0
        %2666 = vmatpush.msra.mxu0 0.0
        %2667 = vmatpush.msra.mxu0 0.0
        %2668 = vmatpush.msra.mxu0 0.0
        %2669 = vmatpush.msra.mxu0 0.0
        %2670 = vmatpush.msra.mxu0 0.0
        %2671 = vmatpush.msra.mxu0 0.0
        %2672 = vmatpush.msra.mxu0 %v2639
        %2673 = vmatpush.msra.mxu0 %v2636
        %2674 = vmatpush.msra.mxu0 %v2633
        %2675 = vmatpush.msra.mxu0 %v2630
        %2676 = vmatmul.f32.gmra.mxu0 %v1594
        %v2677 = vpop.f32.mrf.mxu0
        %v2678 = vadd.f32 0.0, %v2677
        %2679 = vdwg.mxu0
        %v2680 = vmul.f32 %v2678, 0.0009765625
        %2681 = vmatpush.msra.mxu0 0.0
        %2682 = vmatpush.msra.mxu0 0.0
        %2683 = vmatpush.msra.mxu0 0.0
        %2684 = vmatpush.msra.mxu0 0.0
        %2685 = vmatpush.msra.mxu0 0.0
        %2686 = vmatpush.msra.mxu0 0.0
        %2687 = vmatpush.msra.mxu0 0.0
        %2688 = vmatpush.msra.mxu0 0.0
        %2689 = vmatpush.msra.mxu0 0.0
        %2690 = vmatpush.msra.mxu0 0.0
        %2691 = vmatpush.msra.mxu0 0.0
        %2692 = vmatpush.msra.mxu0 0.0
        %2693 = vmatpush.msra.mxu0 %v2659
        %2694 = vmatpush.msra.mxu0 %v2656
        %2695 = vmatpush.msra.mxu0 %v2653
        %2696 = vmatpush.msra.mxu0 %v2650
        %2697 = vmatmul.f32.gmra.mxu0 %v1594
        %v2698 = vpop.f32.mrf.mxu0
        %v2699 = vadd.f32 0.0, %v2698
        %2700 = vdwg.mxu0
        %v2701 = vmul.f32 %v2699, 0.0009765625
        %v2702 = vmul.f32 %v2680, %v2680
        %v2703 = vsub.f32 %v2701, %v2702
        %v2704 = vadd.f32 %v2703, 1e-05
        %v2705 = vrsqrt.pop %v2704
        %v2706 = vmul.f32 %v2705, %v2704
        %v2707 = vmul.f32 %v2706, %v2705
        %v2708 = vmul.f32 0.5, %v2707
        %v2709 = vsub.f32 1.5, %v2708
        %v2710 = vmul.f32 %v2705, %v2709
        %vm2711 = vweird.f32 %v2704
        %vm2712 = vweird.f32 %v2705
        %vm2713 = vmor %vm2711, %vm2712
        %v2714 = vsel %vm2713, %v2705, %v2710
        %2715 = vmatpush.msra.mxu0 0.0
        %2716 = vmatpush.msra.mxu0 0.0
        %2717 = vmatpush.msra.mxu0 0.0
        %2718 = vmatpush.msra.mxu0 0.0
        %2719 = vmatpush.msra.mxu0 0.0
        %2720 = vmatpush.msra.mxu0 0.0
        %2721 = vmatpush.msra.mxu0 0.0
        %2722 = vmatpush.msra.mxu0 0.0
        %2723 = vmatpush.msra.mxu0 0.0
        %2724 = vmatpush.msra.mxu0 0.0
        %2725 = vmatpush.msra.mxu0 0.0
        %2726 = vmatpush.msra.mxu0 0.0
        %2727 = vmatpush.msra.mxu0 0.0
        %2728 = vmatpush.msra.mxu0 0.0
        %2729 = vmatpush.msra.mxu0 0.0
        %2730 = vmatpush.msra.mxu0 %v2680
        %2731 = vmatmul.f32.gmra.mxu0 %v1653
        %v2732 = vpop.f32.mrf.mxu0
        %v2733 = vadd.f32 0.0, %v2732
        %2734 = vmatmul.f32.gmra.mxu0 %v1656
        %v2735 = vpop.f32.mrf.mxu0
        %v2736 = vadd.f32 0.0, %v2735
        %2737 = vmatmul.f32.gmra.mxu0 %v1659
        %v2738 = vpop.f32.mrf.mxu0
        %v2739 = vadd.f32 0.0, %v2738
        %2740 = vmatmul.f32.gmra.mxu0 %v1662
        %v2741 = vpop.f32.mrf.mxu0
        %v2742 = vadd.f32 0.0, %v2741
        %2743 = vdwg.mxu0
        %2744 = vmatpush.msra.mxu0 0.0
        %2745 = vmatpush.msra.mxu0 0.0
        %2746 = vmatpush.msra.mxu0 0.0
        %2747 = vmatpush.msra.mxu0 0.0
        %2748 = vmatpush.msra.mxu0 0.0
        %2749 = vmatpush.msra.mxu0 0.0
        %2750 = vmatpush.msra.mxu0 0.0
        %2751 = vmatpush.msra.mxu0 0.0
        %2752 = vmatpush.msra.mxu0 0.0
        %2753 = vmatpush.msra.mxu0 0.0
        %2754 = vmatpush.msra.mxu0 0.0
        %2755 = vmatpush.msra.mxu0 0.0
        %2756 = vmatpush.msra.mxu0 0.0
        %2757 = vmatpush.msra.mxu0 0.0
        %2758 = vmatpush.msra.mxu0 0.0
        %2759 = vmatpush.msra.mxu0 %v2714
        %2760 = vmatmul.f32.gmra.mxu0 %v1653
        %v2761 = vpop.f32.mrf.mxu0
        %v2762 = vadd.f32 0.0, %v2761
        %2763 = vmatmul.f32.gmra.mxu0 %v1656
        %v2764 = vpop.f32.mrf.mxu0
        %v2765 = vadd.f32 0.0, %v2764
        %2766 = vmatmul.f32.gmra.mxu0 %v1659
        %v2767 = vpop.f32.mrf.mxu0
        %v2768 = vadd.f32 0.0, %v2767
        %2769 = vmatmul.f32.gmra.mxu0 %v1662
        %v2770 = vpop.f32.mrf.mxu0
        %v2771 = vadd.f32 0.0, %v2770
        %2772 = vdwg.mxu0
        %v2773 = vmul.f32 %v810, %v2620
        %v2774 = vmul.f32 %v813, %v2621
        %v2775 = vmul.f32 %v816, %v2622
        %v2776 = vmul.f32 %v819, %v2623
        %v2777 = vmul.f32 %v2773, %v2762
        %v2778 = vmul.f32 %v2774, %v2765
        %v2779 = vmul.f32 %v2775, %v2768
        %v2780 = vmul.f32 %v2776, %v2771
        %v2781 = vmul.f32 %v2733, %v2762
        %v2782 = vmul.f32 %v2736, %v2765
        %v2783 = vmul.f32 %v2739, %v2768
        %v2784 = vmul.f32 %v2742, %v2771
        %v2785 = vmul.f32 %v2781, %v2620
        %v2786 = vmul.f32 %v2782, %v2621
        %v2787 = vmul.f32 %v2783, %v2622
        %v2788 = vmul.f32 %v2784, %v2623
        %v2789 = vsub.f32 %v2624, %v2785
        %v2790 = vsub.f32 %v2625, %v2786
        %v2791 = vsub.f32 %v2626, %v2787
        %v2792 = vsub.f32 %v2627, %v2788
        %v2793 = vmul.f32 %v810, %v2789
        %v2794 = vmul.f32 %v813, %v2790
        %v2795 = vmul.f32 %v816, %v2791
        %v2796 = vmul.f32 %v819, %v2792
        %v2797 = vadd.f32 %v2793, %v822
        %v2798 = vadd.f32 %v2794, %v825
        %v2799 = vadd.f32 %v2795, %v828
        %v2800 = vadd.f32 %v2796, %v831
        %2802 = vset.pattern.permute.xlu0 0
        %2803 = vperm.xlu0 %2802, %v2777
        %v2804 = vpop.permute.xlu0 %2803
        %2807 = vset.pattern.permute.xlu0 0
        %2808 = vperm.xlu0 %2807, %v2778
        %v2809 = vpop.permute.xlu0 %2808
        %2812 = vset.pattern.permute.xlu0 0
        %2813 = vperm.xlu0 %2812, %v2779
        %v2814 = vpop.permute.xlu0 %2813
        %2817 = vset.pattern.permute.xlu0 0
        %2818 = vperm.xlu0 %2817, %v2780
        %v2819 = vpop.permute.xlu0 %2818
        %v2821 = vmul.f32 %v2554, %v2804
        %v2822 = vmul.f32 %v2611, %v2804
        %v2823 = vmul.f32 %v2556, %v2809
        %v2824 = vmul.f32 %v2613, %v2809
        %v2825 = vmul.f32 %v2559, %v2814
        %v2826 = vmul.f32 %v2616, %v2814
        %v2827 = vmul.f32 %v2561, %v2819
        %v2828 = vmul.f32 %v2618, %v2819
        %2830 = vset.pattern.permute.xlu0 0
        %2831 = vperm.xlu0 %2830, %v2797
        %v2832 = vpop.permute.xlu0 %2831
        %2835 = vset.pattern.permute.xlu0 0
        %2836 = vperm.xlu0 %2835, %v2798
        %v2837 = vpop.permute.xlu0 %2836
        %2840 = vset.pattern.permute.xlu0 0
        %2841 = vperm.xlu0 %2840, %v2799
        %v2842 = vpop.permute.xlu0 %2841
        %2845 = vset.pattern.permute.xlu0 0
        %2846 = vperm.xlu0 %2845, %v2800
        %v2847 = vpop.permute.xlu0 %2846
        %v2849 = vadd.f32 %v2821, %v2832
        %v2850 = vadd.f32 %v2822, %v2832
        %v2851 = vadd.f32 %v2823, %v2837
        %v2852 = vadd.f32 %v2824, %v2837
        %v2853 = vadd.f32 %v2825, %v2842
        %v2854 = vadd.f32 %v2826, %v2842
        %v2855 = vadd.f32 %v2827, %v2847
        %v2856 = vadd.f32 %v2828, %v2847
        %v2857 = vxor.u32 %v2849, 2147483648
        %v2858 = vxor.u32 %v2850, 2147483648
        %v2859 = vxor.u32 %v2851, 2147483648
        %v2860 = vxor.u32 %v2852, 2147483648
        %v2861 = vxor.u32 %v2853, 2147483648
        %v2862 = vxor.u32 %v2854, 2147483648
        %v2863 = vxor.u32 %v2855, 2147483648
        %v2864 = vxor.u32 %v2856, 2147483648
        %v2865 = vmul.f32 %v2857, 1.442695
        %v2866 = vpow.pop %v2865
        %v2867 = vmul.f32 %v2858, 1.442695
        %v2868 = vpow.pop %v2867
        %v2869 = vmul.f32 %v2859, 1.442695
        %v2870 = vpow.pop %v2869
        %v2871 = vmul.f32 %v2860, 1.442695
        %v2872 = vpow.pop %v2871
        %v2873 = vmul.f32 %v2861, 1.442695
        %v2874 = vpow.pop %v2873
        %v2875 = vmul.f32 %v2862, 1.442695
        %v2876 = vpow.pop %v2875
        %v2877 = vmul.f32 %v2863, 1.442695
        %v2878 = vpow.pop %v2877
        %v2879 = vmul.f32 %v2864, 1.442695
        %v2880 = vpow.pop %v2879
        %v2881 = vadd.f32 %v2866, 1.0
        %v2882 = vadd.f32 %v2868, 1.0
        %v2883 = vadd.f32 %v2870, 1.0
        %v2884 = vadd.f32 %v2872, 1.0
        %v2885 = vadd.f32 %v2874, 1.0
        %v2886 = vadd.f32 %v2876, 1.0
        %v2887 = vadd.f32 %v2878, 1.0
        %v2888 = vadd.f32 %v2880, 1.0
        %v2889 = vrcp.pop %v2881
        %v2890 = vmul.f32 %v2881, %v2889
        %v2891 = vsub.f32 1.0, %v2890
        %v2892 = vmul.f32 %v2889, %v2891
        %v2893 = vadd.f32 %v2889, %v2892
        %vm2894 = vweird.f32 %v2881
        %vm2895 = vweird.f32 %v2889
        %vm2896 = vmor %vm2894, %vm2895
        %v2897 = vsel %vm2896, %v2889, %v2893
        %v2898 = vand.u32 2147483647, %v2881
        %vm2899 = vcmp.eq.f32.partialorder %v2898, 8.507059e+37
        %v2900 = vand.u32 %v2881, 2147483648
        %v2901 = vor.u32 1.1754944e-38, %v2900
        %v2902 = vsel %vm2899, %v2901, %v2897
        %v2903 = vmul.f32 1.0, %v2902
        %v2904 = vrcp.pop %v2882
        %v2905 = vmul.f32 %v2882, %v2904
        %v2906 = vsub.f32 1.0, %v2905
        %v2907 = vmul.f32 %v2904, %v2906
        %v2908 = vadd.f32 %v2904, %v2907
        %vm2909 = vweird.f32 %v2882
        %vm2910 = vweird.f32 %v2904
        %vm2911 = vmor %vm2909, %vm2910
        %v2912 = vsel %vm2911, %v2904, %v2908
        %v2913 = vand.u32 2147483647, %v2882
        %vm2914 = vcmp.eq.f32.partialorder %v2913, 8.507059e+37
        %v2915 = vand.u32 %v2882, 2147483648
        %v2916 = vor.u32 1.1754944e-38, %v2915
        %v2917 = vsel %vm2914, %v2916, %v2912
        %v2918 = vmul.f32 1.0, %v2917
        %v2919 = vrcp.pop %v2883
        %v2920 = vmul.f32 %v2883, %v2919
        %v2921 = vsub.f32 1.0, %v2920
        %v2922 = vmul.f32 %v2919, %v2921
        %v2923 = vadd.f32 %v2919, %v2922
        %vm2924 = vweird.f32 %v2883
        %vm2925 = vweird.f32 %v2919
        %vm2926 = vmor %vm2924, %vm2925
        %v2927 = vsel %vm2926, %v2919, %v2923
        %v2928 = vand.u32 2147483647, %v2883
        %vm2929 = vcmp.eq.f32.partialorder %v2928, 8.507059e+37
        %v2930 = vand.u32 %v2883, 2147483648
        %v2931 = vor.u32 1.1754944e-38, %v2930
        %v2932 = vsel %vm2929, %v2931, %v2927
        %v2933 = vmul.f32 1.0, %v2932
        %v2934 = vrcp.pop %v2884
        %v2935 = vmul.f32 %v2884, %v2934
        %v2936 = vsub.f32 1.0, %v2935
        %v2937 = vmul.f32 %v2934, %v2936
        %v2938 = vadd.f32 %v2934, %v2937
        %vm2939 = vweird.f32 %v2884
        %vm2940 = vweird.f32 %v2934
        %vm2941 = vmor %vm2939, %vm2940
        %v2942 = vsel %vm2941, %v2934, %v2938
        %v2943 = vand.u32 2147483647, %v2884
        %vm2944 = vcmp.eq.f32.partialorder %v2943, 8.507059e+37
        %v2945 = vand.u32 %v2884, 2147483648
        %v2946 = vor.u32 1.1754944e-38, %v2945
        %v2947 = vsel %vm2944, %v2946, %v2942
        %v2948 = vmul.f32 1.0, %v2947
        %v2949 = vrcp.pop %v2885
        %v2950 = vmul.f32 %v2885, %v2949
        %v2951 = vsub.f32 1.0, %v2950
        %v2952 = vmul.f32 %v2949, %v2951
        %v2953 = vadd.f32 %v2949, %v2952
        %vm2954 = vweird.f32 %v2885
        %vm2955 = vweird.f32 %v2949
        %vm2956 = vmor %vm2954, %vm2955
        %v2957 = vsel %vm2956, %v2949, %v2953
        %v2958 = vand.u32 2147483647, %v2885
        %vm2959 = vcmp.eq.f32.partialorder %v2958, 8.507059e+37
        %v2960 = vand.u32 %v2885, 2147483648
        %v2961 = vor.u32 1.1754944e-38, %v2960
        %v2962 = vsel %vm2959, %v2961, %v2957
        %v2963 = vmul.f32 1.0, %v2962
        %v2964 = vrcp.pop %v2886
        %v2965 = vmul.f32 %v2886, %v2964
        %v2966 = vsub.f32 1.0, %v2965
        %v2967 = vmul.f32 %v2964, %v2966
        %v2968 = vadd.f32 %v2964, %v2967
        %vm2969 = vweird.f32 %v2886
        %vm2970 = vweird.f32 %v2964
        %vm2971 = vmor %vm2969, %vm2970
        %v2972 = vsel %vm2971, %v2964, %v2968
        %v2973 = vand.u32 2147483647, %v2886
        %vm2974 = vcmp.eq.f32.partialorder %v2973, 8.507059e+37
        %v2975 = vand.u32 %v2886, 2147483648
        %v2976 = vor.u32 1.1754944e-38, %v2975
        %v2977 = vsel %vm2974, %v2976, %v2972
        %v2978 = vmul.f32 1.0, %v2977
        %v2979 = vrcp.pop %v2887
        %v2980 = vmul.f32 %v2887, %v2979
        %v2981 = vsub.f32 1.0, %v2980
        %v2982 = vmul.f32 %v2979, %v2981
        %v2983 = vadd.f32 %v2979, %v2982
        %vm2984 = vweird.f32 %v2887
        %vm2985 = vweird.f32 %v2979
        %vm2986 = vmor %vm2984, %vm2985
        %v2987 = vsel %vm2986, %v2979, %v2983
        %v2988 = vand.u32 2147483647, %v2887
        %vm2989 = vcmp.eq.f32.partialorder %v2988, 8.507059e+37
        %v2990 = vand.u32 %v2887, 2147483648
        %v2991 = vor.u32 1.1754944e-38, %v2990
        %v2992 = vsel %vm2989, %v2991, %v2987
        %v2993 = vmul.f32 1.0, %v2992
        %v2994 = vrcp.pop %v2888
        %v2995 = vmul.f32 %v2888, %v2994
        %v2996 = vsub.f32 1.0, %v2995
        %v2997 = vmul.f32 %v2994, %v2996
        %v2998 = vadd.f32 %v2994, %v2997
        %vm2999 = vweird.f32 %v2888
        %vm3000 = vweird.f32 %v2994
        %vm3001 = vmor %vm2999, %vm3000
        %v3002 = vsel %vm3001, %v2994, %v2998
        %v3003 = vand.u32 2147483647, %v2888
        %vm3004 = vcmp.eq.f32.partialorder %v3003, 8.507059e+37
        %v3005 = vand.u32 %v2888, 2147483648
        %v3006 = vor.u32 1.1754944e-38, %v3005
        %v3007 = vsel %vm3004, %v3006, %v3002
        %v3008 = vmul.f32 1.0, %v3007
        %v3009 = vmul.f32 %v2849, %v2903
        %v3010 = vmul.f32 %v2850, %v2918
        %v3011 = vmul.f32 %v2851, %v2933
        %v3012 = vmul.f32 %v2852, %v2948
        %v3013 = vmul.f32 %v2853, %v2963
        %v3014 = vmul.f32 %v2854, %v2978
        %v3015 = vmul.f32 %v2855, %v2993
        %v3016 = vmul.f32 %v2856, %v3008
        %v3017 = vadd.f32 %v649, %v3009
        %v3018 = vadd.f32 %v650, %v3010
        %v3019 = vadd.f32 %v651, %v3011
        %v3020 = vadd.f32 %v652, %v3012
        %v3021 = vadd.f32 %v653, %v3013
        %v3022 = vadd.f32 %v654, %v3014
        %v3023 = vadd.f32 %v655, %v3015
        %v3024 = vadd.f32 %v656, %v3016
        %v3025 = vld [vmem:[%s15] sm:$0xff]
        %v3026 = vld [vmem:[%s15 + $0x8] sm:$0xf]
        %v3027 = vld [vmem:[%s15 + $0xc] sm:$0xff]
        %v3028 = vld [vmem:[%s15 + $0x14] sm:$0xf]
        %v3029 = vld [vmem:[%s15 + $0x18] sm:$0xff]
        %v3030 = vld [vmem:[%s15 + $0x20] sm:$0xf]
        %v3031 = vld [vmem:[%s15 + $0x24] sm:$0xff]
        %v3032 = vld [vmem:[%s15 + $0x2c] sm:$0xf]
        %v3033 = vld [vmem:[%s15 + $0x30] sm:$0xff]
        %v3034 = vld [vmem:[%s15 + $0x38] sm:$0xf]
        %v3035 = vld [vmem:[%s15 + $0x3c] sm:$0xff]
        %v3036 = vld [vmem:[%s15 + $0x44] sm:$0xf]
        %v3037 = vld [vmem:[%s15 + $0x48] sm:$0xff]
        %v3038 = vld [vmem:[%s15 + $0x50] sm:$0xf]
        %v3039 = vld [vmem:[%s15 + $0x54] sm:$0xff]
        %v3040 = vld [vmem:[%s15 + $0x5c] sm:$0xf]
        %3041 = vrot.lane.b32.xlu0 %v3017, 17
        %v3042 = vpop.permute.xlu0 %3041
        %3043 = vrot.lane.b32.xlu0 %v3019, 17
        %v3044 = vpop.permute.xlu0 %3043
        %3045 = vrot.lane.b32.xlu0 %v3021, 17
        %v3046 = vpop.permute.xlu0 %3045
        %3047 = vrot.lane.b32.xlu0 %v3023, 17
        %v3048 = vpop.permute.xlu0 %3047
        %3049 = vrot.lane.b32.xlu0 %v3018, 17
        %v3050 = vpop.permute.xlu0 %3049
        %3051 = vrot.lane.b32.xlu0 %v3020, 17
        %v3052 = vpop.permute.xlu0 %3051
        %3053 = vrot.lane.b32.xlu0 %v3022, 17
        %v3054 = vpop.permute.xlu0 %3053
        %3055 = vrot.lane.b32.xlu0 %v3024, 17
        %v3056 = vpop.permute.xlu0 %3055
        %v3057 = vsel %vm859, %v3042, %v3050
        %v3058 = vsel %vm859, %v3044, %v3052
        %v3059 = vsel %vm859, %v3046, %v3054
        %v3060 = vsel %vm859, %v3048, %v3056
        %v3061 = vsel %vm859, %v3050, %v3042
        %v3062 = vsel %vm859, %v3052, %v3044
        %v3063 = vsel %vm859, %v3054, %v3046
        %v3064 = vsel %vm859, %v3056, %v3048
        %v3065 = vmul.f32 %v3061, %v870
        %v3066 = vmul.f32 %v3057, %v871
        %v3067 = vmul.f32 %v3062, %v870
        %v3068 = vmul.f32 %v3058, %v871
        %v3069 = vmul.f32 %v3063, %v870
        %v3070 = vmul.f32 %v3059, %v871
        %v3071 = vmul.f32 %v3064, %v870
        %v3072 = vmul.f32 %v3060, %v871
        %v3073 = vpack.c.bf16 %v3066, %v3065
        %v3074 = vpack.c.bf16 %v3068, %v3067
        %v3075 = vpack.c.bf16 %v3070, %v3069
        %v3076 = vpack.c.bf16 %v3072, %v3071
        %3077 = vrot.lane.b32.xlu0 %v3017, 16
        %v3078 = vpop.permute.xlu0 %3077
        %3079 = vrot.lane.b32.xlu0 %v3019, 16
        %v3080 = vpop.permute.xlu0 %3079
        %3081 = vrot.lane.b32.xlu0 %v3021, 16
        %v3082 = vpop.permute.xlu0 %3081
        %3083 = vrot.lane.b32.xlu0 %v3023, 16
        %v3084 = vpop.permute.xlu0 %3083
        %3085 = vrot.lane.b32.xlu0 %v3018, 16
        %v3086 = vpop.permute.xlu0 %3085
        %3087 = vrot.lane.b32.xlu0 %v3020, 16
        %v3088 = vpop.permute.xlu0 %3087
        %3089 = vrot.lane.b32.xlu0 %v3022, 16
        %v3090 = vpop.permute.xlu0 %3089
        %3091 = vrot.lane.b32.xlu0 %v3024, 16
        %v3092 = vpop.permute.xlu0 %3091
        %v3093 = vsel %vm902, %v3078, %v3086
        %v3094 = vsel %vm902, %v3080, %v3088
        %v3095 = vsel %vm902, %v3082, %v3090
        %v3096 = vsel %vm902, %v3084, %v3092
        %v3097 = vsel %vm902, %v3086, %v3078
        %v3098 = vsel %vm902, %v3088, %v3080
        %v3099 = vsel %vm902, %v3090, %v3082
        %v3100 = vsel %vm902, %v3092, %v3084
        %v3101 = vmul.f32 %v3097, %v914
        %v3102 = vmul.f32 %v3093, %v915
        %v3103 = vmul.f32 %v3098, %v914
        %v3104 = vmul.f32 %v3094, %v915
        %v3105 = vmul.f32 %v3099, %v914
        %v3106 = vmul.f32 %v3095, %v915
        %v3107 = vmul.f32 %v3100, %v914
        %v3108 = vmul.f32 %v3096, %v915
        %v3109 = vpack.c.bf16 %v3102, %v3101
        %v3110 = vpack.c.bf16 %v3104, %v3103
        %v3111 = vpack.c.bf16 %v3106, %v3105
        %v3112 = vpack.c.bf16 %v3108, %v3107
        %3113 = vrot.lane.b32.xlu0 %v3017, 15
        %v3114 = vpop.permute.xlu0 %3113
        %3115 = vrot.lane.b32.xlu0 %v3019, 15
        %v3116 = vpop.permute.xlu0 %3115
        %3117 = vrot.lane.b32.xlu0 %v3021, 15
        %v3118 = vpop.permute.xlu0 %3117
        %3119 = vrot.lane.b32.xlu0 %v3023, 15
        %v3120 = vpop.permute.xlu0 %3119
        %3121 = vrot.lane.b32.xlu0 %v3018, 15
        %v3122 = vpop.permute.xlu0 %3121
        %3123 = vrot.lane.b32.xlu0 %v3020, 15
        %v3124 = vpop.permute.xlu0 %3123
        %3125 = vrot.lane.b32.xlu0 %v3022, 15
        %v3126 = vpop.permute.xlu0 %3125
        %3127 = vrot.lane.b32.xlu0 %v3024, 15
        %v3128 = vpop.permute.xlu0 %3127
        %v3129 = vsel %vm946, %v3114, %v3122
        %v3130 = vsel %vm946, %v3116, %v3124
        %v3131 = vsel %vm946, %v3118, %v3126
        %v3132 = vsel %vm946, %v3120, %v3128
        %v3133 = vsel %vm946, %v3122, %v3114
        %v3134 = vsel %vm946, %v3124, %v3116
        %v3135 = vsel %vm946, %v3126, %v3118
        %v3136 = vsel %vm946, %v3128, %v3120
        %v3137 = vmul.f32 %v3133, %v958
        %v3138 = vmul.f32 %v3129, %v959
        %v3139 = vmul.f32 %v3134, %v958
        %v3140 = vmul.f32 %v3130, %v959
        %v3141 = vmul.f32 %v3135, %v958
        %v3142 = vmul.f32 %v3131, %v959
        %v3143 = vmul.f32 %v3136, %v958
        %v3144 = vmul.f32 %v3132, %v959
        %v3145 = vpack.c.bf16 %v3138, %v3137
        %v3146 = vpack.c.bf16 %v3140, %v3139
        %v3147 = vpack.c.bf16 %v3142, %v3141
        %v3148 = vpack.c.bf16 %v3144, %v3143
        %3149 = vrot.lane.b32.xlu0 %v3017, 1
        %v3150 = vpop.permute.xlu0 %3149
        %3151 = vrot.lane.b32.xlu0 %v3019, 1
        %v3152 = vpop.permute.xlu0 %3151
        %3153 = vrot.lane.b32.xlu0 %v3021, 1
        %v3154 = vpop.permute.xlu0 %3153
        %3155 = vrot.lane.b32.xlu0 %v3023, 1
        %v3156 = vpop.permute.xlu0 %3155
        %3157 = vrot.lane.b32.xlu0 %v3018, 1
        %v3158 = vpop.permute.xlu0 %3157
        %3159 = vrot.lane.b32.xlu0 %v3020, 1
        %v3160 = vpop.permute.xlu0 %3159
        %3161 = vrot.lane.b32.xlu0 %v3022, 1
        %v3162 = vpop.permute.xlu0 %3161
        %3163 = vrot.lane.b32.xlu0 %v3024, 1
        %v3164 = vpop.permute.xlu0 %3163
        %v3165 = vsel %vm990, %v3150, %v3158
        %v3166 = vsel %vm990, %v3152, %v3160
        %v3167 = vsel %vm990, %v3154, %v3162
        %v3168 = vsel %vm990, %v3156, %v3164
        %v3169 = vsel %vm990, %v3158, %v3150
        %v3170 = vsel %vm990, %v3160, %v3152
        %v3171 = vsel %vm990, %v3162, %v3154
        %v3172 = vsel %vm990, %v3164, %v3156
        %v3173 = vmul.f32 %v3169, %v1002
        %v3174 = vmul.f32 %v3165, %v1003
        %v3175 = vmul.f32 %v3170, %v1002
        %v3176 = vmul.f32 %v3166, %v1003
        %v3177 = vmul.f32 %v3171, %v1002
        %v3178 = vmul.f32 %v3167, %v1003
        %v3179 = vmul.f32 %v3172, %v1002
        %v3180 = vmul.f32 %v3168, %v1003
        %v3181 = vpack.c.bf16 %v3174, %v3173
        %v3182 = vpack.c.bf16 %v3176, %v3175
        %v3183 = vpack.c.bf16 %v3178, %v3177
        %v3184 = vpack.c.bf16 %v3180, %v3179
        %v3185 = vpack.c.bf16 %v3018, %v3017
        %v3186 = vpack.c.bf16 %v3020, %v3019
        %v3187 = vpack.c.bf16 %v3022, %v3021
        %v3188 = vpack.c.bf16 %v3024, %v3023
        %3189 = vrot.lane.b32.xlu0 %v3017, 127
        %v3190 = vpop.permute.xlu0 %3189
        %3191 = vrot.lane.b32.xlu0 %v3019, 127
        %v3192 = vpop.permute.xlu0 %3191
        %3193 = vrot.lane.b32.xlu0 %v3021, 127
        %v3194 = vpop.permute.xlu0 %3193
        %3195 = vrot.lane.b32.xlu0 %v3023, 127
        %v3196 = vpop.permute.xlu0 %3195
        %3197 = vrot.lane.b32.xlu0 %v3018, 127
        %v3198 = vpop.permute.xlu0 %3197
        %3199 = vrot.lane.b32.xlu0 %v3020, 127
        %v3200 = vpop.permute.xlu0 %3199
        %3201 = vrot.lane.b32.xlu0 %v3022, 127
        %v3202 = vpop.permute.xlu0 %3201
        %3203 = vrot.lane.b32.xlu0 %v3024, 127
        %v3204 = vpop.permute.xlu0 %3203
        %v3205 = vsel %vm1038, %v3190, %v3198
        %v3206 = vsel %vm1038, %v3192, %v3200
        %v3207 = vsel %vm1038, %v3194, %v3202
        %v3208 = vsel %vm1038, %v3196, %v3204
        %v3209 = vsel %vm1038, %v3198, %v3190
        %v3210 = vsel %vm1038, %v3200, %v3192
        %v3211 = vsel %vm1038, %v3202, %v3194
        %v3212 = vsel %vm1038, %v3204, %v3196
        %v3213 = vmul.f32 %v3205, %v1050
        %v3214 = vmul.f32 %v3209, %v1051
        %v3215 = vmul.f32 %v3206, %v1050
        %v3216 = vmul.f32 %v3210, %v1051
        %v3217 = vmul.f32 %v3207, %v1050
        %v3218 = vmul.f32 %v3211, %v1051
        %v3219 = vmul.f32 %v3208, %v1050
        %v3220 = vmul.f32 %v3212, %v1051
        %v3221 = vpack.c.bf16 %v3214, %v3213
        %v3222 = vpack.c.bf16 %v3216, %v3215
        %v3223 = vpack.c.bf16 %v3218, %v3217
        %v3224 = vpack.c.bf16 %v3220, %v3219
        %3225 = vrot.lane.b32.xlu0 %v3017, 113
        %v3226 = vpop.permute.xlu0 %3225
        %3227 = vrot.lane.b32.xlu0 %v3019, 113
        %v3228 = vpop.permute.xlu0 %3227
        %3229 = vrot.lane.b32.xlu0 %v3021, 113
        %v3230 = vpop.permute.xlu0 %3229
        %3231 = vrot.lane.b32.xlu0 %v3023, 113
        %v3232 = vpop.permute.xlu0 %3231
        %3233 = vrot.lane.b32.xlu0 %v3018, 113
        %v3234 = vpop.permute.xlu0 %3233
        %3235 = vrot.lane.b32.xlu0 %v3020, 113
        %v3236 = vpop.permute.xlu0 %3235
        %3237 = vrot.lane.b32.xlu0 %v3022, 113
        %v3238 = vpop.permute.xlu0 %3237
        %3239 = vrot.lane.b32.xlu0 %v3024, 113
        %v3240 = vpop.permute.xlu0 %3239
        %v3241 = vsel %vm1082, %v3226, %v3234
        %v3242 = vsel %vm1082, %v3228, %v3236
        %v3243 = vsel %vm1082, %v3230, %v3238
        %v3244 = vsel %vm1082, %v3232, %v3240
        %v3245 = vsel %vm1082, %v3234, %v3226
        %v3246 = vsel %vm1082, %v3236, %v3228
        %v3247 = vsel %vm1082, %v3238, %v3230
        %v3248 = vsel %vm1082, %v3240, %v3232
        %v3249 = vmul.f32 %v3241, %v1094
        %v3250 = vmul.f32 %v3245, %v1095
        %v3251 = vmul.f32 %v3242, %v1094
        %v3252 = vmul.f32 %v3246, %v1095
        %v3253 = vmul.f32 %v3243, %v1094
        %v3254 = vmul.f32 %v3247, %v1095
        %v3255 = vmul.f32 %v3244, %v1094
        %v3256 = vmul.f32 %v3248, %v1095
        %v3257 = vpack.c.bf16 %v3250, %v3249
        %v3258 = vpack.c.bf16 %v3252, %v3251
        %v3259 = vpack.c.bf16 %v3254, %v3253
        %v3260 = vpack.c.bf16 %v3256, %v3255
        %3261 = vrot.lane.b32.xlu0 %v3017, 112
        %v3262 = vpop.permute.xlu0 %3261
        %3263 = vrot.lane.b32.xlu0 %v3019, 112
        %v3264 = vpop.permute.xlu0 %3263
        %3265 = vrot.lane.b32.xlu0 %v3021, 112
        %v3266 = vpop.permute.xlu0 %3265
        %3267 = vrot.lane.b32.xlu0 %v3023, 112
        %v3268 = vpop.permute.xlu0 %3267
        %3269 = vrot.lane.b32.xlu0 %v3018, 112
        %v3270 = vpop.permute.xlu0 %3269
        %3271 = vrot.lane.b32.xlu0 %v3020, 112
        %v3272 = vpop.permute.xlu0 %3271
        %3273 = vrot.lane.b32.xlu0 %v3022, 112
        %v3274 = vpop.permute.xlu0 %3273
        %3275 = vrot.lane.b32.xlu0 %v3024, 112
        %v3276 = vpop.permute.xlu0 %3275
        %v3277 = vsel %vm1126, %v3262, %v3270
        %v3278 = vsel %vm1126, %v3264, %v3272
        %v3279 = vsel %vm1126, %v3266, %v3274
        %v3280 = vsel %vm1126, %v3268, %v3276
        %v3281 = vsel %vm1126, %v3270, %v3262
        %v3282 = vsel %vm1126, %v3272, %v3264
        %v3283 = vsel %vm1126, %v3274, %v3266
        %v3284 = vsel %vm1126, %v3276, %v3268
        %v3285 = vmul.f32 %v3277, %v1138
        %v3286 = vmul.f32 %v3281, %v1139
        %v3287 = vmul.f32 %v3278, %v1138
        %v3288 = vmul.f32 %v3282, %v1139
        %v3289 = vmul.f32 %v3279, %v1138
        %v3290 = vmul.f32 %v3283, %v1139
        %v3291 = vmul.f32 %v3280, %v1138
        %v3292 = vmul.f32 %v3284, %v1139
        %v3293 = vpack.c.bf16 %v3286, %v3285
        %v3294 = vpack.c.bf16 %v3288, %v3287
        %v3295 = vpack.c.bf16 %v3290, %v3289
        %v3296 = vpack.c.bf16 %v3292, %v3291
        %3297 = vrot.lane.b32.xlu0 %v3017, 111
        %v3298 = vpop.permute.xlu0 %3297
        %3299 = vrot.lane.b32.xlu0 %v3019, 111
        %v3300 = vpop.permute.xlu0 %3299
        %3301 = vrot.lane.b32.xlu0 %v3021, 111
        %v3302 = vpop.permute.xlu0 %3301
        %3303 = vrot.lane.b32.xlu0 %v3023, 111
        %v3304 = vpop.permute.xlu0 %3303
        %3305 = vrot.lane.b32.xlu0 %v3018, 111
        %v3306 = vpop.permute.xlu0 %3305
        %3307 = vrot.lane.b32.xlu0 %v3020, 111
        %v3308 = vpop.permute.xlu0 %3307
        %3309 = vrot.lane.b32.xlu0 %v3022, 111
        %v3310 = vpop.permute.xlu0 %3309
        %3311 = vrot.lane.b32.xlu0 %v3024, 111
        %v3312 = vpop.permute.xlu0 %3311
        %v3313 = vsel %vm1170, %v3298, %v3306
        %v3314 = vsel %vm1170, %v3300, %v3308
        %v3315 = vsel %vm1170, %v3302, %v3310
        %v3316 = vsel %vm1170, %v3304, %v3312
        %v3317 = vsel %vm1170, %v3306, %v3298
        %v3318 = vsel %vm1170, %v3308, %v3300
        %v3319 = vsel %vm1170, %v3310, %v3302
        %v3320 = vsel %vm1170, %v3312, %v3304
        %v3321 = vmul.f32 %v3313, %v1182
        %v3322 = vmul.f32 %v3317, %v1183
        %v3323 = vmul.f32 %v3314, %v1182
        %v3324 = vmul.f32 %v3318, %v1183
        %v3325 = vmul.f32 %v3315, %v1182
        %v3326 = vmul.f32 %v3319, %v1183
        %v3327 = vmul.f32 %v3316, %v1182
        %v3328 = vmul.f32 %v3320, %v1183
        %v3329 = vpack.c.bf16 %v3322, %v3321
        %v3330 = vpack.c.bf16 %v3324, %v3323
        %v3331 = vpack.c.bf16 %v3326, %v3325
        %v3332 = vpack.c.bf16 %v3328, %v3327
        %v3337 = vunpack.c.l.b16 %v3073
        %v3338 = vunpack.c.h.b16 %v3073
        %v3339 = vunpack.c.l.b16 %v3074
        %v3340 = vunpack.c.h.b16 %v3074
        %v3341 = vunpack.c.l.b16 %v3075
        %v3342 = vunpack.c.h.b16 %v3075
        %v3343 = vunpack.c.l.b16 %v3076
        %v3344 = vunpack.c.h.b16 %v3076
        %v3345 = vpack.c.b16 %v3339, %v3337
        %v3346 = vpack.c.b16 %v3340, %v3338
        %v3347 = vpack.c.b16 %v3343, %v3341
        %v3348 = vpack.c.b16 %v3344, %v3342
        %v3357 = vunpack.c.l.b16 %v3109
        %v3358 = vunpack.c.h.b16 %v3109
        %v3359 = vunpack.c.l.b16 %v3110
        %v3360 = vunpack.c.h.b16 %v3110
        %v3361 = vunpack.c.l.b16 %v3111
        %v3362 = vunpack.c.h.b16 %v3111
        %v3363 = vunpack.c.l.b16 %v3112
        %v3364 = vunpack.c.h.b16 %v3112
        %v3365 = vpack.c.b16 %v3359, %v3357
        %v3366 = vpack.c.b16 %v3360, %v3358
        %v3367 = vpack.c.b16 %v3363, %v3361
        %v3368 = vpack.c.b16 %v3364, %v3362
        %v3377 = vunpack.c.l.b16 %v3145
        %v3378 = vunpack.c.h.b16 %v3145
        %v3379 = vunpack.c.l.b16 %v3146
        %v3380 = vunpack.c.h.b16 %v3146
        %v3381 = vunpack.c.l.b16 %v3147
        %v3382 = vunpack.c.h.b16 %v3147
        %v3383 = vunpack.c.l.b16 %v3148
        %v3384 = vunpack.c.h.b16 %v3148
        %v3385 = vpack.c.b16 %v3379, %v3377
        %v3386 = vpack.c.b16 %v3380, %v3378
        %v3387 = vpack.c.b16 %v3383, %v3381
        %v3388 = vpack.c.b16 %v3384, %v3382
        %v3397 = vunpack.c.l.b16 %v3181
        %v3398 = vunpack.c.h.b16 %v3181
        %v3399 = vunpack.c.l.b16 %v3182
        %v3400 = vunpack.c.h.b16 %v3182
        %v3401 = vunpack.c.l.b16 %v3183
        %v3402 = vunpack.c.h.b16 %v3183
        %v3403 = vunpack.c.l.b16 %v3184
        %v3404 = vunpack.c.h.b16 %v3184
        %v3405 = vpack.c.b16 %v3399, %v3397
        %v3406 = vpack.c.b16 %v3400, %v3398
        %v3407 = vpack.c.b16 %v3403, %v3401
        %v3408 = vpack.c.b16 %v3404, %v3402
        %v3417 = vunpack.c.l.b16 %v3185
        %v3418 = vunpack.c.h.b16 %v3185
        %v3419 = vunpack.c.l.b16 %v3186
        %v3420 = vunpack.c.h.b16 %v3186
        %v3421 = vunpack.c.l.b16 %v3187
        %v3422 = vunpack.c.h.b16 %v3187
        %v3423 = vunpack.c.l.b16 %v3188
        %v3424 = vunpack.c.h.b16 %v3188
        %v3425 = vpack.c.b16 %v3419, %v3417
        %v3426 = vpack.c.b16 %v3420, %v3418
        %v3427 = vpack.c.b16 %v3423, %v3421
        %v3428 = vpack.c.b16 %v3424, %v3422
        %v3437 = vunpack.c.l.b16 %v3221
        %v3438 = vunpack.c.h.b16 %v3221
        %v3439 = vunpack.c.l.b16 %v3222
        %v3440 = vunpack.c.h.b16 %v3222
        %v3441 = vunpack.c.l.b16 %v3223
        %v3442 = vunpack.c.h.b16 %v3223
        %v3443 = vunpack.c.l.b16 %v3224
        %v3444 = vunpack.c.h.b16 %v3224
        %v3445 = vpack.c.b16 %v3439, %v3437
        %v3446 = vpack.c.b16 %v3440, %v3438
        %v3447 = vpack.c.b16 %v3443, %v3441
        %v3448 = vpack.c.b16 %v3444, %v3442
        %v3457 = vunpack.c.l.b16 %v3257
        %v3458 = vunpack.c.h.b16 %v3257
        %v3459 = vunpack.c.l.b16 %v3258
        %v3460 = vunpack.c.h.b16 %v3258
        %v3461 = vunpack.c.l.b16 %v3259
        %v3462 = vunpack.c.h.b16 %v3259
        %v3463 = vunpack.c.l.b16 %v3260
        %v3464 = vunpack.c.h.b16 %v3260
        %v3465 = vpack.c.b16 %v3459, %v3457
        %v3466 = vpack.c.b16 %v3460, %v3458
        %v3467 = vpack.c.b16 %v3463, %v3461
        %v3468 = vpack.c.b16 %v3464, %v3462
        %v3477 = vunpack.c.l.b16 %v3293
        %v3478 = vunpack.c.h.b16 %v3293
        %v3479 = vunpack.c.l.b16 %v3294
        %v3480 = vunpack.c.h.b16 %v3294
        %v3481 = vunpack.c.l.b16 %v3295
        %v3482 = vunpack.c.h.b16 %v3295
        %v3483 = vunpack.c.l.b16 %v3296
        %v3484 = vunpack.c.h.b16 %v3296
        %v3485 = vpack.c.b16 %v3479, %v3477
        %v3486 = vpack.c.b16 %v3480, %v3478
        %v3487 = vpack.c.b16 %v3483, %v3481
        %v3488 = vpack.c.b16 %v3484, %v3482
        %v3497 = vunpack.c.l.b16 %v3329
        %v3498 = vunpack.c.h.b16 %v3329
        %v3499 = vunpack.c.l.b16 %v3330
        %v3500 = vunpack.c.h.b16 %v3330
        %v3501 = vunpack.c.l.b16 %v3331
        %v3502 = vunpack.c.h.b16 %v3331
        %v3503 = vunpack.c.l.b16 %v3332
        %v3504 = vunpack.c.h.b16 %v3332
        %v3505 = vpack.c.b16 %v3499, %v3497
        %v3506 = vpack.c.b16 %v3500, %v3498
        %v3507 = vpack.c.b16 %v3503, %v3501
        %v3508 = vpack.c.b16 %v3504, %v3502
        %v3513 = vld [vmem:[%s16] sm:$0xff]
        %v3514 = vld [vmem:[%s16 + $0x8] sm:$0xff]
        %v3515 = vld [vmem:[%s16 + $0x10] sm:$0xff]
        %v3516 = vld [vmem:[%s16 + $0x18] sm:$0xff]
        %v3517 = vld [vmem:[%s16 + $0x20] sm:$0xff]
        %v3518 = vld [vmem:[%s16 + $0x28] sm:$0xff]
        %v3519 = vld [vmem:[%s16 + $0x30] sm:$0xff]
        %v3520 = vld [vmem:[%s16 + $0x38] sm:$0xff]
        %3522 = vset.pattern.permute.xlu0 0
        %3523 = vperm.xlu0 %3522, %v3513
        %v3524 = vpop.permute.xlu0 %3523
        %3527 = vset.pattern.permute.xlu0 0
        %3528 = vperm.xlu0 %3527, %v3514
        %v3529 = vpop.permute.xlu0 %3528
        %3532 = vset.pattern.permute.xlu0 0
        %3533 = vperm.xlu0 %3532, %v3515
        %v3534 = vpop.permute.xlu0 %3533
        %3537 = vset.pattern.permute.xlu0 0
        %3538 = vperm.xlu0 %3537, %v3516
        %v3539 = vpop.permute.xlu0 %3538
        %3542 = vset.pattern.permute.xlu0 0
        %3543 = vperm.xlu0 %3542, %v3517
        %v3544 = vpop.permute.xlu0 %3543
        %3547 = vset.pattern.permute.xlu0 0
        %3548 = vperm.xlu0 %3547, %v3518
        %v3549 = vpop.permute.xlu0 %3548
        %3552 = vset.pattern.permute.xlu0 0
        %3553 = vperm.xlu0 %3552, %v3519
        %v3554 = vpop.permute.xlu0 %3553
        %3557 = vset.pattern.permute.xlu0 0
        %3558 = vperm.xlu0 %3557, %v3520
        %v3559 = vpop.permute.xlu0 %3558
        %v3577 = vunpack.c.l.b16 %v3025
        %v3578 = vunpack.c.h.b16 %v3025
        %v3579 = vunpack.c.l.b16 %v3026
        %v3580 = vunpack.c.l.b16 %v3027
        %v3581 = vunpack.c.h.b16 %v3027
        %v3582 = vunpack.c.l.b16 %v3028
        %v3583 = vunpack.c.l.b16 %v3029
        %v3584 = vunpack.c.h.b16 %v3029
        %v3585 = vunpack.c.l.b16 %v3030
        %v3586 = vunpack.c.l.b16 %v3031
        %v3587 = vunpack.c.h.b16 %v3031
        %v3588 = vunpack.c.l.b16 %v3032
        %v3589 = vunpack.c.l.b16 %v3033
        %v3590 = vunpack.c.h.b16 %v3033
        %v3591 = vunpack.c.l.b16 %v3034
        %v3592 = vunpack.c.l.b16 %v3035
        %v3593 = vunpack.c.h.b16 %v3035
        %v3594 = vunpack.c.l.b16 %v3036
        %v3595 = vunpack.c.l.b16 %v3037
        %v3596 = vunpack.c.h.b16 %v3037
        %v3597 = vunpack.c.l.b16 %v3038
        %v3598 = vunpack.c.l.b16 %v3039
        %v3599 = vunpack.c.h.b16 %v3039
        %v3600 = vunpack.c.l.b16 %v3040
        %v3601 = vpack.c.b16 %v3580, %v3577
        %v3602 = vpack.c.b16 %v3581, %v3578
        %v3603 = vpack.c.b16 %v3582, %v3579
        %v3604 = vpack.c.b16 %v3586, %v3583
        %v3605 = vpack.c.b16 %v3587, %v3584
        %v3606 = vpack.c.b16 %v3588, %v3585
        %v3607 = vpack.c.b16 %v3592, %v3589
        %v3608 = vpack.c.b16 %v3593, %v3590
        %v3609 = vpack.c.b16 %v3594, %v3591
        %v3610 = vpack.c.b16 %v3598, %v3595
        %v3611 = vpack.c.b16 %v3599, %v3596
        %v3612 = vpack.c.b16 %v3600, %v3597
        %v3622 = vsel %vm1432, %v3603, 0
        %v3625 = vsel %vm1432, %v3606, 0
        %v3628 = vsel %vm1432, %v3609, 0
        %v3631 = vsel %vm1432, %v3612, 0
        %3633 = vmatpush.bf16.msra.mxu0 %v3407
        %3634 = vmatpush.bf16.msra.mxu0 %v3405
        %3635 = vmatpush.bf16.msra.mxu0 %v3387
        %3636 = vmatpush.bf16.msra.mxu0 %v3385
        %3637 = vmatpush.bf16.msra.mxu0 %v3367
        %3638 = vmatpush.bf16.msra.mxu0 %v3365
        %3639 = vmatpush.bf16.msra.mxu0 %v3347
        %3640 = vmatpush.bf16.msra.mxu0 %v3345
        %3641 = vmatmul.bf16.gmra.mxu0 %v3601
        %v3642 = vpop.f32.mrf.mxu0
        %v3643 = vadd.f32 %v3524, %v3642
        %v3644 = vpop.f32.mrf.mxu0
        %v3645 = vadd.f32 %v3529, %v3644
        %3646 = vmatmul.bf16.gmra.mxu0 %v3604
        %v3647 = vpop.f32.mrf.mxu0
        %v3648 = vadd.f32 %v3534, %v3647
        %v3649 = vpop.f32.mrf.mxu0
        %v3650 = vadd.f32 %v3539, %v3649
        %3651 = vmatmul.bf16.gmra.mxu0 %v3607
        %v3652 = vpop.f32.mrf.mxu0
        %v3653 = vadd.f32 %v3544, %v3652
        %v3654 = vpop.f32.mrf.mxu0
        %v3655 = vadd.f32 %v3549, %v3654
        %3656 = vmatmul.bf16.gmra.mxu0 %v3610
        %v3657 = vpop.f32.mrf.mxu0
        %v3658 = vadd.f32 %v3554, %v3657
        %v3659 = vpop.f32.mrf.mxu0
        %v3660 = vadd.f32 %v3559, %v3659
        %3661 = vdwg.mxu0
        %3662 = vmatpush.bf16.msra.mxu0 %v3487
        %3663 = vmatpush.bf16.msra.mxu0 %v3485
        %3664 = vmatpush.bf16.msra.mxu0 %v3467
        %3665 = vmatpush.bf16.msra.mxu0 %v3465
        %3666 = vmatpush.bf16.msra.mxu0 %v3447
        %3667 = vmatpush.bf16.msra.mxu0 %v3445
        %3668 = vmatpush.bf16.msra.mxu0 %v3427
        %3669 = vmatpush.bf16.msra.mxu0 %v3425
        %3670 = vmatmul.bf16.gmra.mxu0 %v3602
        %v3671 = vpop.f32.mrf.mxu0
        %v3672 = vadd.f32 %v3643, %v3671
        %v3673 = vpop.f32.mrf.mxu0
        %v3674 = vadd.f32 %v3645, %v3673
        %3675 = vmatmul.bf16.gmra.mxu0 %v3605
        %v3676 = vpop.f32.mrf.mxu0
        %v3677 = vadd.f32 %v3648, %v3676
        %v3678 = vpop.f32.mrf.mxu0
        %v3679 = vadd.f32 %v3650, %v3678
        %3680 = vmatmul.bf16.gmra.mxu0 %v3608
        %v3681 = vpop.f32.mrf.mxu0
        %v3682 = vadd.f32 %v3653, %v3681
        %v3683 = vpop.f32.mrf.mxu0
        %v3684 = vadd.f32 %v3655, %v3683
        %3685 = vmatmul.bf16.gmra.mxu0 %v3611
        %v3686 = vpop.f32.mrf.mxu0
        %v3687 = vadd.f32 %v3658, %v3686
        %v3688 = vpop.f32.mrf.mxu0
        %v3689 = vadd.f32 %v3660, %v3688
        %3690 = vdwg.mxu0
        %3691 = vmatpush.bf16.msra.mxu0 0
        %3692 = vmatpush.bf16.msra.mxu0 0
        %3693 = vmatpush.bf16.msra.mxu0 0
        %3694 = vmatpush.bf16.msra.mxu0 0
        %3695 = vmatpush.bf16.msra.mxu0 0
        %3696 = vmatpush.bf16.msra.mxu0 0
        %3697 = vmatpush.bf16.msra.mxu0 %v3507
        %3698 = vmatpush.bf16.msra.mxu0 %v3505
        %3699 = vmatmul.bf16.gmra.mxu0 %v3622
        %v3700 = vpop.f32.mrf.mxu0
        %v3701 = vadd.f32 %v3672, %v3700
        %v3702 = vpop.f32.mrf.mxu0
        %v3703 = vadd.f32 %v3674, %v3702
        %3704 = vmatmul.bf16.gmra.mxu0 %v3625
        %v3705 = vpop.f32.mrf.mxu0
        %v3706 = vadd.f32 %v3677, %v3705
        %v3707 = vpop.f32.mrf.mxu0
        %v3708 = vadd.f32 %v3679, %v3707
        %3709 = vmatmul.bf16.gmra.mxu0 %v3628
        %v3710 = vpop.f32.mrf.mxu0
        %v3711 = vadd.f32 %v3682, %v3710
        %v3712 = vpop.f32.mrf.mxu0
        %v3713 = vadd.f32 %v3684, %v3712
        %3714 = vmatmul.bf16.gmra.mxu0 %v3631
        %v3715 = vpop.f32.mrf.mxu0
        %v3716 = vadd.f32 %v3687, %v3715
        %v3717 = vpop.f32.mrf.mxu0
        %v3718 = vadd.f32 %v3689, %v3717
        %3719 = vdwg.mxu0
        %3720 = vmatpush.bf16.msra.mxu0 %v3408
        %3721 = vmatpush.bf16.msra.mxu0 %v3406
        %3722 = vmatpush.bf16.msra.mxu0 %v3388
        %3723 = vmatpush.bf16.msra.mxu0 %v3386
        %3724 = vmatpush.bf16.msra.mxu0 %v3368
        %3725 = vmatpush.bf16.msra.mxu0 %v3366
        %3726 = vmatpush.bf16.msra.mxu0 %v3348
        %3727 = vmatpush.bf16.msra.mxu0 %v3346
        %3728 = vmatmul.bf16.gmra.mxu0 %v3601
        %v3729 = vpop.f32.mrf.mxu0
        %v3730 = vadd.f32 %v3524, %v3729
        %v3731 = vpop.f32.mrf.mxu0
        %v3732 = vadd.f32 %v3529, %v3731
        %3733 = vmatmul.bf16.gmra.mxu0 %v3604
        %v3734 = vpop.f32.mrf.mxu0
        %v3735 = vadd.f32 %v3534, %v3734
        %v3736 = vpop.f32.mrf.mxu0
        %v3737 = vadd.f32 %v3539, %v3736
        %3738 = vmatmul.bf16.gmra.mxu0 %v3607
        %v3739 = vpop.f32.mrf.mxu0
        %v3740 = vadd.f32 %v3544, %v3739
        %v3741 = vpop.f32.mrf.mxu0
        %v3742 = vadd.f32 %v3549, %v3741
        %3743 = vmatmul.bf16.gmra.mxu0 %v3610
        %v3744 = vpop.f32.mrf.mxu0
        %v3745 = vadd.f32 %v3554, %v3744
        %v3746 = vpop.f32.mrf.mxu0
        %v3747 = vadd.f32 %v3559, %v3746
        %3748 = vdwg.mxu0
        %3749 = vmatpush.bf16.msra.mxu0 %v3488
        %3750 = vmatpush.bf16.msra.mxu0 %v3486
        %3751 = vmatpush.bf16.msra.mxu0 %v3468
        %3752 = vmatpush.bf16.msra.mxu0 %v3466
        %3753 = vmatpush.bf16.msra.mxu0 %v3448
        %3754 = vmatpush.bf16.msra.mxu0 %v3446
        %3755 = vmatpush.bf16.msra.mxu0 %v3428
        %3756 = vmatpush.bf16.msra.mxu0 %v3426
        %3757 = vmatmul.bf16.gmra.mxu0 %v3602
        %v3758 = vpop.f32.mrf.mxu0
        %v3759 = vadd.f32 %v3730, %v3758
        %v3760 = vpop.f32.mrf.mxu0
        %v3761 = vadd.f32 %v3732, %v3760
        %3762 = vmatmul.bf16.gmra.mxu0 %v3605
        %v3763 = vpop.f32.mrf.mxu0
        %v3764 = vadd.f32 %v3735, %v3763
        %v3765 = vpop.f32.mrf.mxu0
        %v3766 = vadd.f32 %v3737, %v3765
        %3767 = vmatmul.bf16.gmra.mxu0 %v3608
        %v3768 = vpop.f32.mrf.mxu0
        %v3769 = vadd.f32 %v3740, %v3768
        %v3770 = vpop.f32.mrf.mxu0
        %v3771 = vadd.f32 %v3742, %v3770
        %3772 = vmatmul.bf16.gmra.mxu0 %v3611
        %v3773 = vpop.f32.mrf.mxu0
        %v3774 = vadd.f32 %v3745, %v3773
        %v3775 = vpop.f32.mrf.mxu0
        %v3776 = vadd.f32 %v3747, %v3775
        %3777 = vdwg.mxu0
        %3778 = vmatpush.bf16.msra.mxu0 0
        %3779 = vmatpush.bf16.msra.mxu0 0
        %3780 = vmatpush.bf16.msra.mxu0 0
        %3781 = vmatpush.bf16.msra.mxu0 0
        %3782 = vmatpush.bf16.msra.mxu0 0
        %3783 = vmatpush.bf16.msra.mxu0 0
        %3784 = vmatpush.bf16.msra.mxu0 %v3508
        %3785 = vmatpush.bf16.msra.mxu0 %v3506
        %3786 = vmatmul.bf16.gmra.mxu0 %v3622
        %v3787 = vpop.f32.mrf.mxu0
        %v3788 = vadd.f32 %v3759, %v3787
        %v3789 = vpop.f32.mrf.mxu0
        %v3790 = vadd.f32 %v3761, %v3789
        %3791 = vmatmul.bf16.gmra.mxu0 %v3625
        %v3792 = vpop.f32.mrf.mxu0
        %v3793 = vadd.f32 %v3764, %v3792
        %v3794 = vpop.f32.mrf.mxu0
        %v3795 = vadd.f32 %v3766, %v3794
        %3796 = vmatmul.bf16.gmra.mxu0 %v3628
        %v3797 = vpop.f32.mrf.mxu0
        %v3798 = vadd.f32 %v3769, %v3797
        %v3799 = vpop.f32.mrf.mxu0
        %v3800 = vadd.f32 %v3771, %v3799
        %3801 = vmatmul.bf16.gmra.mxu0 %v3631
        %v3802 = vpop.f32.mrf.mxu0
        %v3803 = vadd.f32 %v3774, %v3802
        %v3804 = vpop.f32.mrf.mxu0
        %v3805 = vadd.f32 %v3776, %v3804
        %3806 = vdwg.mxu0
        %v3807 = vld [vmem:[%s19] sm:$0xff]
        %v3808 = vld [vmem:[%s19 + $0x8] sm:$0xff]
        %v3809 = vld [vmem:[%s19 + $0x10] sm:$0xff]
        %v3810 = vld [vmem:[%s19 + $0x18] sm:$0xff]
        %v3811 = vld [vmem:[%s19 + $0x20] sm:$0xff]
        %v3812 = vld [vmem:[%s19 + $0x28] sm:$0xff]
        %v3813 = vld [vmem:[%s19 + $0x30] sm:$0xff]
        %v3814 = vld [vmem:[%s19 + $0x38] sm:$0xff]
        %v3815 = vld [vmem:[%s19 + $0x40] sm:$0xff]
        %v3816 = vld [vmem:[%s19 + $0x48] sm:$0xff]
        %v3817 = vld [vmem:[%s19 + $0x50] sm:$0xff]
        %v3818 = vld [vmem:[%s19 + $0x58] sm:$0xff]
        %v3819 = vld [vmem:[%s19 + $0x60] sm:$0xff]
        %v3820 = vld [vmem:[%s19 + $0x68] sm:$0xff]
        %v3821 = vld [vmem:[%s19 + $0x70] sm:$0xff]
        %v3822 = vld [vmem:[%s19 + $0x78] sm:$0xff]
        %v3823 = vld [vmem:[%s19 + $0x80] sm:$0xff]
        %v3824 = vld [vmem:[%s19 + $0x88] sm:$0xff]
        %v3825 = vld [vmem:[%s19 + $0x90] sm:$0xff]
        %v3826 = vld [vmem:[%s19 + $0x98] sm:$0xff]
        %v3827 = vld [vmem:[%s19 + $0xa0] sm:$0xff]
        %v3828 = vld [vmem:[%s19 + $0xa8] sm:$0xff]
        %v3829 = vld [vmem:[%s19 + $0xb0] sm:$0xff]
        %v3830 = vld [vmem:[%s19 + $0xb8] sm:$0xff]
        %v3831 = vld [vmem:[%s19 + $0xc0] sm:$0xff]
        %v3832 = vld [vmem:[%s19 + $0xc8] sm:$0xff]
        %v3833 = vld [vmem:[%s19 + $0xd0] sm:$0xff]
        %v3834 = vld [vmem:[%s19 + $0xd8] sm:$0xff]
        %v3835 = vld [vmem:[%s19 + $0xe0] sm:$0xff]
        %v3836 = vld [vmem:[%s19 + $0xe8] sm:$0xff]
        %v3837 = vld [vmem:[%s19 + $0xf0] sm:$0xff]
        %v3838 = vld [vmem:[%s19 + $0xf8] sm:$0xff]
        %3839 = vmatpush.msra.mxu0 %v3822
        %3840 = vmatpush.msra.mxu0 %v3821
        %3841 = vmatpush.msra.mxu0 %v3820
        %3842 = vmatpush.msra.mxu0 %v3819
        %3843 = vmatpush.msra.mxu0 %v3818
        %3844 = vmatpush.msra.mxu0 %v3817
        %3845 = vmatpush.msra.mxu0 %v3816
        %3846 = vmatpush.msra.mxu0 %v3815
        %3847 = vmatpush.msra.mxu0 %v3814
        %3848 = vmatpush.msra.mxu0 %v3813
        %3849 = vmatpush.msra.mxu0 %v3812
        %3850 = vmatpush.msra.mxu0 %v3811
        %3851 = vmatpush.msra.mxu0 %v3810
        %3852 = vmatpush.msra.mxu0 %v3809
        %3853 = vmatpush.msra.mxu0 %v3808
        %3854 = vmatpush.msra.mxu0 %v3807
        %3855 = vmatmul.f32.gmra.mxu0 %v3701
        %v3856 = vpop.f32.mrf.mxu0
        %v3857 = vadd.f32 0.0, %v3856
        %3858 = vmatmul.f32.gmra.mxu0 %v3703
        %v3859 = vpop.f32.mrf.mxu0
        %v3860 = vadd.f32 0.0, %v3859
        %3861 = vmatmul.f32.gmra.mxu0 %v3706
        %v3862 = vpop.f32.mrf.mxu0
        %v3863 = vadd.f32 0.0, %v3862
        %3864 = vmatmul.f32.gmra.mxu0 %v3708
        %v3865 = vpop.f32.mrf.mxu0
        %v3866 = vadd.f32 0.0, %v3865
        %3867 = vmatmul.f32.gmra.mxu0 %v3711
        %v3868 = vpop.f32.mrf.mxu0
        %v3869 = vadd.f32 0.0, %v3868
        %3870 = vmatmul.f32.gmra.mxu0 %v3713
        %v3871 = vpop.f32.mrf.mxu0
        %v3872 = vadd.f32 0.0, %v3871
        %3873 = vmatmul.f32.gmra.mxu0 %v3716
        %v3874 = vpop.f32.mrf.mxu0
        %v3875 = vadd.f32 0.0, %v3874
        %3876 = vmatmul.f32.gmra.mxu0 %v3718
        %v3877 = vpop.f32.mrf.mxu0
        %v3878 = vadd.f32 0.0, %v3877
        %3879 = vdwg.mxu0
        %3880 = vmatpush.msra.mxu0 %v3838
        %3881 = vmatpush.msra.mxu0 %v3837
        %3882 = vmatpush.msra.mxu0 %v3836
        %3883 = vmatpush.msra.mxu0 %v3835
        %3884 = vmatpush.msra.mxu0 %v3834
        %3885 = vmatpush.msra.mxu0 %v3833
        %3886 = vmatpush.msra.mxu0 %v3832
        %3887 = vmatpush.msra.mxu0 %v3831
        %3888 = vmatpush.msra.mxu0 %v3830
        %3889 = vmatpush.msra.mxu0 %v3829
        %3890 = vmatpush.msra.mxu0 %v3828
        %3891 = vmatpush.msra.mxu0 %v3827
        %3892 = vmatpush.msra.mxu0 %v3826
        %3893 = vmatpush.msra.mxu0 %v3825
        %3894 = vmatpush.msra.mxu0 %v3824
        %3895 = vmatpush.msra.mxu0 %v3823
        %3896 = vmatmul.f32.gmra.mxu0 %v3788
        %v3897 = vpop.f32.mrf.mxu0
        %v3898 = vadd.f32 %v3857, %v3897
        %3899 = vmatmul.f32.gmra.mxu0 %v3790
        %v3900 = vpop.f32.mrf.mxu0
        %v3901 = vadd.f32 %v3860, %v3900
        %3902 = vmatmul.f32.gmra.mxu0 %v3793
        %v3903 = vpop.f32.mrf.mxu0
        %v3904 = vadd.f32 %v3863, %v3903
        %3905 = vmatmul.f32.gmra.mxu0 %v3795
        %v3906 = vpop.f32.mrf.mxu0
        %v3907 = vadd.f32 %v3866, %v3906
        %3908 = vmatmul.f32.gmra.mxu0 %v3798
        %v3909 = vpop.f32.mrf.mxu0
        %v3910 = vadd.f32 %v3869, %v3909
        %3911 = vmatmul.f32.gmra.mxu0 %v3800
        %v3912 = vpop.f32.mrf.mxu0
        %v3913 = vadd.f32 %v3872, %v3912
        %3914 = vmatmul.f32.gmra.mxu0 %v3803
        %v3915 = vpop.f32.mrf.mxu0
        %v3916 = vadd.f32 %v3875, %v3915
        %3917 = vmatmul.f32.gmra.mxu0 %v3805
        %v3918 = vpop.f32.mrf.mxu0
        %v3919 = vadd.f32 %v3878, %v3918
        %3920 = vdwg.mxu0
        %v3921 = vxor.u32 %v3898, 2147483648
        %v3922 = vxor.u32 %v3901, 2147483648
        %v3923 = vxor.u32 %v3904, 2147483648
        %v3924 = vxor.u32 %v3907, 2147483648
        %v3925 = vxor.u32 %v3910, 2147483648
        %v3926 = vxor.u32 %v3913, 2147483648
        %v3927 = vxor.u32 %v3916, 2147483648
        %v3928 = vxor.u32 %v3919, 2147483648
        %v3929 = vmul.f32 %v3921, 1.442695
        %v3930 = vpow.pop %v3929
        %v3931 = vmul.f32 %v3922, 1.442695
        %v3932 = vpow.pop %v3931
        %v3933 = vmul.f32 %v3923, 1.442695
        %v3934 = vpow.pop %v3933
        %v3935 = vmul.f32 %v3924, 1.442695
        %v3936 = vpow.pop %v3935
        %v3937 = vmul.f32 %v3925, 1.442695
        %v3938 = vpow.pop %v3937
        %v3939 = vmul.f32 %v3926, 1.442695
        %v3940 = vpow.pop %v3939
        %v3941 = vmul.f32 %v3927, 1.442695
        %v3942 = vpow.pop %v3941
        %v3943 = vmul.f32 %v3928, 1.442695
        %v3944 = vpow.pop %v3943
        %v3945 = vadd.f32 %v3930, 1.0
        %v3946 = vadd.f32 %v3932, 1.0
        %v3947 = vadd.f32 %v3934, 1.0
        %v3948 = vadd.f32 %v3936, 1.0
        %v3949 = vadd.f32 %v3938, 1.0
        %v3950 = vadd.f32 %v3940, 1.0
        %v3951 = vadd.f32 %v3942, 1.0
        %v3952 = vadd.f32 %v3944, 1.0
        %v3953 = vrcp.pop %v3945
        %v3954 = vmul.f32 %v3945, %v3953
        %v3955 = vsub.f32 1.0, %v3954
        %v3956 = vmul.f32 %v3953, %v3955
        %v3957 = vadd.f32 %v3953, %v3956
        %vm3958 = vweird.f32 %v3945
        %vm3959 = vweird.f32 %v3953
        %vm3960 = vmor %vm3958, %vm3959
        %v3961 = vsel %vm3960, %v3953, %v3957
        %v3962 = vand.u32 2147483647, %v3945
        %vm3963 = vcmp.eq.f32.partialorder %v3962, 8.507059e+37
        %v3964 = vand.u32 %v3945, 2147483648
        %v3965 = vor.u32 1.1754944e-38, %v3964
        %v3966 = vsel %vm3963, %v3965, %v3961
        %v3967 = vmul.f32 1.0, %v3966
        %v3968 = vrcp.pop %v3946
        %v3969 = vmul.f32 %v3946, %v3968
        %v3970 = vsub.f32 1.0, %v3969
        %v3971 = vmul.f32 %v3968, %v3970
        %v3972 = vadd.f32 %v3968, %v3971
        %vm3973 = vweird.f32 %v3946
        %vm3974 = vweird.f32 %v3968
        %vm3975 = vmor %vm3973, %vm3974
        %v3976 = vsel %vm3975, %v3968, %v3972
        %v3977 = vand.u32 2147483647, %v3946
        %vm3978 = vcmp.eq.f32.partialorder %v3977, 8.507059e+37
        %v3979 = vand.u32 %v3946, 2147483648
        %v3980 = vor.u32 1.1754944e-38, %v3979
        %v3981 = vsel %vm3978, %v3980, %v3976
        %v3982 = vmul.f32 1.0, %v3981
        %v3983 = vrcp.pop %v3947
        %v3984 = vmul.f32 %v3947, %v3983
        %v3985 = vsub.f32 1.0, %v3984
        %v3986 = vmul.f32 %v3983, %v3985
        %v3987 = vadd.f32 %v3983, %v3986
        %vm3988 = vweird.f32 %v3947
        %vm3989 = vweird.f32 %v3983
        %vm3990 = vmor %vm3988, %vm3989
        %v3991 = vsel %vm3990, %v3983, %v3987
        %v3992 = vand.u32 2147483647, %v3947
        %vm3993 = vcmp.eq.f32.partialorder %v3992, 8.507059e+37
        %v3994 = vand.u32 %v3947, 2147483648
        %v3995 = vor.u32 1.1754944e-38, %v3994
        %v3996 = vsel %vm3993, %v3995, %v3991
        %v3997 = vmul.f32 1.0, %v3996
        %v3998 = vrcp.pop %v3948
        %v3999 = vmul.f32 %v3948, %v3998
        %v4000 = vsub.f32 1.0, %v3999
        %v4001 = vmul.f32 %v3998, %v4000
        %v4002 = vadd.f32 %v3998, %v4001
        %vm4003 = vweird.f32 %v3948
        %vm4004 = vweird.f32 %v3998
        %vm4005 = vmor %vm4003, %vm4004
        %v4006 = vsel %vm4005, %v3998, %v4002
        %v4007 = vand.u32 2147483647, %v3948
        %vm4008 = vcmp.eq.f32.partialorder %v4007, 8.507059e+37
        %v4009 = vand.u32 %v3948, 2147483648
        %v4010 = vor.u32 1.1754944e-38, %v4009
        %v4011 = vsel %vm4008, %v4010, %v4006
        %v4012 = vmul.f32 1.0, %v4011
        %v4013 = vrcp.pop %v3949
        %v4014 = vmul.f32 %v3949, %v4013
        %v4015 = vsub.f32 1.0, %v4014
        %v4016 = vmul.f32 %v4013, %v4015
        %v4017 = vadd.f32 %v4013, %v4016
        %vm4018 = vweird.f32 %v3949
        %vm4019 = vweird.f32 %v4013
        %vm4020 = vmor %vm4018, %vm4019
        %v4021 = vsel %vm4020, %v4013, %v4017
        %v4022 = vand.u32 2147483647, %v3949
        %vm4023 = vcmp.eq.f32.partialorder %v4022, 8.507059e+37
        %v4024 = vand.u32 %v3949, 2147483648
        %v4025 = vor.u32 1.1754944e-38, %v4024
        %v4026 = vsel %vm4023, %v4025, %v4021
        %v4027 = vmul.f32 1.0, %v4026
        %v4028 = vrcp.pop %v3950
        %v4029 = vmul.f32 %v3950, %v4028
        %v4030 = vsub.f32 1.0, %v4029
        %v4031 = vmul.f32 %v4028, %v4030
        %v4032 = vadd.f32 %v4028, %v4031
        %vm4033 = vweird.f32 %v3950
        %vm4034 = vweird.f32 %v4028
        %vm4035 = vmor %vm4033, %vm4034
        %v4036 = vsel %vm4035, %v4028, %v4032
        %v4037 = vand.u32 2147483647, %v3950
        %vm4038 = vcmp.eq.f32.partialorder %v4037, 8.507059e+37
        %v4039 = vand.u32 %v3950, 2147483648
        %v4040 = vor.u32 1.1754944e-38, %v4039
        %v4041 = vsel %vm4038, %v4040, %v4036
        %v4042 = vmul.f32 1.0, %v4041
        %v4043 = vrcp.pop %v3951
        %v4044 = vmul.f32 %v3951, %v4043
        %v4045 = vsub.f32 1.0, %v4044
        %v4046 = vmul.f32 %v4043, %v4045
        %v4047 = vadd.f32 %v4043, %v4046
        %vm4048 = vweird.f32 %v3951
        %vm4049 = vweird.f32 %v4043
        %vm4050 = vmor %vm4048, %vm4049
        %v4051 = vsel %vm4050, %v4043, %v4047
        %v4052 = vand.u32 2147483647, %v3951
        %vm4053 = vcmp.eq.f32.partialorder %v4052, 8.507059e+37
        %v4054 = vand.u32 %v3951, 2147483648
        %v4055 = vor.u32 1.1754944e-38, %v4054
        %v4056 = vsel %vm4053, %v4055, %v4051
        %v4057 = vmul.f32 1.0, %v4056
        %v4058 = vrcp.pop %v3952
        %v4059 = vmul.f32 %v3952, %v4058
        %v4060 = vsub.f32 1.0, %v4059
        %v4061 = vmul.f32 %v4058, %v4060
        %v4062 = vadd.f32 %v4058, %v4061
        %vm4063 = vweird.f32 %v3952
        %vm4064 = vweird.f32 %v4058
        %vm4065 = vmor %vm4063, %vm4064
        %v4066 = vsel %vm4065, %v4058, %v4062
        %v4067 = vand.u32 2147483647, %v3952
        %vm4068 = vcmp.eq.f32.partialorder %v4067, 8.507059e+37
        %v4069 = vand.u32 %v3952, 2147483648
        %v4070 = vor.u32 1.1754944e-38, %v4069
        %v4071 = vsel %vm4068, %v4070, %v4066
        %v4072 = vmul.f32 1.0, %v4071
        %v4073 = vmul.f32 %v3898, %v3967
        %v4074 = vmul.f32 %v3901, %v3982
        %v4075 = vmul.f32 %v3904, %v3997
        %v4076 = vmul.f32 %v3907, %v4012
        %v4077 = vmul.f32 %v3910, %v4027
        %v4078 = vmul.f32 %v3913, %v4042
        %v4079 = vmul.f32 %v3916, %v4057
        %v4080 = vmul.f32 %v3919, %v4072
        %4081 = vst.msk [vmem:[%s637] sm:$0xff] %vm686, %v4073
        %4082 = vst.msk [vmem:[%s637 + $0x8] sm:$0xff] %vm686, %v4074
        %4083 = vst.msk [vmem:[%s637 + $0x10] sm:$0xff] %vm686, %v4075
        %4084 = vst.msk [vmem:[%s637 + $0x18] sm:$0xff] %vm686, %v4076
        %4085 = vst.msk [vmem:[%s637 + $0x20] sm:$0xff] %vm686, %v4077
        %4086 = vst.msk [vmem:[%s637 + $0x28] sm:$0xff] %vm686, %v4078
        %4087 = vst.msk [vmem:[%s637 + $0x30] sm:$0xff] %vm686, %v4079
        %4088 = vst.msk [vmem:[%s637 + $0x38] sm:$0xff] %vm686, %v4080
        %s4089 = sand.u32 %s472, 1
        %s4090 = scalar_lea.sflag [#allocation3], %s4089
        %s4091 = sand.u32 %s472, 1
        %s4092 = smul.addr %s4091, 64
        %s4093 = scalar_lea.vmem [#allocation2], %s4092
        // Predicated region
        $region101: #{tpu_custom_call.1} parent=99 // pred_check
          %p4094 = pneg %p482
        $region102: #{tpu_custom_call.1} parent=99 // pred_check_branch
          %4096 = sbr.rel (%p4094) target = $region104
        $region103: #{tpu_custom_call.1} parent=99 // pred_region
          %4098 = vsyncadd %s4090, 0
          %s4099 = smul.addr %s34, 8
          %s4100 = smul.addr %s4099, 8
          %s4101 = scalar_lea.hbm %s20, %s4100
          %s4102 = sshll.u32 %s4093, 4
          %s4103 = int_to_ptr.vmem [resolvable:$true] %s4102
          %s4104 = sshll.u32 %s4101, 4
          %s4105 = int_to_ptr.hbm [resolvable:$true] %s4104
          %4110 = dma.vmem_to_hbm [thread:$0]  %s4103, 1024, %s4105, %s4090, 128, 128, 8
        $region104: #{tpu_custom_call.1} parent=99 // pred_fallthru
          _
      $region100: #{tpu_custom_call.1} parent=5 // pred_fallthru
        _
      %p4111 = scmp.le.s32.totalorder 2, %s29
      // Predicated region
      $region105: #{tpu_custom_call.1} parent=5 // pred_check
        %p4112 = pneg %p4111
      $region106: #{tpu_custom_call.1} parent=5 // pred_check_branch
        %4114 = sbr.rel (%p4112) target = $region108
      $region107: #{tpu_custom_call.1} parent=5 // pred_region
        %s4115 = ssub.s32 %s29, 2
        // Predicated region
        $region109: #{tpu_custom_call.1} parent=107 // pred_check
          %p4116 = pneg %p488
        $region110: #{tpu_custom_call.1} parent=107 // pred_check_branch
          %4118 = sbr.rel (%p4116) target = $region112
        $region111: #{tpu_custom_call.1} parent=107 // pred_region
          %s4119 = sand.u32 %s473, 1
          %s4120 = scalar_lea.sflag [#allocation3], %s4119
          %s4121 = sand.u32 %s473, 1
          %s4122 = smul.addr %s4121, 64
          %s4123 = scalar_lea.vmem [#allocation2], %s4122
          %4125 = dma.done %s4120, 1024
        $region112: #{tpu_custom_call.1} parent=107 // pred_fallthru
          _
      $region108: #{tpu_custom_call.1} parent=5 // pred_fallthru
        _
    $region6: #{tpu_custom_call.1} parent=1 // loop_footer
      %s33 = sadd.s32 1, %s29
    $region7: #{tpu_custom_call.1} parent=1 // loop_footer_branch
      %28 = sbr.rel target = $region3
    $region8: #{tpu_custom_call.1} parent=1 // loop_exit
      _
    %4126 = vsyncpa [#allocation3], 1
    %s4127 = scalar_lea.sflag [#allocation3], 1
    %4128 = vsyncpa %s4127, 1

</llo_original>
